<compile_context>
chip_gen: v6e
topology: v6e:2x2x1
jax: 0.10.0
libtpu: 0.0.40
codegen_flags: <defaults>
</compile_context>

<pallas_src>
import functools

import numpy as np
import jax
import jax.numpy as jnp
from jax.experimental import pallas as pl
from jax.experimental.pallas import tpu as pltpu

# ----------------------------- module constants -----------------------------
SAMPLE_RATE = 44100            # Resample(44100 -> 44100) == identity
N_FFT       = 1024
HOP         = N_FFT // 2       # torchaudio default hop_length = n_fft // 2 = 512
N_FREQS     = N_FFT // 2 + 1   # 513 onesided bins
N_MELS      = 128

N_FREQS_PAD = 640              # 513 -> 5 * 128 lanes (padded bins are exact zeros)
BASIS_W     = 2 * N_FREQS_PAD  # [ real | imag ] concatenated -> single MXU matmul

# Compat: prefer the current name, fall back for older jax.
_CompilerParams = getattr(pltpu, "CompilerParams", None) or getattr(
    pltpu, "TPUCompilerParams"
)


# ------------------------- host-side constant tensors -----------------------
def _hz_to_mel_htk(f):
    return 2595.0 * np.log10(1.0 + np.asarray(f, np.float64) / 700.0)


def _mel_to_hz_htk(m):
    return 700.0 * (10.0 ** (np.asarray(m, np.float64) / 2595.0) - 1.0)


def _melscale_fbank(n_freqs, n_mels, sample_rate):
    """torchaudio.functional.melscale_fbanks(..., norm=None, mel_scale='htk')."""
    all_freqs = np.linspace(0.0, sample_rate // 2, n_freqs)
    m_pts = np.linspace(_hz_to_mel_htk(0.0), _hz_to_mel_htk(sample_rate / 2.0), n_mels + 2)
    f_pts = _mel_to_hz_htk(m_pts)
    f_diff = f_pts[1:] - f_pts[:-1]                       # (n_mels + 1,)
    slopes = f_pts[None, :] - all_freqs[:, None]          # (n_freqs, n_mels + 2)
    down = (-1.0 * slopes[:, :-2]) / f_diff[:-1]
    up = slopes[:, 2:] / f_diff[1:]
    return np.maximum(0.0, np.minimum(down, up))          # (n_freqs, n_mels)


def _windowed_dft_basis():
    """Periodic-Hann window folded into the real/imag DFT basis, lane-padded."""
    n = np.arange(N_FFT, dtype=np.float64)
    w = 0.5 - 0.5 * np.cos(2.0 * np.pi * n / N_FFT)       # hann_window(periodic=True)
    k = np.arange(N_FREQS, dtype=np.float64)
    ang = 2.0 * np.pi * np.outer(n, k) / N_FFT
    basis = np.zeros((N_FFT, BASIS_W), np.float64)
    basis[:, :N_FREQS] = w[:, None] * np.cos(ang)
    basis[:, N_FREQS_PAD:N_FREQS_PAD + N_FREQS] = -(w[:, None] * np.sin(ang))
    return basis


@functools.lru_cache(maxsize=1)
def _constants():
    basis = _windowed_dft_basis()
    c_top = jnp.asarray(basis[:HOP], jnp.bfloat16)         # (512, 1280)
    c_bot = jnp.asarray(basis[HOP:], jnp.bfloat16)         # (512, 1280)
    fb = np.zeros((N_FREQS_PAD, N_MELS), np.float64)
    fb[:N_FREQS] = _melscale_fbank(N_FREQS, N_MELS, SAMPLE_RATE)
    return c_top, c_bot, jnp.asarray(fb, jnp.bfloat16)     # (640, 128)


# --------------------------------- kernel -----------------------------------
def _mel_spec_kernel(cur_ref, nxt_ref, ctop_ref, cbot_ref, fb_ref, out_ref):
    # cur/nxt: (tile_frames, 512) bf16 hop chunks; frame f = [chunk f | chunk f+1].
    # Windowed DFT (real & imag concatenated) as one MXU matmul, f32 accumulation.
    x = jnp.dot(cur_ref[...], ctop_ref[...], preferred_element_type=jnp.float32)
    x = x + jnp.dot(nxt_ref[...], cbot_ref[...], preferred_element_type=jnp.float32)

    re = x[:, :N_FREQS_PAD]                # 128-aligned static lane slices
    im = x[:, N_FREQS_PAD:]
    power = re * re + im * im              # |STFT|^2 on the f32 accumulator

    # Mel filterbank matmul (padded bins hit zero filter rows -> exact).
    out_ref[...] = jnp.dot(power.astype(jnp.bfloat16), fb_ref[...],
                           preferred_element_type=jnp.float32)


# -------------------------------- wrapper ------------------------------------
def my_pipeline_forward(waveform, max_tile_frames=128):
    """waveform: (batch, n_samples) -> mel spectrogram (batch, n_mels, n_frames)."""
    wave = waveform.astype(jnp.float32)                    # Resample == identity
    batch, n_samples = wave.shape
    n_frames = n_samples // HOP + 1                        # center=True frame count

    # Frame tile: multiple of 8, capped (raise max_tile_frames to 512+ on v6e).
    tile = min(max_tile_frames, ((n_frames + 7) // 8) * 8)
    n_frames_p = ((n_frames + tile - 1) // tile) * tile
    n_tiles = n_frames_p // tile

    # center=True reflect padding, once, on the 1-D waveform (keeps kernel loads rectangular).
    padded = jnp.pad(wave, ((0, 0), (N_FFT // 2, N_FFT // 2)), mode="reflect")
    needed = (n_frames_p + 1) * HOP
    tail = needed - padded.shape[1]
    if tail > 0:
        padded = jnp.pad(padded, ((0, 0), (0, tail)))      # zero pad only padded frames
    padded = padded[:, :needed]

    # Non-overlapping hop chunks; frame f uses chunks f and f+1 (no 2x frame matrix).
    chunks = padded.reshape(batch, n_frames_p + 1, HOP).astype(jnp.bfloat16)
    cur = chunks[:, :n_frames_p, :]
    nxt = chunks[:, 1:, :]

    c_top, c_bot, fb = _constants()

    out = pl.pallas_call(
        _mel_spec_kernel,
        out_shape=jax.ShapeDtypeStruct((batch, n_frames_p, N_MELS), jnp.float32),
        grid=(batch, n_tiles),
        in_specs=[
            pl.BlockSpec((None, tile, HOP), lambda b, f: (b, f, 0)),
            pl.BlockSpec((None, tile, HOP), lambda b, f: (b, f, 0)),
            pl.BlockSpec((HOP, BASIS_W), lambda b, f: (0, 0)),       # resident constant
            pl.BlockSpec((HOP, BASIS_W), lambda b, f: (0, 0)),       # resident constant
            pl.BlockSpec((N_FREQS_PAD, N_MELS), lambda b, f: (0, 0)),  # resident constant
        ],
        out_specs=pl.BlockSpec((None, tile, N_MELS), lambda b, f: (b, f, 0)),
        compiler_params=_CompilerParams(
            dimension_semantics=("parallel", "parallel")),
    )(cur, nxt, c_top, c_bot, fb)

    # spec_aug: TimeStretch / FrequencyMasking / TimeMasking left as identity (see TODOs).
    mel = out[:, :n_frames, :]                             # drop frame padding
    return jnp.swapaxes(mel, 1, 2)                         # (batch, n_mels, n_frames)


# ------------------------------ f64 reference --------------------------------
def _reference_mel(wave):
    wave = np.asarray(wave, np.float64)
    b, n_samples = wave.shape
    n_frames = n_samples // HOP + 1
    padded = np.pad(wave, ((0, 0), (N_FFT // 2, N_FFT // 2)), mode="reflect")
    idx = np.arange(n_frames)[:, None] * HOP + np.arange(N_FFT)[None, :]
    frames = padded[:, idx]                                # (b, n_frames, n_fft)
    n = np.arange(N_FFT)
    w = 0.5 - 0.5 * np.cos(2.0 * np.pi * n / N_FFT)
    k = np.arange(N_FREQS)
    ang = 2.0 * np.pi * np.outer(n, k) / N_FFT
    re = np.einsum("bfn,nk->bfk", frames * w, np.cos(ang))
    im = np.einsum("bfn,nk->bfk", frames * w, np.sin(ang))
    power = re * re + im * im
    fb = _melscale_fbank(N_FREQS, N_MELS, SAMPLE_RATE)
    mel = np.einsum("bfk,km->bfm", power, fb)
    return np.swapaxes(mel, 1, 2)                          # (b, n_mels, n_frames)


if __name__ == "__main__":
    key = jax.random.PRNGKey(0)
    batch, n_samples = 2, 8192                             # ~0.19 s of 44.1 kHz audio
    wave = jax.random.normal(key, (batch, n_samples), dtype=jnp.float32)

    mel = jax.jit(my_pipeline_forward)(wave)
    mel = jax.block_until_ready(mel)

    ref = _reference_mel(np.asarray(wave))
    mel_np = np.asarray(mel, np.float64)
    assert mel_np.shape == ref.shape, (mel_np.shape, ref.shape)
    assert np.isfinite(mel_np).all()
    err = np.max(np.abs(mel_np - ref)) / (np.max(np.abs(ref)) + 1e-12)
    assert err < 0.1, f"normalized max error too high: {err}"

    print("KERNEL_OK")
</pallas_src>

<mosaic_0001>
module attributes {stable_mosaic.version = 11 : i64} {
  func.func @_mel_spec_kernel(%arg0: i32, %arg1: i32, %arg2: memref<1x24x512xbf16, #tpu.memory_space<vmem>>, %arg3: memref<1x24x512xbf16, #tpu.memory_space<vmem>>, %arg4: memref<512x1280xbf16, #tpu.memory_space<vmem>>, %arg5: memref<512x1280xbf16, #tpu.memory_space<vmem>>, %arg6: memref<640x128xbf16, #tpu.memory_space<vmem>>, %arg7: memref<1x24x128xf32, #tpu.memory_space<vmem>>) attributes {dimension_semantics = [#tpu.dimension_semantics<parallel>, #tpu.dimension_semantics<parallel>], iteration_bounds = array<i64: 2, 1>, scalar_prefetch = 0 : i64, scratch_operands = 0 : i64, tpu.core_type = #tpu.core_type<tc>, window_params = [{transform_indices = @transform_0, window_bounds = array<i64: 1, 24, 512>}, {transform_indices = @transform_1, window_bounds = array<i64: 1, 24, 512>}, {pipeline_mode = #tpu.pipeline_mode<synchronous>, transform_indices = @transform_2, window_bounds = array<i64: 512, 1280>}, {pipeline_mode = #tpu.pipeline_mode<synchronous>, transform_indices = @transform_3, window_bounds = array<i64: 512, 1280>}, {pipeline_mode = #tpu.pipeline_mode<synchronous>, transform_indices = @transform_4, window_bounds = array<i64: 640, 128>}, {transform_indices = @transform_5, window_bounds = array<i64: 1, 24, 128>}]} {
    %c0 = arith.constant 0 : index
    %c0_0 = arith.constant 0 : index
    %c0_1 = arith.constant 0 : index
    %0 = vector.load %arg2[%c0, %c0_0, %c0_1] : memref<1x24x512xbf16, #tpu.memory_space<vmem>>, vector<1x24x512xbf16>
    %1 = vector.shape_cast %0 : vector<1x24x512xbf16> to vector<24x512xbf16>
    %c0_2 = arith.constant 0 : index
    %c0_3 = arith.constant 0 : index
    %2 = vector.load %arg4[%c0_2, %c0_3] : memref<512x1280xbf16, #tpu.memory_space<vmem>>, vector<512x1280xbf16>
    %cst = arith.constant dense<0.000000e+00> : vector<24x1280xf32>
    %3 = tpu.matmul %1, %2, %cst {dimension_numbers = #tpu.dot_dimension_numbers<[1], [0], [0], [1], [0, 0, 1, 1], [], []>} : vector<24x512xbf16>, vector<512x1280xbf16>, vector<24x1280xf32> -> vector<24x1280xf32>
    %c0_4 = arith.constant 0 : index
    %c0_5 = arith.constant 0 : index
    %c0_6 = arith.constant 0 : index
    %4 = vector.load %arg3[%c0_4, %c0_5, %c0_6] : memref<1x24x512xbf16, #tpu.memory_space<vmem>>, vector<1x24x512xbf16>
    %5 = vector.shape_cast %4 : vector<1x24x512xbf16> to vector<24x512xbf16>
    %c0_7 = arith.constant 0 : index
    %c0_8 = arith.constant 0 : index
    %6 = vector.load %arg5[%c0_7, %c0_8] : memref<512x1280xbf16, #tpu.memory_space<vmem>>, vector<512x1280xbf16>
    %cst_9 = arith.constant dense<0.000000e+00> : vector<24x1280xf32>
    %7 = tpu.matmul %5, %6, %cst_9 {dimension_numbers = #tpu.dot_dimension_numbers<[1], [0], [0], [1], [0, 0, 1, 1], [], []>} : vector<24x512xbf16>, vector<512x1280xbf16>, vector<24x1280xf32> -> vector<24x1280xf32>
    %8 = arith.addf %3, %7 : vector<24x1280xf32>
    %9 = vector.extract_strided_slice %8 {offsets = [0, 0], sizes = [24, 640], strides = [1, 1]} : vector<24x1280xf32> to vector<24x640xf32>
    %10 = vector.extract_strided_slice %8 {offsets = [0, 640], sizes = [24, 640], strides = [1, 1]} : vector<24x1280xf32> to vector<24x640xf32>
    %11 = arith.mulf %9, %9 : vector<24x640xf32>
    %12 = arith.mulf %10, %10 : vector<24x640xf32>
    %13 = arith.addf %11, %12 : vector<24x640xf32>
    %14 = arith.truncf %13 : vector<24x640xf32> to vector<24x640xbf16>
    %c0_10 = arith.constant 0 : index
    %c0_11 = arith.constant 0 : index
    %15 = vector.load %arg6[%c0_10, %c0_11] : memref<640x128xbf16, #tpu.memory_space<vmem>>, vector<640x128xbf16>
    %cst_12 = arith.constant dense<0.000000e+00> : vector<24x128xf32>
    %16 = tpu.matmul %14, %15, %cst_12 {dimension_numbers = #tpu.dot_dimension_numbers<[1], [0], [0], [1], [0, 0, 1, 1], [], []>} : vector<24x640xbf16>, vector<640x128xbf16>, vector<24x128xf32> -> vector<24x128xf32>
    %c0_13 = arith.constant 0 : index
    %c0_14 = arith.constant 0 : index
    %c0_15 = arith.constant 0 : index
    %17 = vector.load %arg7[%c0_13, %c0_14, %c0_15] : memref<1x24x128xf32, #tpu.memory_space<vmem>>, vector<1x24x128xf32>
    %18 = vector.shape_cast %17 : vector<1x24x128xf32> to vector<24x128xf32>
    %19 = vector.shape_cast %16 : vector<24x128xf32> to vector<1x24x128xf32>
    tpu.vector_store %arg7[%c0_13, %c0_14, %c0_15], %19 {strides = array<i32>} : memref<1x24x128xf32, #tpu.memory_space<vmem>>, vector<1x24x128xf32>,
    return
  }
  func.func @transform_0(%arg0: i32, %arg1: i32) -> (i32, i32, i32) {
    %c0_i32 = arith.constant 0 : i32
    %c0_i32_0 = arith.constant 0 : i32
    return %arg0, %arg1, %c0_i32 : i32, i32, i32
  }
  func.func @transform_1(%arg0: i32, %arg1: i32) -> (i32, i32, i32) {
    %c0_i32 = arith.constant 0 : i32
    %c0_i32_0 = arith.constant 0 : i32
    return %arg0, %arg1, %c0_i32 : i32, i32, i32
  }
  func.func @transform_2(%arg0: i32, %arg1: i32) -> (i32, i32) {
    %c0_i32 = arith.constant 0 : i32
    %c0_i32_0 = arith.constant 0 : i32
    %c0_i32_1 = arith.constant 0 : i32
    return %c0_i32, %c0_i32_0 : i32, i32
  }
  func.func @transform_3(%arg0: i32, %arg1: i32) -> (i32, i32) {
    %c0_i32 = arith.constant 0 : i32
    %c0_i32_0 = arith.constant 0 : i32
    %c0_i32_1 = arith.constant 0 : i32
    return %c0_i32, %c0_i32_0 : i32, i32
  }
  func.func @transform_4(%arg0: i32, %arg1: i32) -> (i32, i32) {
    %c0_i32 = arith.constant 0 : i32
    %c0_i32_0 = arith.constant 0 : i32
    %c0_i32_1 = arith.constant 0 : i32
    return %c0_i32, %c0_i32_0 : i32, i32
  }
  func.func @transform_5(%arg0: i32, %arg1: i32) -> (i32, i32, i32) {
    %c0_i32 = arith.constant 0 : i32
    %c0_i32_0 = arith.constant 0 : i32
    return %arg0, %arg1, %c0_i32 : i32, i32, i32
  }
}

</mosaic_0001>

<llo_original>
// kernel: my_pipeline_forward.1
$region0: #{my_pipeline_forward.1}
  #allocation0 [shape = 'u32[]', space=smem, size = 0x4, offset = 0x4, fixed_abs, tag = 'smem constant byte address 0x4 - core index']
  #allocation1 [shape = 'u32[144,128]{1,0:T(1,128)}', space=vmem, size = 0x12000, scoped, tag = 'internal scratch']
  %s0 = inlined_call_operand.vmem [shape: bf16[2,24,512], index: 0, kind: input, shape index: {}]
  %s1 = inlined_call_operand.vmem [shape: bf16[2,24,512], index: 1, kind: input, shape index: {}]
  %s2 = inlined_call_operand.hbm [shape: bf16[512,1280], index: 2, kind: input, shape index: {}]
  %s3 = inlined_call_operand.hbm [shape: bf16[512,1280], index: 3, kind: input, shape index: {}]
  %s4 = inlined_call_operand.hbm [shape: bf16[640,128], index: 4, kind: input, shape index: {}]
  %s5 = inlined_call_operand.vmem [shape: f32[2,24,128], index: 5, kind: output, shape index: {}]
  %s6 = sld [smem:[#allocation0]]
  $region65: #{my_pipeline_forward.1} parent=0
    _
  %s8 = ssub.s32 1, %s6
  %s9 = scalar_select 0, %s8, %s6
  $region1: #{my_pipeline_forward.1} parent=0
    #allocation2 [shape = 'u8[1310720]{0}', space=vmem, size = 0x140000, scoped, tag = 'input window, operand 2, single buffered']
    #allocation3 [shape = 's32[2]{0}', space=sflag, size = 0x8, scoped, tag = 'scoped memory for my_pipeline_forward.1']
    #allocation4 [shape = 'u8[1310720]{0}', space=vmem, size = 0x140000, scoped, tag = 'input window, operand 3, single buffered']
    #allocation5 [shape = 's32[1]{0}', space=sflag, size = 0x4, scoped, tag = 'scoped memory for my_pipeline_forward.1']
    #allocation6 [shape = 'u8[163840]{0}', space=vmem, size = 0x28000, scoped, tag = 'input window, operand 4, single buffered']
    %10 = vsyncpa [#allocation3], 0
    %11 = vsyncpa [#allocation5], 0
    loop: start=0, step=1, limit=4
    $region2: #{my_pipeline_forward.1} parent=1 // loop_pre_header
      _
    $region3: #{my_pipeline_forward.1} parent=1 // loop_header
      %s13 = sphi 0, %s17
      %p14 = scmp.ge.s32.totalorder %s13, 4
      %s20 = sphi 0, %s32
      %s21 = sphi 0, %s28
      %s22 = sphi 0, %s20
      %s23 = sphi 0, %s21
      %s24 = sphi 0, %s22
      %s25 = sphi 0, %s23
      %s37 = sphi 0, %s39
      %s40 = sphi 0, %s37
      %s41 = sphi 0, %s40
      %s57 = sphi 0, %s41
      %s65 = sphi 0, %s67
      %s68 = sphi 0, %s65
      %s69 = sphi 0, %s68
      %s85 = sphi 0, %s69
      %s89 = sphi 0, %s89
      %s91 = sphi 0, %s89
      %s92 = sphi 0, %s91
      %s106 = sphi 0, %s92
      %s110 = sphi 0, %s110
      %s112 = sphi 0, %s110
      %s113 = sphi 0, %s112
      %s127 = sphi 0, %s113
      %s131 = sphi 0, %s131
      %s133 = sphi 0, %s131
      %s134 = sphi 0, %s133
      %s148 = sphi 0, %s134
      %s156 = sphi 0, %s158
      %s159 = sphi 0, %s156
      %s160 = sphi 0, %s159
      %s176 = sphi 0, %s160
    $region4: #{my_pipeline_forward.1} parent=1 // loop_header_branch
      %16 = sbr.rel (%p14) target = $region8
    $region5: #{my_pipeline_forward.1} parent=1 // loop_body
      %s18 = ssub.s32 %s13, 1
      %s19 = ssub.s32 %s13, 2
      %s26 = sadd.s32 1, %s21
      %p27 = scmp.ge.s32.totalorder %s26, 1
      %s28 = scalar_select %p27, 0, %s26
      %s29 = sadd.s32 1, %s20
      %s30 = scalar_select %p27, %s29, %s20
      %p31 = scmp.ge.s32.totalorder %s30, 2
      %s32 = scalar_select %p31, 0, %s30
      %s33 = ssub.s32 %s20, %s32
      %s34 = ssub.s32 %s21, %s28
      %s35 = sor.u32 %s33, %s34
      %p36 = scmp.eq.s32.totalorder %s35, 0
      %s38 = sadd.s32 %s37, 1
      %s39 = scalar_select %p36, %s37, %s38
      %p42 = pneg %p36
      %p43 = scmp.eq.s32.totalorder %s13, 1
      %p44 = por %p42, %p43
      %p45 = scmp.ne.s32.totalorder %s37, %s40
      %p46 = scmp.eq.s32.totalorder %s13, 0
      %p47 = por %p45, %p46
      %p48 = scmp.ne.s32.totalorder %s37, %s40
      %p49 = scmp.eq.s32.totalorder %s18, 1
      %p50 = por %p48, %p49
      %p51 = scmp.ne.s32.totalorder %s40, %s41
      %p52 = scmp.eq.s32.totalorder %s18, 0
      %p53 = por %p51, %p52
      %p54 = scmp.ne.s32.totalorder %s40, %s41
      %p55 = scmp.eq.s32.totalorder %s19, 1
      %p56 = por %p54, %p55
      %p58 = scmp.ne.s32.totalorder %s41, %s57
      %p59 = scmp.eq.s32.totalorder %s19, 0
      %p60 = por %p58, %p59
      %s61 = ssub.s32 %s20, %s32
      %s62 = ssub.s32 %s21, %s28
      %s63 = sor.u32 %s61, %s62
      %p64 = scmp.eq.s32.totalorder %s63, 0
      %s66 = sadd.s32 %s65, 1
      %s67 = scalar_select %p64, %s65, %s66
      %p70 = pneg %p64
      %p71 = scmp.eq.s32.totalorder %s13, 1
      %p72 = por %p70, %p71
      %p73 = scmp.ne.s32.totalorder %s65, %s68
      %p74 = scmp.eq.s32.totalorder %s13, 0
      %p75 = por %p73, %p74
      %p76 = scmp.ne.s32.totalorder %s65, %s68
      %p77 = scmp.eq.s32.totalorder %s18, 1
      %p78 = por %p76, %p77
      %p79 = scmp.ne.s32.totalorder %s68, %s69
      %p80 = scmp.eq.s32.totalorder %s18, 0
      %p81 = por %p79, %p80
      %p82 = scmp.ne.s32.totalorder %s68, %s69
      %p83 = scmp.eq.s32.totalorder %s19, 1
      %p84 = por %p82, %p83
      %p86 = scmp.ne.s32.totalorder %s69, %s85
      %p87 = scmp.eq.s32.totalorder %s19, 0
      %p88 = por %p86, %p87
      %s90 = sadd.s32 %s89, 1
      %p93 = scmp.eq.s32.totalorder %s13, 1
      %p94 = scmp.ne.s32.totalorder %s89, %s91
      %p95 = scmp.eq.s32.totalorder %s13, 0
      %p96 = por %p94, %p95
      %p97 = scmp.ne.s32.totalorder %s89, %s91
      %p98 = scmp.eq.s32.totalorder %s18, 1
      %p99 = por %p97, %p98
      %p100 = scmp.ne.s32.totalorder %s91, %s92
      %p101 = scmp.eq.s32.totalorder %s18, 0
      %p102 = por %p100, %p101
      %p103 = scmp.ne.s32.totalorder %s91, %s92
      %p104 = scmp.eq.s32.totalorder %s19, 1
      %p105 = por %p103, %p104
      %p107 = scmp.ne.s32.totalorder %s92, %s106
      %p108 = scmp.eq.s32.totalorder %s19, 0
      %p109 = por %p107, %p108
      %s111 = sadd.s32 %s110, 1
      %p114 = scmp.eq.s32.totalorder %s13, 1
      %p115 = scmp.ne.s32.totalorder %s110, %s112
      %p116 = scmp.eq.s32.totalorder %s13, 0
      %p117 = por %p115, %p116
      %p118 = scmp.ne.s32.totalorder %s110, %s112
      %p119 = scmp.eq.s32.totalorder %s18, 1
      %p120 = por %p118, %p119
      %p121 = scmp.ne.s32.totalorder %s112, %s113
      %p122 = scmp.eq.s32.totalorder %s18, 0
      %p123 = por %p121, %p122
      %p124 = scmp.ne.s32.totalorder %s112, %s113
      %p125 = scmp.eq.s32.totalorder %s19, 1
      %p126 = por %p124, %p125
      %p128 = scmp.ne.s32.totalorder %s113, %s127
      %p129 = scmp.eq.s32.totalorder %s19, 0
      %p130 = por %p128, %p129
      %s132 = sadd.s32 %s131, 1
      %p135 = scmp.eq.s32.totalorder %s13, 1
      %p136 = scmp.ne.s32.totalorder %s131, %s133
      %p137 = scmp.eq.s32.totalorder %s13, 0
      %p138 = por %p136, %p137
      %p139 = scmp.ne.s32.totalorder %s131, %s133
      %p140 = scmp.eq.s32.totalorder %s18, 1
      %p141 = por %p139, %p140
      %p142 = scmp.ne.s32.totalorder %s133, %s134
      %p143 = scmp.eq.s32.totalorder %s18, 0
      %p144 = por %p142, %p143
      %p145 = scmp.ne.s32.totalorder %s133, %s134
      %p146 = scmp.eq.s32.totalorder %s19, 1
      %p147 = por %p145, %p146
      %p149 = scmp.ne.s32.totalorder %s134, %s148
      %p150 = scmp.eq.s32.totalorder %s19, 0
      %p151 = por %p149, %p150
      %s152 = ssub.s32 %s20, %s32
      %s153 = ssub.s32 %s21, %s28
      %s154 = sor.u32 %s152, %s153
      %p155 = scmp.eq.s32.totalorder %s154, 0
      %s157 = sadd.s32 %s156, 1
      %s158 = scalar_select %p155, %s156, %s157
      %p161 = pneg %p155
      %p162 = scmp.eq.s32.totalorder %s13, 1
      %p163 = por %p161, %p162
      %p164 = scmp.ne.s32.totalorder %s156, %s159
      %p165 = scmp.eq.s32.totalorder %s13, 0
      %p166 = por %p164, %p165
      %p167 = scmp.ne.s32.totalorder %s156, %s159
      %p168 = scmp.eq.s32.totalorder %s18, 1
      %p169 = por %p167, %p168
      %p170 = scmp.ne.s32.totalorder %s159, %s160
      %p171 = scmp.eq.s32.totalorder %s18, 0
      %p172 = por %p170, %p171
      %p173 = scmp.ne.s32.totalorder %s159, %s160
      %p174 = scmp.eq.s32.totalorder %s19, 1
      %p175 = por %p173, %p174
      %p177 = scmp.ne.s32.totalorder %s160, %s176
      %p178 = scmp.eq.s32.totalorder %s19, 0
      %p179 = por %p177, %p178
      %p180 = scmp.le.s32.totalorder 1, %s13
      %p181 = scmp.lt.s32.totalorder %s13, 3
      %p182 = pnand %p180, %p181
      %p183 = pneg %p182
      // Predicated region
      $region9: #{my_pipeline_forward.1} parent=5 // pred_check
        _
      $region10: #{my_pipeline_forward.1} parent=5 // pred_check_branch
        %185 = sbr.rel (%p182) target = $region12
      $region11: #{my_pipeline_forward.1} parent=5 // pred_region
        %s186 = ssub.s32 %s13, 1
        // Predicated region
        $region13: #{my_pipeline_forward.1} parent=11 // pred_check
          %p187 = pneg %p102
        $region14: #{my_pipeline_forward.1} parent=11 // pred_check_branch
          %189 = sbr.rel (%p187) target = $region16
        $region15: #{my_pipeline_forward.1} parent=11 // pred_region
          %s191 = ssub.s32 40960, 40960
          %192 = vsyncadd [#allocation3], %s191
          %s193 = sshll.u32 [#allocation2], 4
          %s194 = int_to_ptr.vmem [resolvable:$true] %s193
          %199 = dma.hbm_to_vmem [thread:$0]  %s2, 40960, %s194, [#allocation3], 640, 640, 40
        $region16: #{my_pipeline_forward.1} parent=11 // pred_fallthru
          _
        // Predicated region
        $region17: #{my_pipeline_forward.1} parent=11 // pred_check
          %p200 = pneg %p123
        $region18: #{my_pipeline_forward.1} parent=11 // pred_check_branch
          %202 = sbr.rel (%p200) target = $region20
        $region19: #{my_pipeline_forward.1} parent=11 // pred_region
          %s204 = ssub.s32 40960, 40960
          %205 = vsyncadd [#allocation5], %s204
          %s206 = sshll.u32 [#allocation4], 4
          %s207 = int_to_ptr.vmem [resolvable:$true] %s206
          %212 = dma.hbm_to_vmem [thread:$0]  %s3, 40960, %s207, [#allocation5], 640, 640, 40
        $region20: #{my_pipeline_forward.1} parent=11 // pred_fallthru
          _
        // Predicated region
        $region21: #{my_pipeline_forward.1} parent=11 // pred_check
          %p213 = pneg %p144
        $region22: #{my_pipeline_forward.1} parent=11 // pred_check_branch
          %215 = sbr.rel (%p213) target = $region24
        $region23: #{my_pipeline_forward.1} parent=11 // pred_region
          %s217 = ssub.s32 5120, 5120
          %218 = vsyncadd [#allocation5], %s217
          %s219 = sshll.u32 [#allocation6], 4
          %s220 = int_to_ptr.vmem [resolvable:$true] %s219
          %225 = dma.hbm_to_vmem [thread:$0]  %s4, 5120, %s220, [#allocation5], 64, 64, 4
        $region24: #{my_pipeline_forward.1} parent=11 // pred_fallthru
          _
      $region12: #{my_pipeline_forward.1} parent=5 // pred_fallthru
        _
      %p226 = scmp.lt.s32.totalorder %s13, 2
      // Predicated region
      $region25: #{my_pipeline_forward.1} parent=5 // pred_check
        %p227 = pneg %p226
      $region26: #{my_pipeline_forward.1} parent=5 // pred_check_branch
        %229 = sbr.rel (%p227) target = $region28
      $region27: #{my_pipeline_forward.1} parent=5 // pred_region
        // Predicated region
        $region29: #{my_pipeline_forward.1} parent=27 // pred_check
          %p230 = pneg %p47
        $region30: #{my_pipeline_forward.1} parent=27 // pred_check_branch
          %232 = sbr.rel (%p230) target = $region32
        $region31: #{my_pipeline_forward.1} parent=27 // pred_region
          %s233 = smul.u32 3, %s21
          %p234 = scmp.lt.s32.totalorder %s20, 1
          %s235 = scalar_select %p234, %s20, 1
          %p236 = scmp.lt.s32.totalorder %s233, 2
          %s237 = scalar_select %p236, %s233, 2
          %s238 = smul.addr %s237, 4
          %s239 = smul.addr %s235, 12
          %s240 = sadd.s32 %s238, %s239
          %s241 = smul.addr %s240, 4
          %s242 = scalar_lea.vmem %s0, %s241
          %s243 = smul.u32 3, %s21
        $region32: #{my_pipeline_forward.1} parent=27 // pred_fallthru
          _
        // Predicated region
        $region33: #{my_pipeline_forward.1} parent=27 // pred_check
          %p244 = pneg %p75
        $region34: #{my_pipeline_forward.1} parent=27 // pred_check_branch
          %246 = sbr.rel (%p244) target = $region36
        $region35: #{my_pipeline_forward.1} parent=27 // pred_region
          %s247 = smul.u32 3, %s21
          %p248 = scmp.lt.s32.totalorder %s20, 1
          %s249 = scalar_select %p248, %s20, 1
          %p250 = scmp.lt.s32.totalorder %s247, 2
          %s251 = scalar_select %p250, %s247, 2
          %s252 = smul.addr %s251, 4
          %s253 = smul.addr %s249, 12
          %s254 = sadd.s32 %s252, %s253
          %s255 = smul.addr %s254, 4
          %s256 = scalar_lea.vmem %s1, %s255
          %s257 = smul.u32 3, %s21
        $region36: #{my_pipeline_forward.1} parent=27 // pred_fallthru
          _
      $region28: #{my_pipeline_forward.1} parent=5 // pred_fallthru
        _
      %p258 = scmp.le.s32.totalorder 1, %s13
      %p259 = scmp.lt.s32.totalorder %s13, 3
      %p260 = pnand %p258, %p259
      %p261 = pneg %p260
      // Predicated region
      $region37: #{my_pipeline_forward.1} parent=5 // pred_check
        _
      $region38: #{my_pipeline_forward.1} parent=5 // pred_check_branch
        %263 = sbr.rel (%p260) target = $region40
      $region39: #{my_pipeline_forward.1} parent=5 // pred_region
        %s264 = ssub.s32 %s13, 1
        // Predicated region
        $region41: #{my_pipeline_forward.1} parent=39 // pred_check
          %p265 = pneg %p102
        $region42: #{my_pipeline_forward.1} parent=39 // pred_check_branch
          %267 = sbr.rel (%p265) target = $region44
        $region43: #{my_pipeline_forward.1} parent=39 // pred_region
          %268 = dma.done [#allocation3], 40960
        $region44: #{my_pipeline_forward.1} parent=39 // pred_fallthru
          _
        // Predicated region
        $region45: #{my_pipeline_forward.1} parent=39 // pred_check
          %p269 = pneg %p123
        $region46: #{my_pipeline_forward.1} parent=39 // pred_check_branch
          %271 = sbr.rel (%p269) target = $region48
        $region47: #{my_pipeline_forward.1} parent=39 // pred_region
          %272 = dma.done [#allocation5], 40960
        $region48: #{my_pipeline_forward.1} parent=39 // pred_fallthru
          _
        // Predicated region
        $region49: #{my_pipeline_forward.1} parent=39 // pred_check
          %p273 = pneg %p144
        $region50: #{my_pipeline_forward.1} parent=39 // pred_check_branch
          %275 = sbr.rel (%p273) target = $region52
        $region51: #{my_pipeline_forward.1} parent=39 // pred_region
          %276 = dma.done [#allocation5], 5120
        $region52: #{my_pipeline_forward.1} parent=39 // pred_fallthru
          _
        %s277 = smul.u32 3, %s23
        %p278 = scmp.lt.s32.totalorder %s22, 1
        %s279 = scalar_select %p278, %s22, 1
        %p280 = scmp.lt.s32.totalorder %s277, 2
        %s281 = scalar_select %p280, %s277, 2
        %s282 = smul.addr %s281, 4
        %s283 = smul.addr %s279, 12
        %s284 = sadd.s32 %s282, %s283
        %s285 = smul.addr %s284, 4
        %s286 = scalar_lea.vmem %s0, %s285
        %p287 = pneg %p53
        %p288 = pneg %p50
        %s289 = smul.u32 3, %s23
        %p290 = scmp.lt.s32.totalorder %s22, 1
        %s291 = scalar_select %p290, %s22, 1
        %p292 = scmp.lt.s32.totalorder %s289, 2
        %s293 = scalar_select %p292, %s289, 2
        %s294 = smul.addr %s293, 4
        %s295 = smul.addr %s291, 12
        %s296 = sadd.s32 %s294, %s295
        %s297 = smul.addr %s296, 4
        %s298 = scalar_lea.vmem %s1, %s297
        %p299 = pneg %p81
        %p300 = pneg %p78
        %p301 = pneg %p102
        %p302 = pneg %p99
        %p303 = pneg %p123
        %p304 = pneg %p120
        %p305 = pneg %p144
        %p306 = pneg %p141
        %p307 = pneg %p172
        %p308 = pneg %p169
        %s309 = smul.u32 3, %s23
        %p310 = scmp.lt.s32.totalorder %s22, 1
        %s311 = scalar_select %p310, %s22, 1
        %p312 = scmp.lt.s32.totalorder %s309, 2
        %s313 = scalar_select %p312, %s309, 2
        %s314 = smul.addr %s311, 3
        %s315 = sadd.s32 %s313, %s314
        %s316 = smul.addr %s315, 8
        %s317 = scalar_lea.vmem %s5, %s316
        %s318 = smul.u32 3, %s23
        %p319 = scmp.lt.s32.totalorder %s22, 1
        %s320 = scalar_select %p319, %s22, 1
        %p321 = scmp.lt.s32.totalorder %s318, 2
        %s322 = scalar_select %p321, %s318, 2
        %s323 = smul.addr %s322, 4
        %s324 = smul.addr %s320, 12
        %s325 = sadd.s32 %s323, %s324
        %s326 = smul.addr %s325, 4
        %s327 = scalar_lea.vmem %s0, %s326
        %s328 = smul.u32 3, %s23
        %s329 = smul.u32 3, %s23
        %p330 = scmp.lt.s32.totalorder %s22, 1
        %s331 = scalar_select %p330, %s22, 1
        %p332 = scmp.lt.s32.totalorder %s329, 2
        %s333 = scalar_select %p332, %s329, 2
        %s334 = smul.addr %s333, 4
        %s335 = smul.addr %s331, 12
        %s336 = sadd.s32 %s334, %s335
        %s337 = smul.addr %s336, 4
        %s338 = scalar_lea.vmem %s1, %s337
        %s339 = smul.u32 3, %s23
        %s340 = smul.u32 3, %s23
        %p341 = scmp.lt.s32.totalorder %s22, 1
        %s342 = scalar_select %p341, %s22, 1
        %p343 = scmp.lt.s32.totalorder %s340, 2
        %s344 = scalar_select %p343, %s340, 2
        %s345 = smul.addr %s342, 3
        %s346 = sadd.s32 %s344, %s345
        %s347 = smul.addr %s346, 8
        %s348 = scalar_lea.vmem %s5, %s347
        %s349 = smul.u32 3, %s23
        %v351 = vld [vmem:[%s327] sm:$0xff]
        %v352 = vld [vmem:[%s327 + $0x8] sm:$0xff]
        %v353 = vld [vmem:[%s327 + $0x10] sm:$0xff]
        %v354 = vld [vmem:[%s327 + $0x18] sm:$0xff]
        %v355 = vld [vmem:[%s327 + $0x20] sm:$0xff]
        %v356 = vld [vmem:[%s327 + $0x28] sm:$0xff]
        %v357 = vld [vmem:[#allocation2] sm:$0xff]
        %v358 = vld [vmem:[#allocation2 + $0x8] sm:$0xff]
        %v359 = vld [vmem:[#allocation2 + $0x10] sm:$0xff]
        %v360 = vld [vmem:[#allocation2 + $0x18] sm:$0xff]
        %v361 = vld [vmem:[#allocation2 + $0x20] sm:$0xff]
        %v362 = vld [vmem:[#allocation2 + $0x28] sm:$0xff]
        %v363 = vld [vmem:[#allocation2 + $0x30] sm:$0xff]
        %v364 = vld [vmem:[#allocation2 + $0x38] sm:$0xff]
        %v365 = vld [vmem:[#allocation2 + $0x40] sm:$0xff]
        %v366 = vld [vmem:[#allocation2 + $0x48] sm:$0xff]
        %v367 = vld [vmem:[#allocation2 + $0x50] sm:$0xff]
        %v368 = vld [vmem:[#allocation2 + $0x58] sm:$0xff]
        %v369 = vld [vmem:[#allocation2 + $0x60] sm:$0xff]
        %v370 = vld [vmem:[#allocation2 + $0x68] sm:$0xff]
        %v371 = vld [vmem:[#allocation2 + $0x70] sm:$0xff]
        %v372 = vld [vmem:[#allocation2 + $0x78] sm:$0xff]
        %v373 = vld [vmem:[#allocation2 + $0x80] sm:$0xff]
        %v374 = vld [vmem:[#allocation2 + $0x88] sm:$0xff]
        %v375 = vld [vmem:[#allocation2 + $0x90] sm:$0xff]
        %v376 = vld [vmem:[#allocation2 + $0x98] sm:$0xff]
        %v377 = vld [vmem:[#allocation2 + $0xa0] sm:$0xff]
        %v378 = vld [vmem:[#allocation2 + $0xa8] sm:$0xff]
        %v379 = vld [vmem:[#allocation2 + $0xb0] sm:$0xff]
        %v380 = vld [vmem:[#allocation2 + $0xb8] sm:$0xff]
        %v381 = vld [vmem:[#allocation2 + $0xc0] sm:$0xff]
        %v382 = vld [vmem:[#allocation2 + $0xc8] sm:$0xff]
        %v383 = vld [vmem:[#allocation2 + $0xd0] sm:$0xff]
        %v384 = vld [vmem:[#allocation2 + $0xd8] sm:$0xff]
        %v385 = vld [vmem:[#allocation2 + $0xe0] sm:$0xff]
        %v386 = vld [vmem:[#allocation2 + $0xe8] sm:$0xff]
        %v387 = vld [vmem:[#allocation2 + $0xf0] sm:$0xff]
        %v388 = vld [vmem:[#allocation2 + $0xf8] sm:$0xff]
        %v389 = vld [vmem:[#allocation2 + $0x100] sm:$0xff]
        %v390 = vld [vmem:[#allocation2 + $0x108] sm:$0xff]
        %v391 = vld [vmem:[#allocation2 + $0x110] sm:$0xff]
        %v392 = vld [vmem:[#allocation2 + $0x118] sm:$0xff]
        %v393 = vld [vmem:[#allocation2 + $0x120] sm:$0xff]
        %v394 = vld [vmem:[#allocation2 + $0x128] sm:$0xff]
        %v395 = vld [vmem:[#allocation2 + $0x130] sm:$0xff]
        %v396 = vld [vmem:[#allocation2 + $0x138] sm:$0xff]
        %v397 = vld [vmem:[#allocation2 + $0x140] sm:$0xff]
        %v398 = vld [vmem:[#allocation2 + $0x148] sm:$0xff]
        %v399 = vld [vmem:[#allocation2 + $0x150] sm:$0xff]
        %v400 = vld [vmem:[#allocation2 + $0x158] sm:$0xff]
        %v401 = vld [vmem:[#allocation2 + $0x160] sm:$0xff]
        %v402 = vld [vmem:[#allocation2 + $0x168] sm:$0xff]
        %v403 = vld [vmem:[#allocation2 + $0x170] sm:$0xff]
        %v404 = vld [vmem:[#allocation2 + $0x178] sm:$0xff]
        %v405 = vld [vmem:[#allocation2 + $0x180] sm:$0xff]
        %v406 = vld [vmem:[#allocation2 + $0x188] sm:$0xff]
        %v407 = vld [vmem:[#allocation2 + $0x190] sm:$0xff]
        %v408 = vld [vmem:[#allocation2 + $0x198] sm:$0xff]
        %v409 = vld [vmem:[#allocation2 + $0x1a0] sm:$0xff]
        %v410 = vld [vmem:[#allocation2 + $0x1a8] sm:$0xff]
        %v411 = vld [vmem:[#allocation2 + $0x1b0] sm:$0xff]
        %v412 = vld [vmem:[#allocation2 + $0x1b8] sm:$0xff]
        %v413 = vld [vmem:[#allocation2 + $0x1c0] sm:$0xff]
        %v414 = vld [vmem:[#allocation2 + $0x1c8] sm:$0xff]
        %v415 = vld [vmem:[#allocation2 + $0x1d0] sm:$0xff]
        %v416 = vld [vmem:[#allocation2 + $0x1d8] sm:$0xff]
        %v417 = vld [vmem:[#allocation2 + $0x1e0] sm:$0xff]
        %v418 = vld [vmem:[#allocation2 + $0x1e8] sm:$0xff]
        %v419 = vld [vmem:[#allocation2 + $0x1f0] sm:$0xff]
        %v420 = vld [vmem:[#allocation2 + $0x1f8] sm:$0xff]
        %v421 = vld [vmem:[#allocation2 + $0x200] sm:$0xff]
        %v422 = vld [vmem:[#allocation2 + $0x208] sm:$0xff]
        %v423 = vld [vmem:[#allocation2 + $0x210] sm:$0xff]
        %v424 = vld [vmem:[#allocation2 + $0x218] sm:$0xff]
        %v425 = vld [vmem:[#allocation2 + $0x220] sm:$0xff]
        %v426 = vld [vmem:[#allocation2 + $0x228] sm:$0xff]
        %v427 = vld [vmem:[#allocation2 + $0x230] sm:$0xff]
        %v428 = vld [vmem:[#allocation2 + $0x238] sm:$0xff]
        %v429 = vld [vmem:[#allocation2 + $0x240] sm:$0xff]
        %v430 = vld [vmem:[#allocation2 + $0x248] sm:$0xff]
        %v431 = vld [vmem:[#allocation2 + $0x250] sm:$0xff]
        %v432 = vld [vmem:[#allocation2 + $0x258] sm:$0xff]
        %v433 = vld [vmem:[#allocation2 + $0x260] sm:$0xff]
        %v434 = vld [vmem:[#allocation2 + $0x268] sm:$0xff]
        %v435 = vld [vmem:[#allocation2 + $0x270] sm:$0xff]
        %v436 = vld [vmem:[#allocation2 + $0x278] sm:$0xff]
        %v437 = vld [vmem:[#allocation2 + $0x280] sm:$0xff]
        %v438 = vld [vmem:[#allocation2 + $0x288] sm:$0xff]
        %v439 = vld [vmem:[#allocation2 + $0x290] sm:$0xff]
        %v440 = vld [vmem:[#allocation2 + $0x298] sm:$0xff]
        %v441 = vld [vmem:[#allocation2 + $0x2a0] sm:$0xff]
        %v442 = vld [vmem:[#allocation2 + $0x2a8] sm:$0xff]
        %v443 = vld [vmem:[#allocation2 + $0x2b0] sm:$0xff]
        %v444 = vld [vmem:[#allocation2 + $0x2b8] sm:$0xff]
        %v445 = vld [vmem:[#allocation2 + $0x2c0] sm:$0xff]
        %v446 = vld [vmem:[#allocation2 + $0x2c8] sm:$0xff]
        %v447 = vld [vmem:[#allocation2 + $0x2d0] sm:$0xff]
        %v448 = vld [vmem:[#allocation2 + $0x2d8] sm:$0xff]
        %v449 = vld [vmem:[#allocation2 + $0x2e0] sm:$0xff]
        %v450 = vld [vmem:[#allocation2 + $0x2e8] sm:$0xff]
        %v451 = vld [vmem:[#allocation2 + $0x2f0] sm:$0xff]
        %v452 = vld [vmem:[#allocation2 + $0x2f8] sm:$0xff]
        %v453 = vld [vmem:[#allocation2 + $0x300] sm:$0xff]
        %v454 = vld [vmem:[#allocation2 + $0x308] sm:$0xff]
        %v455 = vld [vmem:[#allocation2 + $0x310] sm:$0xff]
        %v456 = vld [vmem:[#allocation2 + $0x318] sm:$0xff]
        %v457 = vld [vmem:[#allocation2 + $0x320] sm:$0xff]
        %v458 = vld [vmem:[#allocation2 + $0x328] sm:$0xff]
        %v459 = vld [vmem:[#allocation2 + $0x330] sm:$0xff]
        %v460 = vld [vmem:[#allocation2 + $0x338] sm:$0xff]
        %v461 = vld [vmem:[#allocation2 + $0x340] sm:$0xff]
        %v462 = vld [vmem:[#allocation2 + $0x348] sm:$0xff]
        %v463 = vld [vmem:[#allocation2 + $0x350] sm:$0xff]
        %v464 = vld [vmem:[#allocation2 + $0x358] sm:$0xff]
        %v465 = vld [vmem:[#allocation2 + $0x360] sm:$0xff]
        %v466 = vld [vmem:[#allocation2 + $0x368] sm:$0xff]
        %v467 = vld [vmem:[#allocation2 + $0x370] sm:$0xff]
        %v468 = vld [vmem:[#allocation2 + $0x378] sm:$0xff]
        %v469 = vld [vmem:[#allocation2 + $0x380] sm:$0xff]
        %v470 = vld [vmem:[#allocation2 + $0x388] sm:$0xff]
        %v471 = vld [vmem:[#allocation2 + $0x390] sm:$0xff]
        %v472 = vld [vmem:[#allocation2 + $0x398] sm:$0xff]
        %v473 = vld [vmem:[#allocation2 + $0x3a0] sm:$0xff]
        %v474 = vld [vmem:[#allocation2 + $0x3a8] sm:$0xff]
        %v475 = vld [vmem:[#allocation2 + $0x3b0] sm:$0xff]
        %v476 = vld [vmem:[#allocation2 + $0x3b8] sm:$0xff]
        %v477 = vld [vmem:[#allocation2 + $0x3c0] sm:$0xff]
        %v478 = vld [vmem:[#allocation2 + $0x3c8] sm:$0xff]
        %v479 = vld [vmem:[#allocation2 + $0x3d0] sm:$0xff]
        %v480 = vld [vmem:[#allocation2 + $0x3d8] sm:$0xff]
        %v481 = vld [vmem:[#allocation2 + $0x3e0] sm:$0xff]
        %v482 = vld [vmem:[#allocation2 + $0x3e8] sm:$0xff]
        %v483 = vld [vmem:[#allocation2 + $0x3f0] sm:$0xff]
        %v484 = vld [vmem:[#allocation2 + $0x3f8] sm:$0xff]
        %v485 = vld [vmem:[#allocation2 + $0x400] sm:$0xff]
        %v486 = vld [vmem:[#allocation2 + $0x408] sm:$0xff]
        %v487 = vld [vmem:[#allocation2 + $0x410] sm:$0xff]
        %v488 = vld [vmem:[#allocation2 + $0x418] sm:$0xff]
        %v489 = vld [vmem:[#allocation2 + $0x420] sm:$0xff]
        %v490 = vld [vmem:[#allocation2 + $0x428] sm:$0xff]
        %v491 = vld [vmem:[#allocation2 + $0x430] sm:$0xff]
        %v492 = vld [vmem:[#allocation2 + $0x438] sm:$0xff]
        %v493 = vld [vmem:[#allocation2 + $0x440] sm:$0xff]
        %v494 = vld [vmem:[#allocation2 + $0x448] sm:$0xff]
        %v495 = vld [vmem:[#allocation2 + $0x450] sm:$0xff]
        %v496 = vld [vmem:[#allocation2 + $0x458] sm:$0xff]
        %v497 = vld [vmem:[#allocation2 + $0x460] sm:$0xff]
        %v498 = vld [vmem:[#allocation2 + $0x468] sm:$0xff]
        %v499 = vld [vmem:[#allocation2 + $0x470] sm:$0xff]
        %v500 = vld [vmem:[#allocation2 + $0x478] sm:$0xff]
        %v501 = vld [vmem:[#allocation2 + $0x480] sm:$0xff]
        %v502 = vld [vmem:[#allocation2 + $0x488] sm:$0xff]
        %v503 = vld [vmem:[#allocation2 + $0x490] sm:$0xff]
        %v504 = vld [vmem:[#allocation2 + $0x498] sm:$0xff]
        %v505 = vld [vmem:[#allocation2 + $0x4a0] sm:$0xff]
        %v506 = vld [vmem:[#allocation2 + $0x4a8] sm:$0xff]
        %v507 = vld [vmem:[#allocation2 + $0x4b0] sm:$0xff]
        %v508 = vld [vmem:[#allocation2 + $0x4b8] sm:$0xff]
        %v509 = vld [vmem:[#allocation2 + $0x4c0] sm:$0xff]
        %v510 = vld [vmem:[#allocation2 + $0x4c8] sm:$0xff]
        %v511 = vld [vmem:[#allocation2 + $0x4d0] sm:$0xff]
        %v512 = vld [vmem:[#allocation2 + $0x4d8] sm:$0xff]
        %v513 = vld [vmem:[#allocation2 + $0x4e0] sm:$0xff]
        %v514 = vld [vmem:[#allocation2 + $0x4e8] sm:$0xff]
        %v515 = vld [vmem:[#allocation2 + $0x4f0] sm:$0xff]
        %v516 = vld [vmem:[#allocation2 + $0x4f8] sm:$0xff]
        %v517 = vld [vmem:[#allocation2 + $0x500] sm:$0xff]
        %v518 = vld [vmem:[#allocation2 + $0x508] sm:$0xff]
        %v519 = vld [vmem:[#allocation2 + $0x510] sm:$0xff]
        %v520 = vld [vmem:[#allocation2 + $0x518] sm:$0xff]
        %v521 = vld [vmem:[#allocation2 + $0x520] sm:$0xff]
        %v522 = vld [vmem:[#allocation2 + $0x528] sm:$0xff]
        %v523 = vld [vmem:[#allocation2 + $0x530] sm:$0xff]
        %v524 = vld [vmem:[#allocation2 + $0x538] sm:$0xff]
        %v525 = vld [vmem:[#allocation2 + $0x540] sm:$0xff]
        %v526 = vld [vmem:[#allocation2 + $0x548] sm:$0xff]
        %v527 = vld [vmem:[#allocation2 + $0x550] sm:$0xff]
        %v528 = vld [vmem:[#allocation2 + $0x558] sm:$0xff]
        %v529 = vld [vmem:[#allocation2 + $0x560] sm:$0xff]
        %v530 = vld [vmem:[#allocation2 + $0x568] sm:$0xff]
        %v531 = vld [vmem:[#allocation2 + $0x570] sm:$0xff]
        %v532 = vld [vmem:[#allocation2 + $0x578] sm:$0xff]
        %v533 = vld [vmem:[#allocation2 + $0x580] sm:$0xff]
        %v534 = vld [vmem:[#allocation2 + $0x588] sm:$0xff]
        %v535 = vld [vmem:[#allocation2 + $0x590] sm:$0xff]
        %v536 = vld [vmem:[#allocation2 + $0x598] sm:$0xff]
        %v537 = vld [vmem:[#allocation2 + $0x5a0] sm:$0xff]
        %v538 = vld [vmem:[#allocation2 + $0x5a8] sm:$0xff]
        %v539 = vld [vmem:[#allocation2 + $0x5b0] sm:$0xff]
        %v540 = vld [vmem:[#allocation2 + $0x5b8] sm:$0xff]
        %v541 = vld [vmem:[#allocation2 + $0x5c0] sm:$0xff]
        %v542 = vld [vmem:[#allocation2 + $0x5c8] sm:$0xff]
        %v543 = vld [vmem:[#allocation2 + $0x5d0] sm:$0xff]
        %v544 = vld [vmem:[#allocation2 + $0x5d8] sm:$0xff]
        %v545 = vld [vmem:[#allocation2 + $0x5e0] sm:$0xff]
        %v546 = vld [vmem:[#allocation2 + $0x5e8] sm:$0xff]
        %v547 = vld [vmem:[#allocation2 + $0x5f0] sm:$0xff]
        %v548 = vld [vmem:[#allocation2 + $0x5f8] sm:$0xff]
        %v549 = vld [vmem:[#allocation2 + $0x600] sm:$0xff]
        %v550 = vld [vmem:[#allocation2 + $0x608] sm:$0xff]
        %v551 = vld [vmem:[#allocation2 + $0x610] sm:$0xff]
        %v552 = vld [vmem:[#allocation2 + $0x618] sm:$0xff]
        %v553 = vld [vmem:[#allocation2 + $0x620] sm:$0xff]
        %v554 = vld [vmem:[#allocation2 + $0x628] sm:$0xff]
        %v555 = vld [vmem:[#allocation2 + $0x630] sm:$0xff]
        %v556 = vld [vmem:[#allocation2 + $0x638] sm:$0xff]
        %v557 = vld [vmem:[#allocation2 + $0x640] sm:$0xff]
        %v558 = vld [vmem:[#allocation2 + $0x648] sm:$0xff]
        %v559 = vld [vmem:[#allocation2 + $0x650] sm:$0xff]
        %v560 = vld [vmem:[#allocation2 + $0x658] sm:$0xff]
        %v561 = vld [vmem:[#allocation2 + $0x660] sm:$0xff]
        %v562 = vld [vmem:[#allocation2 + $0x668] sm:$0xff]
        %v563 = vld [vmem:[#allocation2 + $0x670] sm:$0xff]
        %v564 = vld [vmem:[#allocation2 + $0x678] sm:$0xff]
        %v565 = vld [vmem:[#allocation2 + $0x680] sm:$0xff]
        %v566 = vld [vmem:[#allocation2 + $0x688] sm:$0xff]
        %v567 = vld [vmem:[#allocation2 + $0x690] sm:$0xff]
        %v568 = vld [vmem:[#allocation2 + $0x698] sm:$0xff]
        %v569 = vld [vmem:[#allocation2 + $0x6a0] sm:$0xff]
        %v570 = vld [vmem:[#allocation2 + $0x6a8] sm:$0xff]
        %v571 = vld [vmem:[#allocation2 + $0x6b0] sm:$0xff]
        %v572 = vld [vmem:[#allocation2 + $0x6b8] sm:$0xff]
        %v573 = vld [vmem:[#allocation2 + $0x6c0] sm:$0xff]
        %v574 = vld [vmem:[#allocation2 + $0x6c8] sm:$0xff]
        %v575 = vld [vmem:[#allocation2 + $0x6d0] sm:$0xff]
        %v576 = vld [vmem:[#allocation2 + $0x6d8] sm:$0xff]
        %v577 = vld [vmem:[#allocation2 + $0x6e0] sm:$0xff]
        %v578 = vld [vmem:[#allocation2 + $0x6e8] sm:$0xff]
        %v579 = vld [vmem:[#allocation2 + $0x6f0] sm:$0xff]
        %v580 = vld [vmem:[#allocation2 + $0x6f8] sm:$0xff]
        %v581 = vld [vmem:[#allocation2 + $0x700] sm:$0xff]
        %v582 = vld [vmem:[#allocation2 + $0x708] sm:$0xff]
        %v583 = vld [vmem:[#allocation2 + $0x710] sm:$0xff]
        %v584 = vld [vmem:[#allocation2 + $0x718] sm:$0xff]
        %v585 = vld [vmem:[#allocation2 + $0x720] sm:$0xff]
        %v586 = vld [vmem:[#allocation2 + $0x728] sm:$0xff]
        %v587 = vld [vmem:[#allocation2 + $0x730] sm:$0xff]
        %v588 = vld [vmem:[#allocation2 + $0x738] sm:$0xff]
        %v589 = vld [vmem:[#allocation2 + $0x740] sm:$0xff]
        %v590 = vld [vmem:[#allocation2 + $0x748] sm:$0xff]
        %v591 = vld [vmem:[#allocation2 + $0x750] sm:$0xff]
        %v592 = vld [vmem:[#allocation2 + $0x758] sm:$0xff]
        %v593 = vld [vmem:[#allocation2 + $0x760] sm:$0xff]
        %v594 = vld [vmem:[#allocation2 + $0x768] sm:$0xff]
        %v595 = vld [vmem:[#allocation2 + $0x770] sm:$0xff]
        %v596 = vld [vmem:[#allocation2 + $0x778] sm:$0xff]
        %v597 = vld [vmem:[#allocation2 + $0x780] sm:$0xff]
        %v598 = vld [vmem:[#allocation2 + $0x788] sm:$0xff]
        %v599 = vld [vmem:[#allocation2 + $0x790] sm:$0xff]
        %v600 = vld [vmem:[#allocation2 + $0x798] sm:$0xff]
        %v601 = vld [vmem:[#allocation2 + $0x7a0] sm:$0xff]
        %v602 = vld [vmem:[#allocation2 + $0x7a8] sm:$0xff]
        %v603 = vld [vmem:[#allocation2 + $0x7b0] sm:$0xff]
        %v604 = vld [vmem:[#allocation2 + $0x7b8] sm:$0xff]
        %v605 = vld [vmem:[#allocation2 + $0x7c0] sm:$0xff]
        %v606 = vld [vmem:[#allocation2 + $0x7c8] sm:$0xff]
        %v607 = vld [vmem:[#allocation2 + $0x7d0] sm:$0xff]
        %v608 = vld [vmem:[#allocation2 + $0x7d8] sm:$0xff]
        %v609 = vld [vmem:[#allocation2 + $0x7e0] sm:$0xff]
        %v610 = vld [vmem:[#allocation2 + $0x7e8] sm:$0xff]
        %v611 = vld [vmem:[#allocation2 + $0x7f0] sm:$0xff]
        %v612 = vld [vmem:[#allocation2 + $0x7f8] sm:$0xff]
        %v613 = vld [vmem:[#allocation2 + $0x800] sm:$0xff]
        %v614 = vld [vmem:[#allocation2 + $0x808] sm:$0xff]
        %v615 = vld [vmem:[#allocation2 + $0x810] sm:$0xff]
        %v616 = vld [vmem:[#allocation2 + $0x818] sm:$0xff]
        %v617 = vld [vmem:[#allocation2 + $0x820] sm:$0xff]
        %v618 = vld [vmem:[#allocation2 + $0x828] sm:$0xff]
        %v619 = vld [vmem:[#allocation2 + $0x830] sm:$0xff]
        %v620 = vld [vmem:[#allocation2 + $0x838] sm:$0xff]
        %v621 = vld [vmem:[#allocation2 + $0x840] sm:$0xff]
        %v622 = vld [vmem:[#allocation2 + $0x848] sm:$0xff]
        %v623 = vld [vmem:[#allocation2 + $0x850] sm:$0xff]
        %v624 = vld [vmem:[#allocation2 + $0x858] sm:$0xff]
        %v625 = vld [vmem:[#allocation2 + $0x860] sm:$0xff]
        %v626 = vld [vmem:[#allocation2 + $0x868] sm:$0xff]
        %v627 = vld [vmem:[#allocation2 + $0x870] sm:$0xff]
        %v628 = vld [vmem:[#allocation2 + $0x878] sm:$0xff]
        %v629 = vld [vmem:[#allocation2 + $0x880] sm:$0xff]
        %v630 = vld [vmem:[#allocation2 + $0x888] sm:$0xff]
        %v631 = vld [vmem:[#allocation2 + $0x890] sm:$0xff]
        %v632 = vld [vmem:[#allocation2 + $0x898] sm:$0xff]
        %v633 = vld [vmem:[#allocation2 + $0x8a0] sm:$0xff]
        %v634 = vld [vmem:[#allocation2 + $0x8a8] sm:$0xff]
        %v635 = vld [vmem:[#allocation2 + $0x8b0] sm:$0xff]
        %v636 = vld [vmem:[#allocation2 + $0x8b8] sm:$0xff]
        %v637 = vld [vmem:[#allocation2 + $0x8c0] sm:$0xff]
        %v638 = vld [vmem:[#allocation2 + $0x8c8] sm:$0xff]
        %v639 = vld [vmem:[#allocation2 + $0x8d0] sm:$0xff]
        %v640 = vld [vmem:[#allocation2 + $0x8d8] sm:$0xff]
        %v641 = vld [vmem:[#allocation2 + $0x8e0] sm:$0xff]
        %v642 = vld [vmem:[#allocation2 + $0x8e8] sm:$0xff]
        %v643 = vld [vmem:[#allocation2 + $0x8f0] sm:$0xff]
        %v644 = vld [vmem:[#allocation2 + $0x8f8] sm:$0xff]
        %v645 = vld [vmem:[#allocation2 + $0x900] sm:$0xff]
        %v646 = vld [vmem:[#allocation2 + $0x908] sm:$0xff]
        %v647 = vld [vmem:[#allocation2 + $0x910] sm:$0xff]
        %v648 = vld [vmem:[#allocation2 + $0x918] sm:$0xff]
        %v649 = vld [vmem:[#allocation2 + $0x920] sm:$0xff]
        %v650 = vld [vmem:[#allocation2 + $0x928] sm:$0xff]
        %v651 = vld [vmem:[#allocation2 + $0x930] sm:$0xff]
        %v652 = vld [vmem:[#allocation2 + $0x938] sm:$0xff]
        %v653 = vld [vmem:[#allocation2 + $0x940] sm:$0xff]
        %v654 = vld [vmem:[#allocation2 + $0x948] sm:$0xff]
        %v655 = vld [vmem:[#allocation2 + $0x950] sm:$0xff]
        %v656 = vld [vmem:[#allocation2 + $0x958] sm:$0xff]
        %v657 = vld [vmem:[#allocation2 + $0x960] sm:$0xff]
        %v658 = vld [vmem:[#allocation2 + $0x968] sm:$0xff]
        %v659 = vld [vmem:[#allocation2 + $0x970] sm:$0xff]
        %v660 = vld [vmem:[#allocation2 + $0x978] sm:$0xff]
        %v661 = vld [vmem:[#allocation2 + $0x980] sm:$0xff]
        %v662 = vld [vmem:[#allocation2 + $0x988] sm:$0xff]
        %v663 = vld [vmem:[#allocation2 + $0x990] sm:$0xff]
        %v664 = vld [vmem:[#allocation2 + $0x998] sm:$0xff]
        %v665 = vld [vmem:[#allocation2 + $0x9a0] sm:$0xff]
        %v666 = vld [vmem:[#allocation2 + $0x9a8] sm:$0xff]
        %v667 = vld [vmem:[#allocation2 + $0x9b0] sm:$0xff]
        %v668 = vld [vmem:[#allocation2 + $0x9b8] sm:$0xff]
        %v669 = vld [vmem:[#allocation2 + $0x9c0] sm:$0xff]
        %v670 = vld [vmem:[#allocation2 + $0x9c8] sm:$0xff]
        %v671 = vld [vmem:[#allocation2 + $0x9d0] sm:$0xff]
        %v672 = vld [vmem:[#allocation2 + $0x9d8] sm:$0xff]
        %v673 = vld [vmem:[#allocation2 + $0x9e0] sm:$0xff]
        %v674 = vld [vmem:[#allocation2 + $0x9e8] sm:$0xff]
        %v675 = vld [vmem:[#allocation2 + $0x9f0] sm:$0xff]
        %v676 = vld [vmem:[#allocation2 + $0x9f8] sm:$0xff]
        %v677 = vld [vmem:[%s338] sm:$0xff]
        %v678 = vld [vmem:[%s338 + $0x8] sm:$0xff]
        %v679 = vld [vmem:[%s338 + $0x10] sm:$0xff]
        %v680 = vld [vmem:[%s338 + $0x18] sm:$0xff]
        %v681 = vld [vmem:[%s338 + $0x20] sm:$0xff]
        %v682 = vld [vmem:[%s338 + $0x28] sm:$0xff]
        %v683 = vld [vmem:[#allocation4] sm:$0xff]
        %v684 = vld [vmem:[#allocation4 + $0x8] sm:$0xff]
        %v685 = vld [vmem:[#allocation4 + $0x10] sm:$0xff]
        %v686 = vld [vmem:[#allocation4 + $0x18] sm:$0xff]
        %v687 = vld [vmem:[#allocation4 + $0x20] sm:$0xff]
        %v688 = vld [vmem:[#allocation4 + $0x28] sm:$0xff]
        %v689 = vld [vmem:[#allocation4 + $0x30] sm:$0xff]
        %v690 = vld [vmem:[#allocation4 + $0x38] sm:$0xff]
        %v691 = vld [vmem:[#allocation4 + $0x40] sm:$0xff]
        %v692 = vld [vmem:[#allocation4 + $0x48] sm:$0xff]
        %v693 = vld [vmem:[#allocation4 + $0x50] sm:$0xff]
        %v694 = vld [vmem:[#allocation4 + $0x58] sm:$0xff]
        %v695 = vld [vmem:[#allocation4 + $0x60] sm:$0xff]
        %v696 = vld [vmem:[#allocation4 + $0x68] sm:$0xff]
        %v697 = vld [vmem:[#allocation4 + $0x70] sm:$0xff]
        %v698 = vld [vmem:[#allocation4 + $0x78] sm:$0xff]
        %v699 = vld [vmem:[#allocation4 + $0x80] sm:$0xff]
        %v700 = vld [vmem:[#allocation4 + $0x88] sm:$0xff]
        %v701 = vld [vmem:[#allocation4 + $0x90] sm:$0xff]
        %v702 = vld [vmem:[#allocation4 + $0x98] sm:$0xff]
        %v703 = vld [vmem:[#allocation4 + $0xa0] sm:$0xff]
        %v704 = vld [vmem:[#allocation4 + $0xa8] sm:$0xff]
        %v705 = vld [vmem:[#allocation4 + $0xb0] sm:$0xff]
        %v706 = vld [vmem:[#allocation4 + $0xb8] sm:$0xff]
        %v707 = vld [vmem:[#allocation4 + $0xc0] sm:$0xff]
        %v708 = vld [vmem:[#allocation4 + $0xc8] sm:$0xff]
        %v709 = vld [vmem:[#allocation4 + $0xd0] sm:$0xff]
        %v710 = vld [vmem:[#allocation4 + $0xd8] sm:$0xff]
        %v711 = vld [vmem:[#allocation4 + $0xe0] sm:$0xff]
        %v712 = vld [vmem:[#allocation4 + $0xe8] sm:$0xff]
        %v713 = vld [vmem:[#allocation4 + $0xf0] sm:$0xff]
        %v714 = vld [vmem:[#allocation4 + $0xf8] sm:$0xff]
        %v715 = vld [vmem:[#allocation4 + $0x100] sm:$0xff]
        %v716 = vld [vmem:[#allocation4 + $0x108] sm:$0xff]
        %v717 = vld [vmem:[#allocation4 + $0x110] sm:$0xff]
        %v718 = vld [vmem:[#allocation4 + $0x118] sm:$0xff]
        %v719 = vld [vmem:[#allocation4 + $0x120] sm:$0xff]
        %v720 = vld [vmem:[#allocation4 + $0x128] sm:$0xff]
        %v721 = vld [vmem:[#allocation4 + $0x130] sm:$0xff]
        %v722 = vld [vmem:[#allocation4 + $0x138] sm:$0xff]
        %v723 = vld [vmem:[#allocation4 + $0x140] sm:$0xff]
        %v724 = vld [vmem:[#allocation4 + $0x148] sm:$0xff]
        %v725 = vld [vmem:[#allocation4 + $0x150] sm:$0xff]
        %v726 = vld [vmem:[#allocation4 + $0x158] sm:$0xff]
        %v727 = vld [vmem:[#allocation4 + $0x160] sm:$0xff]
        %v728 = vld [vmem:[#allocation4 + $0x168] sm:$0xff]
        %v729 = vld [vmem:[#allocation4 + $0x170] sm:$0xff]
        %v730 = vld [vmem:[#allocation4 + $0x178] sm:$0xff]
        %v731 = vld [vmem:[#allocation4 + $0x180] sm:$0xff]
        %v732 = vld [vmem:[#allocation4 + $0x188] sm:$0xff]
        %v733 = vld [vmem:[#allocation4 + $0x190] sm:$0xff]
        %v734 = vld [vmem:[#allocation4 + $0x198] sm:$0xff]
        %v735 = vld [vmem:[#allocation4 + $0x1a0] sm:$0xff]
        %v736 = vld [vmem:[#allocation4 + $0x1a8] sm:$0xff]
        %v737 = vld [vmem:[#allocation4 + $0x1b0] sm:$0xff]
        %v738 = vld [vmem:[#allocation4 + $0x1b8] sm:$0xff]
        %v739 = vld [vmem:[#allocation4 + $0x1c0] sm:$0xff]
        %v740 = vld [vmem:[#allocation4 + $0x1c8] sm:$0xff]
        %v741 = vld [vmem:[#allocation4 + $0x1d0] sm:$0xff]
        %v742 = vld [vmem:[#allocation4 + $0x1d8] sm:$0xff]
        %v743 = vld [vmem:[#allocation4 + $0x1e0] sm:$0xff]
        %v744 = vld [vmem:[#allocation4 + $0x1e8] sm:$0xff]
        %v745 = vld [vmem:[#allocation4 + $0x1f0] sm:$0xff]
        %v746 = vld [vmem:[#allocation4 + $0x1f8] sm:$0xff]
        %v747 = vld [vmem:[#allocation4 + $0x200] sm:$0xff]
        %v748 = vld [vmem:[#allocation4 + $0x208] sm:$0xff]
        %v749 = vld [vmem:[#allocation4 + $0x210] sm:$0xff]
        %v750 = vld [vmem:[#allocation4 + $0x218] sm:$0xff]
        %v751 = vld [vmem:[#allocation4 + $0x220] sm:$0xff]
        %v752 = vld [vmem:[#allocation4 + $0x228] sm:$0xff]
        %v753 = vld [vmem:[#allocation4 + $0x230] sm:$0xff]
        %v754 = vld [vmem:[#allocation4 + $0x238] sm:$0xff]
        %v755 = vld [vmem:[#allocation4 + $0x240] sm:$0xff]
        %v756 = vld [vmem:[#allocation4 + $0x248] sm:$0xff]
        %v757 = vld [vmem:[#allocation4 + $0x250] sm:$0xff]
        %v758 = vld [vmem:[#allocation4 + $0x258] sm:$0xff]
        %v759 = vld [vmem:[#allocation4 + $0x260] sm:$0xff]
        %v760 = vld [vmem:[#allocation4 + $0x268] sm:$0xff]
        %v761 = vld [vmem:[#allocation4 + $0x270] sm:$0xff]
        %v762 = vld [vmem:[#allocation4 + $0x278] sm:$0xff]
        %v763 = vld [vmem:[#allocation4 + $0x280] sm:$0xff]
        %v764 = vld [vmem:[#allocation4 + $0x288] sm:$0xff]
        %v765 = vld [vmem:[#allocation4 + $0x290] sm:$0xff]
        %v766 = vld [vmem:[#allocation4 + $0x298] sm:$0xff]
        %v767 = vld [vmem:[#allocation4 + $0x2a0] sm:$0xff]
        %v768 = vld [vmem:[#allocation4 + $0x2a8] sm:$0xff]
        %v769 = vld [vmem:[#allocation4 + $0x2b0] sm:$0xff]
        %v770 = vld [vmem:[#allocation4 + $0x2b8] sm:$0xff]
        %v771 = vld [vmem:[#allocation4 + $0x2c0] sm:$0xff]
        %v772 = vld [vmem:[#allocation4 + $0x2c8] sm:$0xff]
        %v773 = vld [vmem:[#allocation4 + $0x2d0] sm:$0xff]
        %v774 = vld [vmem:[#allocation4 + $0x2d8] sm:$0xff]
        %v775 = vld [vmem:[#allocation4 + $0x2e0] sm:$0xff]
        %v776 = vld [vmem:[#allocation4 + $0x2e8] sm:$0xff]
        %v777 = vld [vmem:[#allocation4 + $0x2f0] sm:$0xff]
        %v778 = vld [vmem:[#allocation4 + $0x2f8] sm:$0xff]
        %v779 = vld [vmem:[#allocation4 + $0x300] sm:$0xff]
        %v780 = vld [vmem:[#allocation4 + $0x308] sm:$0xff]
        %v781 = vld [vmem:[#allocation4 + $0x310] sm:$0xff]
        %v782 = vld [vmem:[#allocation4 + $0x318] sm:$0xff]
        %v783 = vld [vmem:[#allocation4 + $0x320] sm:$0xff]
        %v784 = vld [vmem:[#allocation4 + $0x328] sm:$0xff]
        %v785 = vld [vmem:[#allocation4 + $0x330] sm:$0xff]
        %v786 = vld [vmem:[#allocation4 + $0x338] sm:$0xff]
        %v787 = vld [vmem:[#allocation4 + $0x340] sm:$0xff]
        %v788 = vld [vmem:[#allocation4 + $0x348] sm:$0xff]
        %v789 = vld [vmem:[#allocation4 + $0x350] sm:$0xff]
        %v790 = vld [vmem:[#allocation4 + $0x358] sm:$0xff]
        %v791 = vld [vmem:[#allocation4 + $0x360] sm:$0xff]
        %v792 = vld [vmem:[#allocation4 + $0x368] sm:$0xff]
        %v793 = vld [vmem:[#allocation4 + $0x370] sm:$0xff]
        %v794 = vld [vmem:[#allocation4 + $0x378] sm:$0xff]
        %v795 = vld [vmem:[#allocation4 + $0x380] sm:$0xff]
        %v796 = vld [vmem:[#allocation4 + $0x388] sm:$0xff]
        %v797 = vld [vmem:[#allocation4 + $0x390] sm:$0xff]
        %v798 = vld [vmem:[#allocation4 + $0x398] sm:$0xff]
        %v799 = vld [vmem:[#allocation4 + $0x3a0] sm:$0xff]
        %v800 = vld [vmem:[#allocation4 + $0x3a8] sm:$0xff]
        %v801 = vld [vmem:[#allocation4 + $0x3b0] sm:$0xff]
        %v802 = vld [vmem:[#allocation4 + $0x3b8] sm:$0xff]
        %v803 = vld [vmem:[#allocation4 + $0x3c0] sm:$0xff]
        %v804 = vld [vmem:[#allocation4 + $0x3c8] sm:$0xff]
        %v805 = vld [vmem:[#allocation4 + $0x3d0] sm:$0xff]
        %v806 = vld [vmem:[#allocation4 + $0x3d8] sm:$0xff]
        %v807 = vld [vmem:[#allocation4 + $0x3e0] sm:$0xff]
        %v808 = vld [vmem:[#allocation4 + $0x3e8] sm:$0xff]
        %v809 = vld [vmem:[#allocation4 + $0x3f0] sm:$0xff]
        %v810 = vld [vmem:[#allocation4 + $0x3f8] sm:$0xff]
        %v811 = vld [vmem:[#allocation4 + $0x400] sm:$0xff]
        %v812 = vld [vmem:[#allocation4 + $0x408] sm:$0xff]
        %v813 = vld [vmem:[#allocation4 + $0x410] sm:$0xff]
        %v814 = vld [vmem:[#allocation4 + $0x418] sm:$0xff]
        %v815 = vld [vmem:[#allocation4 + $0x420] sm:$0xff]
        %v816 = vld [vmem:[#allocation4 + $0x428] sm:$0xff]
        %v817 = vld [vmem:[#allocation4 + $0x430] sm:$0xff]
        %v818 = vld [vmem:[#allocation4 + $0x438] sm:$0xff]
        %v819 = vld [vmem:[#allocation4 + $0x440] sm:$0xff]
        %v820 = vld [vmem:[#allocation4 + $0x448] sm:$0xff]
        %v821 = vld [vmem:[#allocation4 + $0x450] sm:$0xff]
        %v822 = vld [vmem:[#allocation4 + $0x458] sm:$0xff]
        %v823 = vld [vmem:[#allocation4 + $0x460] sm:$0xff]
        %v824 = vld [vmem:[#allocation4 + $0x468] sm:$0xff]
        %v825 = vld [vmem:[#allocation4 + $0x470] sm:$0xff]
        %v826 = vld [vmem:[#allocation4 + $0x478] sm:$0xff]
        %v827 = vld [vmem:[#allocation4 + $0x480] sm:$0xff]
        %v828 = vld [vmem:[#allocation4 + $0x488] sm:$0xff]
        %v829 = vld [vmem:[#allocation4 + $0x490] sm:$0xff]
        %v830 = vld [vmem:[#allocation4 + $0x498] sm:$0xff]
        %v831 = vld [vmem:[#allocation4 + $0x4a0] sm:$0xff]
        %v832 = vld [vmem:[#allocation4 + $0x4a8] sm:$0xff]
        %v833 = vld [vmem:[#allocation4 + $0x4b0] sm:$0xff]
        %v834 = vld [vmem:[#allocation4 + $0x4b8] sm:$0xff]
        %v835 = vld [vmem:[#allocation4 + $0x4c0] sm:$0xff]
        %v836 = vld [vmem:[#allocation4 + $0x4c8] sm:$0xff]
        %v837 = vld [vmem:[#allocation4 + $0x4d0] sm:$0xff]
        %v838 = vld [vmem:[#allocation4 + $0x4d8] sm:$0xff]
        %v839 = vld [vmem:[#allocation4 + $0x4e0] sm:$0xff]
        %v840 = vld [vmem:[#allocation4 + $0x4e8] sm:$0xff]
        %v841 = vld [vmem:[#allocation4 + $0x4f0] sm:$0xff]
        %v842 = vld [vmem:[#allocation4 + $0x4f8] sm:$0xff]
        %v843 = vld [vmem:[#allocation4 + $0x500] sm:$0xff]
        %v844 = vld [vmem:[#allocation4 + $0x508] sm:$0xff]
        %v845 = vld [vmem:[#allocation4 + $0x510] sm:$0xff]
        %v846 = vld [vmem:[#allocation4 + $0x518] sm:$0xff]
        %v847 = vld [vmem:[#allocation4 + $0x520] sm:$0xff]
        %v848 = vld [vmem:[#allocation4 + $0x528] sm:$0xff]
        %v849 = vld [vmem:[#allocation4 + $0x530] sm:$0xff]
        %v850 = vld [vmem:[#allocation4 + $0x538] sm:$0xff]
        %v851 = vld [vmem:[#allocation4 + $0x540] sm:$0xff]
        %v852 = vld [vmem:[#allocation4 + $0x548] sm:$0xff]
        %v853 = vld [vmem:[#allocation4 + $0x550] sm:$0xff]
        %v854 = vld [vmem:[#allocation4 + $0x558] sm:$0xff]
        %v855 = vld [vmem:[#allocation4 + $0x560] sm:$0xff]
        %v856 = vld [vmem:[#allocation4 + $0x568] sm:$0xff]
        %v857 = vld [vmem:[#allocation4 + $0x570] sm:$0xff]
        %v858 = vld [vmem:[#allocation4 + $0x578] sm:$0xff]
        %v859 = vld [vmem:[#allocation4 + $0x580] sm:$0xff]
        %v860 = vld [vmem:[#allocation4 + $0x588] sm:$0xff]
        %v861 = vld [vmem:[#allocation4 + $0x590] sm:$0xff]
        %v862 = vld [vmem:[#allocation4 + $0x598] sm:$0xff]
        %v863 = vld [vmem:[#allocation4 + $0x5a0] sm:$0xff]
        %v864 = vld [vmem:[#allocation4 + $0x5a8] sm:$0xff]
        %v865 = vld [vmem:[#allocation4 + $0x5b0] sm:$0xff]
        %v866 = vld [vmem:[#allocation4 + $0x5b8] sm:$0xff]
        %v867 = vld [vmem:[#allocation4 + $0x5c0] sm:$0xff]
        %v868 = vld [vmem:[#allocation4 + $0x5c8] sm:$0xff]
        %v869 = vld [vmem:[#allocation4 + $0x5d0] sm:$0xff]
        %v870 = vld [vmem:[#allocation4 + $0x5d8] sm:$0xff]
        %v871 = vld [vmem:[#allocation4 + $0x5e0] sm:$0xff]
        %v872 = vld [vmem:[#allocation4 + $0x5e8] sm:$0xff]
        %v873 = vld [vmem:[#allocation4 + $0x5f0] sm:$0xff]
        %v874 = vld [vmem:[#allocation4 + $0x5f8] sm:$0xff]
        %v875 = vld [vmem:[#allocation4 + $0x600] sm:$0xff]
        %v876 = vld [vmem:[#allocation4 + $0x608] sm:$0xff]
        %v877 = vld [vmem:[#allocation4 + $0x610] sm:$0xff]
        %v878 = vld [vmem:[#allocation4 + $0x618] sm:$0xff]
        %v879 = vld [vmem:[#allocation4 + $0x620] sm:$0xff]
        %v880 = vld [vmem:[#allocation4 + $0x628] sm:$0xff]
        %v881 = vld [vmem:[#allocation4 + $0x630] sm:$0xff]
        %v882 = vld [vmem:[#allocation4 + $0x638] sm:$0xff]
        %v883 = vld [vmem:[#allocation4 + $0x640] sm:$0xff]
        %v884 = vld [vmem:[#allocation4 + $0x648] sm:$0xff]
        %v885 = vld [vmem:[#allocation4 + $0x650] sm:$0xff]
        %v886 = vld [vmem:[#allocation4 + $0x658] sm:$0xff]
        %v887 = vld [vmem:[#allocation4 + $0x660] sm:$0xff]
        %v888 = vld [vmem:[#allocation4 + $0x668] sm:$0xff]
        %v889 = vld [vmem:[#allocation4 + $0x670] sm:$0xff]
        %v890 = vld [vmem:[#allocation4 + $0x678] sm:$0xff]
        %v891 = vld [vmem:[#allocation4 + $0x680] sm:$0xff]
        %v892 = vld [vmem:[#allocation4 + $0x688] sm:$0xff]
        %v893 = vld [vmem:[#allocation4 + $0x690] sm:$0xff]
        %v894 = vld [vmem:[#allocation4 + $0x698] sm:$0xff]
        %v895 = vld [vmem:[#allocation4 + $0x6a0] sm:$0xff]
        %v896 = vld [vmem:[#allocation4 + $0x6a8] sm:$0xff]
        %v897 = vld [vmem:[#allocation4 + $0x6b0] sm:$0xff]
        %v898 = vld [vmem:[#allocation4 + $0x6b8] sm:$0xff]
        %v899 = vld [vmem:[#allocation4 + $0x6c0] sm:$0xff]
        %v900 = vld [vmem:[#allocation4 + $0x6c8] sm:$0xff]
        %v901 = vld [vmem:[#allocation4 + $0x6d0] sm:$0xff]
        %v902 = vld [vmem:[#allocation4 + $0x6d8] sm:$0xff]
        %v903 = vld [vmem:[#allocation4 + $0x6e0] sm:$0xff]
        %v904 = vld [vmem:[#allocation4 + $0x6e8] sm:$0xff]
        %v905 = vld [vmem:[#allocation4 + $0x6f0] sm:$0xff]
        %v906 = vld [vmem:[#allocation4 + $0x6f8] sm:$0xff]
        %v907 = vld [vmem:[#allocation4 + $0x700] sm:$0xff]
        %v908 = vld [vmem:[#allocation4 + $0x708] sm:$0xff]
        %v909 = vld [vmem:[#allocation4 + $0x710] sm:$0xff]
        %v910 = vld [vmem:[#allocation4 + $0x718] sm:$0xff]
        %v911 = vld [vmem:[#allocation4 + $0x720] sm:$0xff]
        %v912 = vld [vmem:[#allocation4 + $0x728] sm:$0xff]
        %v913 = vld [vmem:[#allocation4 + $0x730] sm:$0xff]
        %v914 = vld [vmem:[#allocation4 + $0x738] sm:$0xff]
        %v915 = vld [vmem:[#allocation4 + $0x740] sm:$0xff]
        %v916 = vld [vmem:[#allocation4 + $0x748] sm:$0xff]
        %v917 = vld [vmem:[#allocation4 + $0x750] sm:$0xff]
        %v918 = vld [vmem:[#allocation4 + $0x758] sm:$0xff]
        %v919 = vld [vmem:[#allocation4 + $0x760] sm:$0xff]
        %v920 = vld [vmem:[#allocation4 + $0x768] sm:$0xff]
        %v921 = vld [vmem:[#allocation4 + $0x770] sm:$0xff]
        %v922 = vld [vmem:[#allocation4 + $0x778] sm:$0xff]
        %v923 = vld [vmem:[#allocation4 + $0x780] sm:$0xff]
        %v924 = vld [vmem:[#allocation4 + $0x788] sm:$0xff]
        %v925 = vld [vmem:[#allocation4 + $0x790] sm:$0xff]
        %v926 = vld [vmem:[#allocation4 + $0x798] sm:$0xff]
        %v927 = vld [vmem:[#allocation4 + $0x7a0] sm:$0xff]
        %v928 = vld [vmem:[#allocation4 + $0x7a8] sm:$0xff]
        %v929 = vld [vmem:[#allocation4 + $0x7b0] sm:$0xff]
        %v930 = vld [vmem:[#allocation4 + $0x7b8] sm:$0xff]
        %v931 = vld [vmem:[#allocation4 + $0x7c0] sm:$0xff]
        %v932 = vld [vmem:[#allocation4 + $0x7c8] sm:$0xff]
        %v933 = vld [vmem:[#allocation4 + $0x7d0] sm:$0xff]
        %v934 = vld [vmem:[#allocation4 + $0x7d8] sm:$0xff]
        %v935 = vld [vmem:[#allocation4 + $0x7e0] sm:$0xff]
        %v936 = vld [vmem:[#allocation4 + $0x7e8] sm:$0xff]
        %v937 = vld [vmem:[#allocation4 + $0x7f0] sm:$0xff]
        %v938 = vld [vmem:[#allocation4 + $0x7f8] sm:$0xff]
        %v939 = vld [vmem:[#allocation4 + $0x800] sm:$0xff]
        %v940 = vld [vmem:[#allocation4 + $0x808] sm:$0xff]
        %v941 = vld [vmem:[#allocation4 + $0x810] sm:$0xff]
        %v942 = vld [vmem:[#allocation4 + $0x818] sm:$0xff]
        %v943 = vld [vmem:[#allocation4 + $0x820] sm:$0xff]
        %v944 = vld [vmem:[#allocation4 + $0x828] sm:$0xff]
        %v945 = vld [vmem:[#allocation4 + $0x830] sm:$0xff]
        %v946 = vld [vmem:[#allocation4 + $0x838] sm:$0xff]
        %v947 = vld [vmem:[#allocation4 + $0x840] sm:$0xff]
        %v948 = vld [vmem:[#allocation4 + $0x848] sm:$0xff]
        %v949 = vld [vmem:[#allocation4 + $0x850] sm:$0xff]
        %v950 = vld [vmem:[#allocation4 + $0x858] sm:$0xff]
        %v951 = vld [vmem:[#allocation4 + $0x860] sm:$0xff]
        %v952 = vld [vmem:[#allocation4 + $0x868] sm:$0xff]
        %v953 = vld [vmem:[#allocation4 + $0x870] sm:$0xff]
        %v954 = vld [vmem:[#allocation4 + $0x878] sm:$0xff]
        %v955 = vld [vmem:[#allocation4 + $0x880] sm:$0xff]
        %v956 = vld [vmem:[#allocation4 + $0x888] sm:$0xff]
        %v957 = vld [vmem:[#allocation4 + $0x890] sm:$0xff]
        %v958 = vld [vmem:[#allocation4 + $0x898] sm:$0xff]
        %v959 = vld [vmem:[#allocation4 + $0x8a0] sm:$0xff]
        %v960 = vld [vmem:[#allocation4 + $0x8a8] sm:$0xff]
        %v961 = vld [vmem:[#allocation4 + $0x8b0] sm:$0xff]
        %v962 = vld [vmem:[#allocation4 + $0x8b8] sm:$0xff]
        %v963 = vld [vmem:[#allocation4 + $0x8c0] sm:$0xff]
        %v964 = vld [vmem:[#allocation4 + $0x8c8] sm:$0xff]
        %v965 = vld [vmem:[#allocation4 + $0x8d0] sm:$0xff]
        %v966 = vld [vmem:[#allocation4 + $0x8d8] sm:$0xff]
        %v967 = vld [vmem:[#allocation4 + $0x8e0] sm:$0xff]
        %v968 = vld [vmem:[#allocation4 + $0x8e8] sm:$0xff]
        %v969 = vld [vmem:[#allocation4 + $0x8f0] sm:$0xff]
        %v970 = vld [vmem:[#allocation4 + $0x8f8] sm:$0xff]
        %v971 = vld [vmem:[#allocation4 + $0x900] sm:$0xff]
        %v972 = vld [vmem:[#allocation4 + $0x908] sm:$0xff]
        %v973 = vld [vmem:[#allocation4 + $0x910] sm:$0xff]
        %v974 = vld [vmem:[#allocation4 + $0x918] sm:$0xff]
        %v975 = vld [vmem:[#allocation4 + $0x920] sm:$0xff]
        %v976 = vld [vmem:[#allocation4 + $0x928] sm:$0xff]
        %v977 = vld [vmem:[#allocation4 + $0x930] sm:$0xff]
        %v978 = vld [vmem:[#allocation4 + $0x938] sm:$0xff]
        %v979 = vld [vmem:[#allocation4 + $0x940] sm:$0xff]
        %v980 = vld [vmem:[#allocation4 + $0x948] sm:$0xff]
        %v981 = vld [vmem:[#allocation4 + $0x950] sm:$0xff]
        %v982 = vld [vmem:[#allocation4 + $0x958] sm:$0xff]
        %v983 = vld [vmem:[#allocation4 + $0x960] sm:$0xff]
        %v984 = vld [vmem:[#allocation4 + $0x968] sm:$0xff]
        %v985 = vld [vmem:[#allocation4 + $0x970] sm:$0xff]
        %v986 = vld [vmem:[#allocation4 + $0x978] sm:$0xff]
        %v987 = vld [vmem:[#allocation4 + $0x980] sm:$0xff]
        %v988 = vld [vmem:[#allocation4 + $0x988] sm:$0xff]
        %v989 = vld [vmem:[#allocation4 + $0x990] sm:$0xff]
        %v990 = vld [vmem:[#allocation4 + $0x998] sm:$0xff]
        %v991 = vld [vmem:[#allocation4 + $0x9a0] sm:$0xff]
        %v992 = vld [vmem:[#allocation4 + $0x9a8] sm:$0xff]
        %v993 = vld [vmem:[#allocation4 + $0x9b0] sm:$0xff]
        %v994 = vld [vmem:[#allocation4 + $0x9b8] sm:$0xff]
        %v995 = vld [vmem:[#allocation4 + $0x9c0] sm:$0xff]
        %v996 = vld [vmem:[#allocation4 + $0x9c8] sm:$0xff]
        %v997 = vld [vmem:[#allocation4 + $0x9d0] sm:$0xff]
        %v998 = vld [vmem:[#allocation4 + $0x9d8] sm:$0xff]
        %v999 = vld [vmem:[#allocation4 + $0x9e0] sm:$0xff]
        %v1000 = vld [vmem:[#allocation4 + $0x9e8] sm:$0xff]
        %v1001 = vld [vmem:[#allocation4 + $0x9f0] sm:$0xff]
        %v1002 = vld [vmem:[#allocation4 + $0x9f8] sm:$0xff]
        %v1009 = vunpack.c.l.b16 %v677
        %v1010 = vunpack.c.h.b16 %v677
        %v1011 = vunpack.c.l.b16 %v678
        %v1012 = vunpack.c.h.b16 %v678
        %v1013 = vunpack.c.l.b16 %v679
        %v1014 = vunpack.c.h.b16 %v679
        %v1015 = vunpack.c.l.b16 %v680
        %v1016 = vunpack.c.h.b16 %v680
        %v1017 = vunpack.c.l.b16 %v681
        %v1018 = vunpack.c.h.b16 %v681
        %v1019 = vunpack.c.l.b16 %v682
        %v1020 = vunpack.c.h.b16 %v682
        %v1021 = vpack.c.b16 %v1013, %v1009
        %v1022 = vpack.c.b16 %v1014, %v1010
        %v1023 = vpack.c.b16 %v1015, %v1011
        %v1024 = vpack.c.b16 %v1016, %v1012
        %v1025 = vpack.c.b16 %v1017, %v1017
        %v1026 = vpack.c.b16 %v1018, %v1018
        %v1027 = vpack.c.b16 %v1019, %v1019
        %v1028 = vpack.c.b16 %v1020, %v1020
        %v1357 = vunpack.c.l.b16 %v683
        %v1358 = vunpack.c.h.b16 %v683
        %v1359 = vunpack.c.l.b16 %v684
        %v1360 = vunpack.c.h.b16 %v684
        %v1361 = vunpack.c.l.b16 %v685
        %v1362 = vunpack.c.h.b16 %v685
        %v1363 = vunpack.c.l.b16 %v686
        %v1364 = vunpack.c.h.b16 %v686
        %v1365 = vunpack.c.l.b16 %v687
        %v1366 = vunpack.c.h.b16 %v687
        %v1367 = vunpack.c.l.b16 %v688
        %v1368 = vunpack.c.h.b16 %v688
        %v1369 = vunpack.c.l.b16 %v689
        %v1370 = vunpack.c.h.b16 %v689
        %v1371 = vunpack.c.l.b16 %v690
        %v1372 = vunpack.c.h.b16 %v690
        %v1373 = vunpack.c.l.b16 %v691
        %v1374 = vunpack.c.h.b16 %v691
        %v1375 = vunpack.c.l.b16 %v692
        %v1376 = vunpack.c.h.b16 %v692
        %v1377 = vunpack.c.l.b16 %v693
        %v1378 = vunpack.c.h.b16 %v693
        %v1379 = vunpack.c.l.b16 %v694
        %v1380 = vunpack.c.h.b16 %v694
        %v1381 = vunpack.c.l.b16 %v695
        %v1382 = vunpack.c.h.b16 %v695
        %v1383 = vunpack.c.l.b16 %v696
        %v1384 = vunpack.c.h.b16 %v696
        %v1385 = vunpack.c.l.b16 %v697
        %v1386 = vunpack.c.h.b16 %v697
        %v1387 = vunpack.c.l.b16 %v698
        %v1388 = vunpack.c.h.b16 %v698
        %v1389 = vunpack.c.l.b16 %v699
        %v1390 = vunpack.c.h.b16 %v699
        %v1391 = vunpack.c.l.b16 %v700
        %v1392 = vunpack.c.h.b16 %v700
        %v1393 = vunpack.c.l.b16 %v701
        %v1394 = vunpack.c.h.b16 %v701
        %v1395 = vunpack.c.l.b16 %v702
        %v1396 = vunpack.c.h.b16 %v702
        %v1397 = vunpack.c.l.b16 %v703
        %v1398 = vunpack.c.h.b16 %v703
        %v1399 = vunpack.c.l.b16 %v704
        %v1400 = vunpack.c.h.b16 %v704
        %v1401 = vunpack.c.l.b16 %v705
        %v1402 = vunpack.c.h.b16 %v705
        %v1403 = vunpack.c.l.b16 %v706
        %v1404 = vunpack.c.h.b16 %v706
        %v1405 = vunpack.c.l.b16 %v707
        %v1406 = vunpack.c.h.b16 %v707
        %v1407 = vunpack.c.l.b16 %v708
        %v1408 = vunpack.c.h.b16 %v708
        %v1409 = vunpack.c.l.b16 %v709
        %v1410 = vunpack.c.h.b16 %v709
        %v1411 = vunpack.c.l.b16 %v710
        %v1412 = vunpack.c.h.b16 %v710
        %v1413 = vunpack.c.l.b16 %v711
        %v1414 = vunpack.c.h.b16 %v711
        %v1415 = vunpack.c.l.b16 %v712
        %v1416 = vunpack.c.h.b16 %v712
        %v1417 = vunpack.c.l.b16 %v713
        %v1418 = vunpack.c.h.b16 %v713
        %v1419 = vunpack.c.l.b16 %v714
        %v1420 = vunpack.c.h.b16 %v714
        %v1421 = vunpack.c.l.b16 %v715
        %v1422 = vunpack.c.h.b16 %v715
        %v1423 = vunpack.c.l.b16 %v716
        %v1424 = vunpack.c.h.b16 %v716
        %v1425 = vunpack.c.l.b16 %v717
        %v1426 = vunpack.c.h.b16 %v717
        %v1427 = vunpack.c.l.b16 %v718
        %v1428 = vunpack.c.h.b16 %v718
        %v1429 = vunpack.c.l.b16 %v719
        %v1430 = vunpack.c.h.b16 %v719
        %v1431 = vunpack.c.l.b16 %v720
        %v1432 = vunpack.c.h.b16 %v720
        %v1433 = vunpack.c.l.b16 %v721
        %v1434 = vunpack.c.h.b16 %v721
        %v1435 = vunpack.c.l.b16 %v722
        %v1436 = vunpack.c.h.b16 %v722
        %v1437 = vunpack.c.l.b16 %v723
        %v1438 = vunpack.c.h.b16 %v723
        %v1439 = vunpack.c.l.b16 %v724
        %v1440 = vunpack.c.h.b16 %v724
        %v1441 = vunpack.c.l.b16 %v725
        %v1442 = vunpack.c.h.b16 %v725
        %v1443 = vunpack.c.l.b16 %v726
        %v1444 = vunpack.c.h.b16 %v726
        %v1445 = vunpack.c.l.b16 %v727
        %v1446 = vunpack.c.h.b16 %v727
        %v1447 = vunpack.c.l.b16 %v728
        %v1448 = vunpack.c.h.b16 %v728
        %v1449 = vunpack.c.l.b16 %v729
        %v1450 = vunpack.c.h.b16 %v729
        %v1451 = vunpack.c.l.b16 %v730
        %v1452 = vunpack.c.h.b16 %v730
        %v1453 = vunpack.c.l.b16 %v731
        %v1454 = vunpack.c.h.b16 %v731
        %v1455 = vunpack.c.l.b16 %v732
        %v1456 = vunpack.c.h.b16 %v732
        %v1457 = vunpack.c.l.b16 %v733
        %v1458 = vunpack.c.h.b16 %v733
        %v1459 = vunpack.c.l.b16 %v734
        %v1460 = vunpack.c.h.b16 %v734
        %v1461 = vunpack.c.l.b16 %v735
        %v1462 = vunpack.c.h.b16 %v735
        %v1463 = vunpack.c.l.b16 %v736
        %v1464 = vunpack.c.h.b16 %v736
        %v1465 = vunpack.c.l.b16 %v737
        %v1466 = vunpack.c.h.b16 %v737
        %v1467 = vunpack.c.l.b16 %v738
        %v1468 = vunpack.c.h.b16 %v738
        %v1469 = vunpack.c.l.b16 %v739
        %v1470 = vunpack.c.h.b16 %v739
        %v1471 = vunpack.c.l.b16 %v740
        %v1472 = vunpack.c.h.b16 %v740
        %v1473 = vunpack.c.l.b16 %v741
        %v1474 = vunpack.c.h.b16 %v741
        %v1475 = vunpack.c.l.b16 %v742
        %v1476 = vunpack.c.h.b16 %v742
        %v1477 = vunpack.c.l.b16 %v743
        %v1478 = vunpack.c.h.b16 %v743
        %v1479 = vunpack.c.l.b16 %v744
        %v1480 = vunpack.c.h.b16 %v744
        %v1481 = vunpack.c.l.b16 %v745
        %v1482 = vunpack.c.h.b16 %v745
        %v1483 = vunpack.c.l.b16 %v746
        %v1484 = vunpack.c.h.b16 %v746
        %v1485 = vunpack.c.l.b16 %v747
        %v1486 = vunpack.c.h.b16 %v747
        %v1487 = vunpack.c.l.b16 %v748
        %v1488 = vunpack.c.h.b16 %v748
        %v1489 = vunpack.c.l.b16 %v749
        %v1490 = vunpack.c.h.b16 %v749
        %v1491 = vunpack.c.l.b16 %v750
        %v1492 = vunpack.c.h.b16 %v750
        %v1493 = vunpack.c.l.b16 %v751
        %v1494 = vunpack.c.h.b16 %v751
        %v1495 = vunpack.c.l.b16 %v752
        %v1496 = vunpack.c.h.b16 %v752
        %v1497 = vunpack.c.l.b16 %v753
        %v1498 = vunpack.c.h.b16 %v753
        %v1499 = vunpack.c.l.b16 %v754
        %v1500 = vunpack.c.h.b16 %v754
        %v1501 = vunpack.c.l.b16 %v755
        %v1502 = vunpack.c.h.b16 %v755
        %v1503 = vunpack.c.l.b16 %v756
        %v1504 = vunpack.c.h.b16 %v756
        %v1505 = vunpack.c.l.b16 %v757
        %v1506 = vunpack.c.h.b16 %v757
        %v1507 = vunpack.c.l.b16 %v758
        %v1508 = vunpack.c.h.b16 %v758
        %v1509 = vunpack.c.l.b16 %v759
        %v1510 = vunpack.c.h.b16 %v759
        %v1511 = vunpack.c.l.b16 %v760
        %v1512 = vunpack.c.h.b16 %v760
        %v1513 = vunpack.c.l.b16 %v761
        %v1514 = vunpack.c.h.b16 %v761
        %v1515 = vunpack.c.l.b16 %v762
        %v1516 = vunpack.c.h.b16 %v762
        %v1517 = vunpack.c.l.b16 %v763
        %v1518 = vunpack.c.h.b16 %v763
        %v1519 = vunpack.c.l.b16 %v764
        %v1520 = vunpack.c.h.b16 %v764
        %v1521 = vunpack.c.l.b16 %v765
        %v1522 = vunpack.c.h.b16 %v765
        %v1523 = vunpack.c.l.b16 %v766
        %v1524 = vunpack.c.h.b16 %v766
        %v1525 = vunpack.c.l.b16 %v767
        %v1526 = vunpack.c.h.b16 %v767
        %v1527 = vunpack.c.l.b16 %v768
        %v1528 = vunpack.c.h.b16 %v768
        %v1529 = vunpack.c.l.b16 %v769
        %v1530 = vunpack.c.h.b16 %v769
        %v1531 = vunpack.c.l.b16 %v770
        %v1532 = vunpack.c.h.b16 %v770
        %v1533 = vunpack.c.l.b16 %v771
        %v1534 = vunpack.c.h.b16 %v771
        %v1535 = vunpack.c.l.b16 %v772
        %v1536 = vunpack.c.h.b16 %v772
        %v1537 = vunpack.c.l.b16 %v773
        %v1538 = vunpack.c.h.b16 %v773
        %v1539 = vunpack.c.l.b16 %v774
        %v1540 = vunpack.c.h.b16 %v774
        %v1541 = vunpack.c.l.b16 %v775
        %v1542 = vunpack.c.h.b16 %v775
        %v1543 = vunpack.c.l.b16 %v776
        %v1544 = vunpack.c.h.b16 %v776
        %v1545 = vunpack.c.l.b16 %v777
        %v1546 = vunpack.c.h.b16 %v777
        %v1547 = vunpack.c.l.b16 %v778
        %v1548 = vunpack.c.h.b16 %v778
        %v1549 = vunpack.c.l.b16 %v779
        %v1550 = vunpack.c.h.b16 %v779
        %v1551 = vunpack.c.l.b16 %v780
        %v1552 = vunpack.c.h.b16 %v780
        %v1553 = vunpack.c.l.b16 %v781
        %v1554 = vunpack.c.h.b16 %v781
        %v1555 = vunpack.c.l.b16 %v782
        %v1556 = vunpack.c.h.b16 %v782
        %v1557 = vunpack.c.l.b16 %v783
        %v1558 = vunpack.c.h.b16 %v783
        %v1559 = vunpack.c.l.b16 %v784
        %v1560 = vunpack.c.h.b16 %v784
        %v1561 = vunpack.c.l.b16 %v785
        %v1562 = vunpack.c.h.b16 %v785
        %v1563 = vunpack.c.l.b16 %v786
        %v1564 = vunpack.c.h.b16 %v786
        %v1565 = vunpack.c.l.b16 %v787
        %v1566 = vunpack.c.h.b16 %v787
        %v1567 = vunpack.c.l.b16 %v788
        %v1568 = vunpack.c.h.b16 %v788
        %v1569 = vunpack.c.l.b16 %v789
        %v1570 = vunpack.c.h.b16 %v789
        %v1571 = vunpack.c.l.b16 %v790
        %v1572 = vunpack.c.h.b16 %v790
        %v1573 = vunpack.c.l.b16 %v791
        %v1574 = vunpack.c.h.b16 %v791
        %v1575 = vunpack.c.l.b16 %v792
        %v1576 = vunpack.c.h.b16 %v792
        %v1577 = vunpack.c.l.b16 %v793
        %v1578 = vunpack.c.h.b16 %v793
        %v1579 = vunpack.c.l.b16 %v794
        %v1580 = vunpack.c.h.b16 %v794
        %v1581 = vunpack.c.l.b16 %v795
        %v1582 = vunpack.c.h.b16 %v795
        %v1583 = vunpack.c.l.b16 %v796
        %v1584 = vunpack.c.h.b16 %v796
        %v1585 = vunpack.c.l.b16 %v797
        %v1586 = vunpack.c.h.b16 %v797
        %v1587 = vunpack.c.l.b16 %v798
        %v1588 = vunpack.c.h.b16 %v798
        %v1589 = vunpack.c.l.b16 %v799
        %v1590 = vunpack.c.h.b16 %v799
        %v1591 = vunpack.c.l.b16 %v800
        %v1592 = vunpack.c.h.b16 %v800
        %v1593 = vunpack.c.l.b16 %v801
        %v1594 = vunpack.c.h.b16 %v801
        %v1595 = vunpack.c.l.b16 %v802
        %v1596 = vunpack.c.h.b16 %v802
        %v1597 = vunpack.c.l.b16 %v803
        %v1598 = vunpack.c.h.b16 %v803
        %v1599 = vunpack.c.l.b16 %v804
        %v1600 = vunpack.c.h.b16 %v804
        %v1601 = vunpack.c.l.b16 %v805
        %v1602 = vunpack.c.h.b16 %v805
        %v1603 = vunpack.c.l.b16 %v806
        %v1604 = vunpack.c.h.b16 %v806
        %v1605 = vunpack.c.l.b16 %v807
        %v1606 = vunpack.c.h.b16 %v807
        %v1607 = vunpack.c.l.b16 %v808
        %v1608 = vunpack.c.h.b16 %v808
        %v1609 = vunpack.c.l.b16 %v809
        %v1610 = vunpack.c.h.b16 %v809
        %v1611 = vunpack.c.l.b16 %v810
        %v1612 = vunpack.c.h.b16 %v810
        %v1613 = vunpack.c.l.b16 %v811
        %v1614 = vunpack.c.h.b16 %v811
        %v1615 = vunpack.c.l.b16 %v812
        %v1616 = vunpack.c.h.b16 %v812
        %v1617 = vunpack.c.l.b16 %v813
        %v1618 = vunpack.c.h.b16 %v813
        %v1619 = vunpack.c.l.b16 %v814
        %v1620 = vunpack.c.h.b16 %v814
        %v1621 = vunpack.c.l.b16 %v815
        %v1622 = vunpack.c.h.b16 %v815
        %v1623 = vunpack.c.l.b16 %v816
        %v1624 = vunpack.c.h.b16 %v816
        %v1625 = vunpack.c.l.b16 %v817
        %v1626 = vunpack.c.h.b16 %v817
        %v1627 = vunpack.c.l.b16 %v818
        %v1628 = vunpack.c.h.b16 %v818
        %v1629 = vunpack.c.l.b16 %v819
        %v1630 = vunpack.c.h.b16 %v819
        %v1631 = vunpack.c.l.b16 %v820
        %v1632 = vunpack.c.h.b16 %v820
        %v1633 = vunpack.c.l.b16 %v821
        %v1634 = vunpack.c.h.b16 %v821
        %v1635 = vunpack.c.l.b16 %v822
        %v1636 = vunpack.c.h.b16 %v822
        %v1637 = vunpack.c.l.b16 %v823
        %v1638 = vunpack.c.h.b16 %v823
        %v1639 = vunpack.c.l.b16 %v824
        %v1640 = vunpack.c.h.b16 %v824
        %v1641 = vunpack.c.l.b16 %v825
        %v1642 = vunpack.c.h.b16 %v825
        %v1643 = vunpack.c.l.b16 %v826
        %v1644 = vunpack.c.h.b16 %v826
        %v1645 = vunpack.c.l.b16 %v827
        %v1646 = vunpack.c.h.b16 %v827
        %v1647 = vunpack.c.l.b16 %v828
        %v1648 = vunpack.c.h.b16 %v828
        %v1649 = vunpack.c.l.b16 %v829
        %v1650 = vunpack.c.h.b16 %v829
        %v1651 = vunpack.c.l.b16 %v830
        %v1652 = vunpack.c.h.b16 %v830
        %v1653 = vunpack.c.l.b16 %v831
        %v1654 = vunpack.c.h.b16 %v831
        %v1655 = vunpack.c.l.b16 %v832
        %v1656 = vunpack.c.h.b16 %v832
        %v1657 = vunpack.c.l.b16 %v833
        %v1658 = vunpack.c.h.b16 %v833
        %v1659 = vunpack.c.l.b16 %v834
        %v1660 = vunpack.c.h.b16 %v834
        %v1661 = vunpack.c.l.b16 %v835
        %v1662 = vunpack.c.h.b16 %v835
        %v1663 = vunpack.c.l.b16 %v836
        %v1664 = vunpack.c.h.b16 %v836
        %v1665 = vunpack.c.l.b16 %v837
        %v1666 = vunpack.c.h.b16 %v837
        %v1667 = vunpack.c.l.b16 %v838
        %v1668 = vunpack.c.h.b16 %v838
        %v1669 = vunpack.c.l.b16 %v839
        %v1670 = vunpack.c.h.b16 %v839
        %v1671 = vunpack.c.l.b16 %v840
        %v1672 = vunpack.c.h.b16 %v840
        %v1673 = vunpack.c.l.b16 %v841
        %v1674 = vunpack.c.h.b16 %v841
        %v1675 = vunpack.c.l.b16 %v842
        %v1676 = vunpack.c.h.b16 %v842
        %v1677 = vunpack.c.l.b16 %v843
        %v1678 = vunpack.c.h.b16 %v843
        %v1679 = vunpack.c.l.b16 %v844
        %v1680 = vunpack.c.h.b16 %v844
        %v1681 = vunpack.c.l.b16 %v845
        %v1682 = vunpack.c.h.b16 %v845
        %v1683 = vunpack.c.l.b16 %v846
        %v1684 = vunpack.c.h.b16 %v846
        %v1685 = vunpack.c.l.b16 %v847
        %v1686 = vunpack.c.h.b16 %v847
        %v1687 = vunpack.c.l.b16 %v848
        %v1688 = vunpack.c.h.b16 %v848
        %v1689 = vunpack.c.l.b16 %v849
        %v1690 = vunpack.c.h.b16 %v849
        %v1691 = vunpack.c.l.b16 %v850
        %v1692 = vunpack.c.h.b16 %v850
        %v1693 = vunpack.c.l.b16 %v851
        %v1694 = vunpack.c.h.b16 %v851
        %v1695 = vunpack.c.l.b16 %v852
        %v1696 = vunpack.c.h.b16 %v852
        %v1697 = vunpack.c.l.b16 %v853
        %v1698 = vunpack.c.h.b16 %v853
        %v1699 = vunpack.c.l.b16 %v854
        %v1700 = vunpack.c.h.b16 %v854
        %v1701 = vunpack.c.l.b16 %v855
        %v1702 = vunpack.c.h.b16 %v855
        %v1703 = vunpack.c.l.b16 %v856
        %v1704 = vunpack.c.h.b16 %v856
        %v1705 = vunpack.c.l.b16 %v857
        %v1706 = vunpack.c.h.b16 %v857
        %v1707 = vunpack.c.l.b16 %v858
        %v1708 = vunpack.c.h.b16 %v858
        %v1709 = vunpack.c.l.b16 %v859
        %v1710 = vunpack.c.h.b16 %v859
        %v1711 = vunpack.c.l.b16 %v860
        %v1712 = vunpack.c.h.b16 %v860
        %v1713 = vunpack.c.l.b16 %v861
        %v1714 = vunpack.c.h.b16 %v861
        %v1715 = vunpack.c.l.b16 %v862
        %v1716 = vunpack.c.h.b16 %v862
        %v1717 = vunpack.c.l.b16 %v863
        %v1718 = vunpack.c.h.b16 %v863
        %v1719 = vunpack.c.l.b16 %v864
        %v1720 = vunpack.c.h.b16 %v864
        %v1721 = vunpack.c.l.b16 %v865
        %v1722 = vunpack.c.h.b16 %v865
        %v1723 = vunpack.c.l.b16 %v866
        %v1724 = vunpack.c.h.b16 %v866
        %v1725 = vunpack.c.l.b16 %v867
        %v1726 = vunpack.c.h.b16 %v867
        %v1727 = vunpack.c.l.b16 %v868
        %v1728 = vunpack.c.h.b16 %v868
        %v1729 = vunpack.c.l.b16 %v869
        %v1730 = vunpack.c.h.b16 %v869
        %v1731 = vunpack.c.l.b16 %v870
        %v1732 = vunpack.c.h.b16 %v870
        %v1733 = vunpack.c.l.b16 %v871
        %v1734 = vunpack.c.h.b16 %v871
        %v1735 = vunpack.c.l.b16 %v872
        %v1736 = vunpack.c.h.b16 %v872
        %v1737 = vunpack.c.l.b16 %v873
        %v1738 = vunpack.c.h.b16 %v873
        %v1739 = vunpack.c.l.b16 %v874
        %v1740 = vunpack.c.h.b16 %v874
        %v1741 = vunpack.c.l.b16 %v875
        %v1742 = vunpack.c.h.b16 %v875
        %v1743 = vunpack.c.l.b16 %v876
        %v1744 = vunpack.c.h.b16 %v876
        %v1745 = vunpack.c.l.b16 %v877
        %v1746 = vunpack.c.h.b16 %v877
        %v1747 = vunpack.c.l.b16 %v878
        %v1748 = vunpack.c.h.b16 %v878
        %v1749 = vunpack.c.l.b16 %v879
        %v1750 = vunpack.c.h.b16 %v879
        %v1751 = vunpack.c.l.b16 %v880
        %v1752 = vunpack.c.h.b16 %v880
        %v1753 = vunpack.c.l.b16 %v881
        %v1754 = vunpack.c.h.b16 %v881
        %v1755 = vunpack.c.l.b16 %v882
        %v1756 = vunpack.c.h.b16 %v882
        %v1757 = vunpack.c.l.b16 %v883
        %v1758 = vunpack.c.h.b16 %v883
        %v1759 = vunpack.c.l.b16 %v884
        %v1760 = vunpack.c.h.b16 %v884
        %v1761 = vunpack.c.l.b16 %v885
        %v1762 = vunpack.c.h.b16 %v885
        %v1763 = vunpack.c.l.b16 %v886
        %v1764 = vunpack.c.h.b16 %v886
        %v1765 = vunpack.c.l.b16 %v887
        %v1766 = vunpack.c.h.b16 %v887
        %v1767 = vunpack.c.l.b16 %v888
        %v1768 = vunpack.c.h.b16 %v888
        %v1769 = vunpack.c.l.b16 %v889
        %v1770 = vunpack.c.h.b16 %v889
        %v1771 = vunpack.c.l.b16 %v890
        %v1772 = vunpack.c.h.b16 %v890
        %v1773 = vunpack.c.l.b16 %v891
        %v1774 = vunpack.c.h.b16 %v891
        %v1775 = vunpack.c.l.b16 %v892
        %v1776 = vunpack.c.h.b16 %v892
        %v1777 = vunpack.c.l.b16 %v893
        %v1778 = vunpack.c.h.b16 %v893
        %v1779 = vunpack.c.l.b16 %v894
        %v1780 = vunpack.c.h.b16 %v894
        %v1781 = vunpack.c.l.b16 %v895
        %v1782 = vunpack.c.h.b16 %v895
        %v1783 = vunpack.c.l.b16 %v896
        %v1784 = vunpack.c.h.b16 %v896
        %v1785 = vunpack.c.l.b16 %v897
        %v1786 = vunpack.c.h.b16 %v897
        %v1787 = vunpack.c.l.b16 %v898
        %v1788 = vunpack.c.h.b16 %v898
        %v1789 = vunpack.c.l.b16 %v899
        %v1790 = vunpack.c.h.b16 %v899
        %v1791 = vunpack.c.l.b16 %v900
        %v1792 = vunpack.c.h.b16 %v900
        %v1793 = vunpack.c.l.b16 %v901
        %v1794 = vunpack.c.h.b16 %v901
        %v1795 = vunpack.c.l.b16 %v902
        %v1796 = vunpack.c.h.b16 %v902
        %v1797 = vunpack.c.l.b16 %v903
        %v1798 = vunpack.c.h.b16 %v903
        %v1799 = vunpack.c.l.b16 %v904
        %v1800 = vunpack.c.h.b16 %v904
        %v1801 = vunpack.c.l.b16 %v905
        %v1802 = vunpack.c.h.b16 %v905
        %v1803 = vunpack.c.l.b16 %v906
        %v1804 = vunpack.c.h.b16 %v906
        %v1805 = vunpack.c.l.b16 %v907
        %v1806 = vunpack.c.h.b16 %v907
        %v1807 = vunpack.c.l.b16 %v908
        %v1808 = vunpack.c.h.b16 %v908
        %v1809 = vunpack.c.l.b16 %v909
        %v1810 = vunpack.c.h.b16 %v909
        %v1811 = vunpack.c.l.b16 %v910
        %v1812 = vunpack.c.h.b16 %v910
        %v1813 = vunpack.c.l.b16 %v911
        %v1814 = vunpack.c.h.b16 %v911
        %v1815 = vunpack.c.l.b16 %v912
        %v1816 = vunpack.c.h.b16 %v912
        %v1817 = vunpack.c.l.b16 %v913
        %v1818 = vunpack.c.h.b16 %v913
        %v1819 = vunpack.c.l.b16 %v914
        %v1820 = vunpack.c.h.b16 %v914
        %v1821 = vunpack.c.l.b16 %v915
        %v1822 = vunpack.c.h.b16 %v915
        %v1823 = vunpack.c.l.b16 %v916
        %v1824 = vunpack.c.h.b16 %v916
        %v1825 = vunpack.c.l.b16 %v917
        %v1826 = vunpack.c.h.b16 %v917
        %v1827 = vunpack.c.l.b16 %v918
        %v1828 = vunpack.c.h.b16 %v918
        %v1829 = vunpack.c.l.b16 %v919
        %v1830 = vunpack.c.h.b16 %v919
        %v1831 = vunpack.c.l.b16 %v920
        %v1832 = vunpack.c.h.b16 %v920
        %v1833 = vunpack.c.l.b16 %v921
        %v1834 = vunpack.c.h.b16 %v921
        %v1835 = vunpack.c.l.b16 %v922
        %v1836 = vunpack.c.h.b16 %v922
        %v1837 = vunpack.c.l.b16 %v923
        %v1838 = vunpack.c.h.b16 %v923
        %v1839 = vunpack.c.l.b16 %v924
        %v1840 = vunpack.c.h.b16 %v924
        %v1841 = vunpack.c.l.b16 %v925
        %v1842 = vunpack.c.h.b16 %v925
        %v1843 = vunpack.c.l.b16 %v926
        %v1844 = vunpack.c.h.b16 %v926
        %v1845 = vunpack.c.l.b16 %v927
        %v1846 = vunpack.c.h.b16 %v927
        %v1847 = vunpack.c.l.b16 %v928
        %v1848 = vunpack.c.h.b16 %v928
        %v1849 = vunpack.c.l.b16 %v929
        %v1850 = vunpack.c.h.b16 %v929
        %v1851 = vunpack.c.l.b16 %v930
        %v1852 = vunpack.c.h.b16 %v930
        %v1853 = vunpack.c.l.b16 %v931
        %v1854 = vunpack.c.h.b16 %v931
        %v1855 = vunpack.c.l.b16 %v932
        %v1856 = vunpack.c.h.b16 %v932
        %v1857 = vunpack.c.l.b16 %v933
        %v1858 = vunpack.c.h.b16 %v933
        %v1859 = vunpack.c.l.b16 %v934
        %v1860 = vunpack.c.h.b16 %v934
        %v1861 = vunpack.c.l.b16 %v935
        %v1862 = vunpack.c.h.b16 %v935
        %v1863 = vunpack.c.l.b16 %v936
        %v1864 = vunpack.c.h.b16 %v936
        %v1865 = vunpack.c.l.b16 %v937
        %v1866 = vunpack.c.h.b16 %v937
        %v1867 = vunpack.c.l.b16 %v938
        %v1868 = vunpack.c.h.b16 %v938
        %v1869 = vunpack.c.l.b16 %v939
        %v1870 = vunpack.c.h.b16 %v939
        %v1871 = vunpack.c.l.b16 %v940
        %v1872 = vunpack.c.h.b16 %v940
        %v1873 = vunpack.c.l.b16 %v941
        %v1874 = vunpack.c.h.b16 %v941
        %v1875 = vunpack.c.l.b16 %v942
        %v1876 = vunpack.c.h.b16 %v942
        %v1877 = vunpack.c.l.b16 %v943
        %v1878 = vunpack.c.h.b16 %v943
        %v1879 = vunpack.c.l.b16 %v944
        %v1880 = vunpack.c.h.b16 %v944
        %v1881 = vunpack.c.l.b16 %v945
        %v1882 = vunpack.c.h.b16 %v945
        %v1883 = vunpack.c.l.b16 %v946
        %v1884 = vunpack.c.h.b16 %v946
        %v1885 = vunpack.c.l.b16 %v947
        %v1886 = vunpack.c.h.b16 %v947
        %v1887 = vunpack.c.l.b16 %v948
        %v1888 = vunpack.c.h.b16 %v948
        %v1889 = vunpack.c.l.b16 %v949
        %v1890 = vunpack.c.h.b16 %v949
        %v1891 = vunpack.c.l.b16 %v950
        %v1892 = vunpack.c.h.b16 %v950
        %v1893 = vunpack.c.l.b16 %v951
        %v1894 = vunpack.c.h.b16 %v951
        %v1895 = vunpack.c.l.b16 %v952
        %v1896 = vunpack.c.h.b16 %v952
        %v1897 = vunpack.c.l.b16 %v953
        %v1898 = vunpack.c.h.b16 %v953
        %v1899 = vunpack.c.l.b16 %v954
        %v1900 = vunpack.c.h.b16 %v954
        %v1901 = vunpack.c.l.b16 %v955
        %v1902 = vunpack.c.h.b16 %v955
        %v1903 = vunpack.c.l.b16 %v956
        %v1904 = vunpack.c.h.b16 %v956
        %v1905 = vunpack.c.l.b16 %v957
        %v1906 = vunpack.c.h.b16 %v957
        %v1907 = vunpack.c.l.b16 %v958
        %v1908 = vunpack.c.h.b16 %v958
        %v1909 = vunpack.c.l.b16 %v959
        %v1910 = vunpack.c.h.b16 %v959
        %v1911 = vunpack.c.l.b16 %v960
        %v1912 = vunpack.c.h.b16 %v960
        %v1913 = vunpack.c.l.b16 %v961
        %v1914 = vunpack.c.h.b16 %v961
        %v1915 = vunpack.c.l.b16 %v962
        %v1916 = vunpack.c.h.b16 %v962
        %v1917 = vunpack.c.l.b16 %v963
        %v1918 = vunpack.c.h.b16 %v963
        %v1919 = vunpack.c.l.b16 %v964
        %v1920 = vunpack.c.h.b16 %v964
        %v1921 = vunpack.c.l.b16 %v965
        %v1922 = vunpack.c.h.b16 %v965
        %v1923 = vunpack.c.l.b16 %v966
        %v1924 = vunpack.c.h.b16 %v966
        %v1925 = vunpack.c.l.b16 %v967
        %v1926 = vunpack.c.h.b16 %v967
        %v1927 = vunpack.c.l.b16 %v968
        %v1928 = vunpack.c.h.b16 %v968
        %v1929 = vunpack.c.l.b16 %v969
        %v1930 = vunpack.c.h.b16 %v969
        %v1931 = vunpack.c.l.b16 %v970
        %v1932 = vunpack.c.h.b16 %v970
        %v1933 = vunpack.c.l.b16 %v971
        %v1934 = vunpack.c.h.b16 %v971
        %v1935 = vunpack.c.l.b16 %v972
        %v1936 = vunpack.c.h.b16 %v972
        %v1937 = vunpack.c.l.b16 %v973
        %v1938 = vunpack.c.h.b16 %v973
        %v1939 = vunpack.c.l.b16 %v974
        %v1940 = vunpack.c.h.b16 %v974
        %v1941 = vunpack.c.l.b16 %v975
        %v1942 = vunpack.c.h.b16 %v975
        %v1943 = vunpack.c.l.b16 %v976
        %v1944 = vunpack.c.h.b16 %v976
        %v1945 = vunpack.c.l.b16 %v977
        %v1946 = vunpack.c.h.b16 %v977
        %v1947 = vunpack.c.l.b16 %v978
        %v1948 = vunpack.c.h.b16 %v978
        %v1949 = vunpack.c.l.b16 %v979
        %v1950 = vunpack.c.h.b16 %v979
        %v1951 = vunpack.c.l.b16 %v980
        %v1952 = vunpack.c.h.b16 %v980
        %v1953 = vunpack.c.l.b16 %v981
        %v1954 = vunpack.c.h.b16 %v981
        %v1955 = vunpack.c.l.b16 %v982
        %v1956 = vunpack.c.h.b16 %v982
        %v1957 = vunpack.c.l.b16 %v983
        %v1958 = vunpack.c.h.b16 %v983
        %v1959 = vunpack.c.l.b16 %v984
        %v1960 = vunpack.c.h.b16 %v984
        %v1961 = vunpack.c.l.b16 %v985
        %v1962 = vunpack.c.h.b16 %v985
        %v1963 = vunpack.c.l.b16 %v986
        %v1964 = vunpack.c.h.b16 %v986
        %v1965 = vunpack.c.l.b16 %v987
        %v1966 = vunpack.c.h.b16 %v987
        %v1967 = vunpack.c.l.b16 %v988
        %v1968 = vunpack.c.h.b16 %v988
        %v1969 = vunpack.c.l.b16 %v989
        %v1970 = vunpack.c.h.b16 %v989
        %v1971 = vunpack.c.l.b16 %v990
        %v1972 = vunpack.c.h.b16 %v990
        %v1973 = vunpack.c.l.b16 %v991
        %v1974 = vunpack.c.h.b16 %v991
        %v1975 = vunpack.c.l.b16 %v992
        %v1976 = vunpack.c.h.b16 %v992
        %v1977 = vunpack.c.l.b16 %v993
        %v1978 = vunpack.c.h.b16 %v993
        %v1979 = vunpack.c.l.b16 %v994
        %v1980 = vunpack.c.h.b16 %v994
        %v1981 = vunpack.c.l.b16 %v995
        %v1982 = vunpack.c.h.b16 %v995
        %v1983 = vunpack.c.l.b16 %v996
        %v1984 = vunpack.c.h.b16 %v996
        %v1985 = vunpack.c.l.b16 %v997
        %v1986 = vunpack.c.h.b16 %v997
        %v1987 = vunpack.c.l.b16 %v998
        %v1988 = vunpack.c.h.b16 %v998
        %v1989 = vunpack.c.l.b16 %v999
        %v1990 = vunpack.c.h.b16 %v999
        %v1991 = vunpack.c.l.b16 %v1000
        %v1992 = vunpack.c.h.b16 %v1000
        %v1993 = vunpack.c.l.b16 %v1001
        %v1994 = vunpack.c.h.b16 %v1001
        %v1995 = vunpack.c.l.b16 %v1002
        %v1996 = vunpack.c.h.b16 %v1002
        %v1997 = vpack.c.b16 %v1367, %v1357
        %v1998 = vpack.c.b16 %v1368, %v1358
        %v1999 = vpack.c.b16 %v1369, %v1359
        %v2000 = vpack.c.b16 %v1370, %v1360
        %v2001 = vpack.c.b16 %v1371, %v1361
        %v2002 = vpack.c.b16 %v1372, %v1362
        %v2003 = vpack.c.b16 %v1373, %v1363
        %v2004 = vpack.c.b16 %v1374, %v1364
        %v2005 = vpack.c.b16 %v1375, %v1365
        %v2006 = vpack.c.b16 %v1376, %v1366
        %v2007 = vpack.c.b16 %v1387, %v1377
        %v2008 = vpack.c.b16 %v1388, %v1378
        %v2009 = vpack.c.b16 %v1389, %v1379
        %v2010 = vpack.c.b16 %v1390, %v1380
        %v2011 = vpack.c.b16 %v1391, %v1381
        %v2012 = vpack.c.b16 %v1392, %v1382
        %v2013 = vpack.c.b16 %v1393, %v1383
        %v2014 = vpack.c.b16 %v1394, %v1384
        %v2015 = vpack.c.b16 %v1395, %v1385
        %v2016 = vpack.c.b16 %v1396, %v1386
        %v2017 = vpack.c.b16 %v1407, %v1397
        %v2018 = vpack.c.b16 %v1408, %v1398
        %v2019 = vpack.c.b16 %v1409, %v1399
        %v2020 = vpack.c.b16 %v1410, %v1400
        %v2021 = vpack.c.b16 %v1411, %v1401
        %v2022 = vpack.c.b16 %v1412, %v1402
        %v2023 = vpack.c.b16 %v1413, %v1403
        %v2024 = vpack.c.b16 %v1414, %v1404
        %v2025 = vpack.c.b16 %v1415, %v1405
        %v2026 = vpack.c.b16 %v1416, %v1406
        %v2027 = vpack.c.b16 %v1427, %v1417
        %v2028 = vpack.c.b16 %v1428, %v1418
        %v2029 = vpack.c.b16 %v1429, %v1419
        %v2030 = vpack.c.b16 %v1430, %v1420
        %v2031 = vpack.c.b16 %v1431, %v1421
        %v2032 = vpack.c.b16 %v1432, %v1422
        %v2033 = vpack.c.b16 %v1433, %v1423
        %v2034 = vpack.c.b16 %v1434, %v1424
        %v2035 = vpack.c.b16 %v1435, %v1425
        %v2036 = vpack.c.b16 %v1436, %v1426
        %v2037 = vpack.c.b16 %v1447, %v1437
        %v2038 = vpack.c.b16 %v1448, %v1438
        %v2039 = vpack.c.b16 %v1449, %v1439
        %v2040 = vpack.c.b16 %v1450, %v1440
        %v2041 = vpack.c.b16 %v1451, %v1441
        %v2042 = vpack.c.b16 %v1452, %v1442
        %v2043 = vpack.c.b16 %v1453, %v1443
        %v2044 = vpack.c.b16 %v1454, %v1444
        %v2045 = vpack.c.b16 %v1455, %v1445
        %v2046 = vpack.c.b16 %v1456, %v1446
        %v2047 = vpack.c.b16 %v1467, %v1457
        %v2048 = vpack.c.b16 %v1468, %v1458
        %v2049 = vpack.c.b16 %v1469, %v1459
        %v2050 = vpack.c.b16 %v1470, %v1460
        %v2051 = vpack.c.b16 %v1471, %v1461
        %v2052 = vpack.c.b16 %v1472, %v1462
        %v2053 = vpack.c.b16 %v1473, %v1463
        %v2054 = vpack.c.b16 %v1474, %v1464
        %v2055 = vpack.c.b16 %v1475, %v1465
        %v2056 = vpack.c.b16 %v1476, %v1466
        %v2057 = vpack.c.b16 %v1487, %v1477
        %v2058 = vpack.c.b16 %v1488, %v1478
        %v2059 = vpack.c.b16 %v1489, %v1479
        %v2060 = vpack.c.b16 %v1490, %v1480
        %v2061 = vpack.c.b16 %v1491, %v1481
        %v2062 = vpack.c.b16 %v1492, %v1482
        %v2063 = vpack.c.b16 %v1493, %v1483
        %v2064 = vpack.c.b16 %v1494, %v1484
        %v2065 = vpack.c.b16 %v1495, %v1485
        %v2066 = vpack.c.b16 %v1496, %v1486
        %v2067 = vpack.c.b16 %v1507, %v1497
        %v2068 = vpack.c.b16 %v1508, %v1498
        %v2069 = vpack.c.b16 %v1509, %v1499
        %v2070 = vpack.c.b16 %v1510, %v1500
        %v2071 = vpack.c.b16 %v1511, %v1501
        %v2072 = vpack.c.b16 %v1512, %v1502
        %v2073 = vpack.c.b16 %v1513, %v1503
        %v2074 = vpack.c.b16 %v1514, %v1504
        %v2075 = vpack.c.b16 %v1515, %v1505
        %v2076 = vpack.c.b16 %v1516, %v1506
        %v2077 = vpack.c.b16 %v1527, %v1517
        %v2078 = vpack.c.b16 %v1528, %v1518
        %v2079 = vpack.c.b16 %v1529, %v1519
        %v2080 = vpack.c.b16 %v1530, %v1520
        %v2081 = vpack.c.b16 %v1531, %v1521
        %v2082 = vpack.c.b16 %v1532, %v1522
        %v2083 = vpack.c.b16 %v1533, %v1523
        %v2084 = vpack.c.b16 %v1534, %v1524
        %v2085 = vpack.c.b16 %v1535, %v1525
        %v2086 = vpack.c.b16 %v1536, %v1526
        %v2087 = vpack.c.b16 %v1547, %v1537
        %v2088 = vpack.c.b16 %v1548, %v1538
        %v2089 = vpack.c.b16 %v1549, %v1539
        %v2090 = vpack.c.b16 %v1550, %v1540
        %v2091 = vpack.c.b16 %v1551, %v1541
        %v2092 = vpack.c.b16 %v1552, %v1542
        %v2093 = vpack.c.b16 %v1553, %v1543
        %v2094 = vpack.c.b16 %v1554, %v1544
        %v2095 = vpack.c.b16 %v1555, %v1545
        %v2096 = vpack.c.b16 %v1556, %v1546
        %v2097 = vpack.c.b16 %v1567, %v1557
        %v2098 = vpack.c.b16 %v1568, %v1558
        %v2099 = vpack.c.b16 %v1569, %v1559
        %v2100 = vpack.c.b16 %v1570, %v1560
        %v2101 = vpack.c.b16 %v1571, %v1561
        %v2102 = vpack.c.b16 %v1572, %v1562
        %v2103 = vpack.c.b16 %v1573, %v1563
        %v2104 = vpack.c.b16 %v1574, %v1564
        %v2105 = vpack.c.b16 %v1575, %v1565
        %v2106 = vpack.c.b16 %v1576, %v1566
        %v2107 = vpack.c.b16 %v1587, %v1577
        %v2108 = vpack.c.b16 %v1588, %v1578
        %v2109 = vpack.c.b16 %v1589, %v1579
        %v2110 = vpack.c.b16 %v1590, %v1580
        %v2111 = vpack.c.b16 %v1591, %v1581
        %v2112 = vpack.c.b16 %v1592, %v1582
        %v2113 = vpack.c.b16 %v1593, %v1583
        %v2114 = vpack.c.b16 %v1594, %v1584
        %v2115 = vpack.c.b16 %v1595, %v1585
        %v2116 = vpack.c.b16 %v1596, %v1586
        %v2117 = vpack.c.b16 %v1607, %v1597
        %v2118 = vpack.c.b16 %v1608, %v1598
        %v2119 = vpack.c.b16 %v1609, %v1599
        %v2120 = vpack.c.b16 %v1610, %v1600
        %v2121 = vpack.c.b16 %v1611, %v1601
        %v2122 = vpack.c.b16 %v1612, %v1602
        %v2123 = vpack.c.b16 %v1613, %v1603
        %v2124 = vpack.c.b16 %v1614, %v1604
        %v2125 = vpack.c.b16 %v1615, %v1605
        %v2126 = vpack.c.b16 %v1616, %v1606
        %v2127 = vpack.c.b16 %v1627, %v1617
        %v2128 = vpack.c.b16 %v1628, %v1618
        %v2129 = vpack.c.b16 %v1629, %v1619
        %v2130 = vpack.c.b16 %v1630, %v1620
        %v2131 = vpack.c.b16 %v1631, %v1621
        %v2132 = vpack.c.b16 %v1632, %v1622
        %v2133 = vpack.c.b16 %v1633, %v1623
        %v2134 = vpack.c.b16 %v1634, %v1624
        %v2135 = vpack.c.b16 %v1635, %v1625
        %v2136 = vpack.c.b16 %v1636, %v1626
        %v2137 = vpack.c.b16 %v1647, %v1637
        %v2138 = vpack.c.b16 %v1648, %v1638
        %v2139 = vpack.c.b16 %v1649, %v1639
        %v2140 = vpack.c.b16 %v1650, %v1640
        %v2141 = vpack.c.b16 %v1651, %v1641
        %v2142 = vpack.c.b16 %v1652, %v1642
        %v2143 = vpack.c.b16 %v1653, %v1643
        %v2144 = vpack.c.b16 %v1654, %v1644
        %v2145 = vpack.c.b16 %v1655, %v1645
        %v2146 = vpack.c.b16 %v1656, %v1646
        %v2147 = vpack.c.b16 %v1667, %v1657
        %v2148 = vpack.c.b16 %v1668, %v1658
        %v2149 = vpack.c.b16 %v1669, %v1659
        %v2150 = vpack.c.b16 %v1670, %v1660
        %v2151 = vpack.c.b16 %v1671, %v1661
        %v2152 = vpack.c.b16 %v1672, %v1662
        %v2153 = vpack.c.b16 %v1673, %v1663
        %v2154 = vpack.c.b16 %v1674, %v1664
        %v2155 = vpack.c.b16 %v1675, %v1665
        %v2156 = vpack.c.b16 %v1676, %v1666
        %v2157 = vpack.c.b16 %v1687, %v1677
        %v2158 = vpack.c.b16 %v1688, %v1678
        %v2159 = vpack.c.b16 %v1689, %v1679
        %v2160 = vpack.c.b16 %v1690, %v1680
        %v2161 = vpack.c.b16 %v1691, %v1681
        %v2162 = vpack.c.b16 %v1692, %v1682
        %v2163 = vpack.c.b16 %v1693, %v1683
        %v2164 = vpack.c.b16 %v1694, %v1684
        %v2165 = vpack.c.b16 %v1695, %v1685
        %v2166 = vpack.c.b16 %v1696, %v1686
        %v2167 = vpack.c.b16 %v1707, %v1697
        %v2168 = vpack.c.b16 %v1708, %v1698
        %v2169 = vpack.c.b16 %v1709, %v1699
        %v2170 = vpack.c.b16 %v1710, %v1700
        %v2171 = vpack.c.b16 %v1711, %v1701
        %v2172 = vpack.c.b16 %v1712, %v1702
        %v2173 = vpack.c.b16 %v1713, %v1703
        %v2174 = vpack.c.b16 %v1714, %v1704
        %v2175 = vpack.c.b16 %v1715, %v1705
        %v2176 = vpack.c.b16 %v1716, %v1706
        %v2177 = vpack.c.b16 %v1727, %v1717
        %v2178 = vpack.c.b16 %v1728, %v1718
        %v2179 = vpack.c.b16 %v1729, %v1719
        %v2180 = vpack.c.b16 %v1730, %v1720
        %v2181 = vpack.c.b16 %v1731, %v1721
        %v2182 = vpack.c.b16 %v1732, %v1722
        %v2183 = vpack.c.b16 %v1733, %v1723
        %v2184 = vpack.c.b16 %v1734, %v1724
        %v2185 = vpack.c.b16 %v1735, %v1725
        %v2186 = vpack.c.b16 %v1736, %v1726
        %v2187 = vpack.c.b16 %v1747, %v1737
        %v2188 = vpack.c.b16 %v1748, %v1738
        %v2189 = vpack.c.b16 %v1749, %v1739
        %v2190 = vpack.c.b16 %v1750, %v1740
        %v2191 = vpack.c.b16 %v1751, %v1741
        %v2192 = vpack.c.b16 %v1752, %v1742
        %v2193 = vpack.c.b16 %v1753, %v1743
        %v2194 = vpack.c.b16 %v1754, %v1744
        %v2195 = vpack.c.b16 %v1755, %v1745
        %v2196 = vpack.c.b16 %v1756, %v1746
        %v2197 = vpack.c.b16 %v1767, %v1757
        %v2198 = vpack.c.b16 %v1768, %v1758
        %v2199 = vpack.c.b16 %v1769, %v1759
        %v2200 = vpack.c.b16 %v1770, %v1760
        %v2201 = vpack.c.b16 %v1771, %v1761
        %v2202 = vpack.c.b16 %v1772, %v1762
        %v2203 = vpack.c.b16 %v1773, %v1763
        %v2204 = vpack.c.b16 %v1774, %v1764
        %v2205 = vpack.c.b16 %v1775, %v1765
        %v2206 = vpack.c.b16 %v1776, %v1766
        %v2207 = vpack.c.b16 %v1787, %v1777
        %v2208 = vpack.c.b16 %v1788, %v1778
        %v2209 = vpack.c.b16 %v1789, %v1779
        %v2210 = vpack.c.b16 %v1790, %v1780
        %v2211 = vpack.c.b16 %v1791, %v1781
        %v2212 = vpack.c.b16 %v1792, %v1782
        %v2213 = vpack.c.b16 %v1793, %v1783
        %v2214 = vpack.c.b16 %v1794, %v1784
        %v2215 = vpack.c.b16 %v1795, %v1785
        %v2216 = vpack.c.b16 %v1796, %v1786
        %v2217 = vpack.c.b16 %v1807, %v1797
        %v2218 = vpack.c.b16 %v1808, %v1798
        %v2219 = vpack.c.b16 %v1809, %v1799
        %v2220 = vpack.c.b16 %v1810, %v1800
        %v2221 = vpack.c.b16 %v1811, %v1801
        %v2222 = vpack.c.b16 %v1812, %v1802
        %v2223 = vpack.c.b16 %v1813, %v1803
        %v2224 = vpack.c.b16 %v1814, %v1804
        %v2225 = vpack.c.b16 %v1815, %v1805
        %v2226 = vpack.c.b16 %v1816, %v1806
        %v2227 = vpack.c.b16 %v1827, %v1817
        %v2228 = vpack.c.b16 %v1828, %v1818
        %v2229 = vpack.c.b16 %v1829, %v1819
        %v2230 = vpack.c.b16 %v1830, %v1820
        %v2231 = vpack.c.b16 %v1831, %v1821
        %v2232 = vpack.c.b16 %v1832, %v1822
        %v2233 = vpack.c.b16 %v1833, %v1823
        %v2234 = vpack.c.b16 %v1834, %v1824
        %v2235 = vpack.c.b16 %v1835, %v1825
        %v2236 = vpack.c.b16 %v1836, %v1826
        %v2237 = vpack.c.b16 %v1847, %v1837
        %v2238 = vpack.c.b16 %v1848, %v1838
        %v2239 = vpack.c.b16 %v1849, %v1839
        %v2240 = vpack.c.b16 %v1850, %v1840
        %v2241 = vpack.c.b16 %v1851, %v1841
        %v2242 = vpack.c.b16 %v1852, %v1842
        %v2243 = vpack.c.b16 %v1853, %v1843
        %v2244 = vpack.c.b16 %v1854, %v1844
        %v2245 = vpack.c.b16 %v1855, %v1845
        %v2246 = vpack.c.b16 %v1856, %v1846
        %v2247 = vpack.c.b16 %v1867, %v1857
        %v2248 = vpack.c.b16 %v1868, %v1858
        %v2249 = vpack.c.b16 %v1869, %v1859
        %v2250 = vpack.c.b16 %v1870, %v1860
        %v2251 = vpack.c.b16 %v1871, %v1861
        %v2252 = vpack.c.b16 %v1872, %v1862
        %v2253 = vpack.c.b16 %v1873, %v1863
        %v2254 = vpack.c.b16 %v1874, %v1864
        %v2255 = vpack.c.b16 %v1875, %v1865
        %v2256 = vpack.c.b16 %v1876, %v1866
        %v2257 = vpack.c.b16 %v1887, %v1877
        %v2258 = vpack.c.b16 %v1888, %v1878
        %v2259 = vpack.c.b16 %v1889, %v1879
        %v2260 = vpack.c.b16 %v1890, %v1880
        %v2261 = vpack.c.b16 %v1891, %v1881
        %v2262 = vpack.c.b16 %v1892, %v1882
        %v2263 = vpack.c.b16 %v1893, %v1883
        %v2264 = vpack.c.b16 %v1894, %v1884
        %v2265 = vpack.c.b16 %v1895, %v1885
        %v2266 = vpack.c.b16 %v1896, %v1886
        %v2267 = vpack.c.b16 %v1907, %v1897
        %v2268 = vpack.c.b16 %v1908, %v1898
        %v2269 = vpack.c.b16 %v1909, %v1899
        %v2270 = vpack.c.b16 %v1910, %v1900
        %v2271 = vpack.c.b16 %v1911, %v1901
        %v2272 = vpack.c.b16 %v1912, %v1902
        %v2273 = vpack.c.b16 %v1913, %v1903
        %v2274 = vpack.c.b16 %v1914, %v1904
        %v2275 = vpack.c.b16 %v1915, %v1905
        %v2276 = vpack.c.b16 %v1916, %v1906
        %v2277 = vpack.c.b16 %v1927, %v1917
        %v2278 = vpack.c.b16 %v1928, %v1918
        %v2279 = vpack.c.b16 %v1929, %v1919
        %v2280 = vpack.c.b16 %v1930, %v1920
        %v2281 = vpack.c.b16 %v1931, %v1921
        %v2282 = vpack.c.b16 %v1932, %v1922
        %v2283 = vpack.c.b16 %v1933, %v1923
        %v2284 = vpack.c.b16 %v1934, %v1924
        %v2285 = vpack.c.b16 %v1935, %v1925
        %v2286 = vpack.c.b16 %v1936, %v1926
        %v2287 = vpack.c.b16 %v1947, %v1937
        %v2288 = vpack.c.b16 %v1948, %v1938
        %v2289 = vpack.c.b16 %v1949, %v1939
        %v2290 = vpack.c.b16 %v1950, %v1940
        %v2291 = vpack.c.b16 %v1951, %v1941
        %v2292 = vpack.c.b16 %v1952, %v1942
        %v2293 = vpack.c.b16 %v1953, %v1943
        %v2294 = vpack.c.b16 %v1954, %v1944
        %v2295 = vpack.c.b16 %v1955, %v1945
        %v2296 = vpack.c.b16 %v1956, %v1946
        %v2297 = vpack.c.b16 %v1967, %v1957
        %v2298 = vpack.c.b16 %v1968, %v1958
        %v2299 = vpack.c.b16 %v1969, %v1959
        %v2300 = vpack.c.b16 %v1970, %v1960
        %v2301 = vpack.c.b16 %v1971, %v1961
        %v2302 = vpack.c.b16 %v1972, %v1962
        %v2303 = vpack.c.b16 %v1973, %v1963
        %v2304 = vpack.c.b16 %v1974, %v1964
        %v2305 = vpack.c.b16 %v1975, %v1965
        %v2306 = vpack.c.b16 %v1976, %v1966
        %v2307 = vpack.c.b16 %v1987, %v1977
        %v2308 = vpack.c.b16 %v1988, %v1978
        %v2309 = vpack.c.b16 %v1989, %v1979
        %v2310 = vpack.c.b16 %v1990, %v1980
        %v2311 = vpack.c.b16 %v1991, %v1981
        %v2312 = vpack.c.b16 %v1992, %v1982
        %v2313 = vpack.c.b16 %v1993, %v1983
        %v2314 = vpack.c.b16 %v1994, %v1984
        %v2315 = vpack.c.b16 %v1995, %v1985
        %v2316 = vpack.c.b16 %v1996, %v1986
        %2637 = vmatprep.subr.bf16.mxu0 %v2068
        %2638 = vmatpush1.bf16.msra.mxu0 %v2067
        %2639 = vmatprep.subr.bf16.mxu0 %v2058
        %2640 = vmatpush1.bf16.msra.mxu0 %v2057
        %2641 = vmatprep.subr.bf16.mxu0 %v2048
        %2642 = vmatpush1.bf16.msra.mxu0 %v2047
        %2643 = vmatprep.subr.bf16.mxu0 %v2038
        %2644 = vmatpush1.bf16.msra.mxu0 %v2037
        %2645 = vmatprep.subr.bf16.mxu0 %v2028
        %2646 = vmatpush1.bf16.msra.mxu0 %v2027
        %2647 = vmatprep.subr.bf16.mxu0 %v2018
        %2648 = vmatpush1.bf16.msra.mxu0 %v2017
        %2649 = vmatprep.subr.bf16.mxu0 %v2008
        %2650 = vmatpush1.bf16.msra.mxu0 %v2007
        %2651 = vmatprep.subr.bf16.mxu0 %v1998
        %2652 = vmatpush1.bf16.msra.mxu0 %v1997
        %2653 = vmatprep.subr.bf16.mxu0 %v2148
        %2654 = vmatpush2.bf16.msra.mxu0 %v2147
        %2655 = vmatprep.subr.bf16.mxu0 %v2138
        %2656 = vmatpush2.bf16.msra.mxu0 %v2137
        %2657 = vmatprep.subr.bf16.mxu0 %v2128
        %2658 = vmatpush2.bf16.msra.mxu0 %v2127
        %2659 = vmatprep.subr.bf16.mxu0 %v2118
        %2660 = vmatpush2.bf16.msra.mxu0 %v2117
        %2661 = vmatprep.subr.bf16.mxu0 %v2108
        %2662 = vmatpush2.bf16.msra.mxu0 %v2107
        %2663 = vmatprep.subr.bf16.mxu0 %v2098
        %2664 = vmatpush2.bf16.msra.mxu0 %v2097
        %2665 = vmatprep.subr.bf16.mxu0 %v2088
        %2666 = vmatpush2.bf16.msra.mxu0 %v2087
        %2667 = vmatprep.subr.bf16.mxu0 %v2078
        %2668 = vmatpush2.bf16.msra.mxu0 %v2077
        %2669 = vmatprep.mubr.bf16.mxu0 %v1022
        %2670 = vmatmul.mubr.bf16.gmra.mxu0 %v1021
        %v2671 = vpop.f32.mrf.mxu0
        %v2672 = vadd.f32 0.0, %v2671
        %v2673 = vpop.f32.mrf.mxu0
        %v2674 = vadd.f32 0.0, %v2673
        %v2675 = vpop.f32.mrf.mxu0
        %v2676 = vadd.f32 0.0, %v2675
        %v2677 = vpop.f32.mrf.mxu0
        %v2678 = vadd.f32 0.0, %v2677
        %2679 = vmatprep.mubr.bf16.mxu0 %v1026
        %2680 = vmatmul.mubr.bf16.gmra.mxu0 %v1025
        %v2681 = vpop.f32.mrf.mxu0
        %v2682 = vadd.f32 0.0, %v2681
        %v2683 = vpop.f32.mrf.mxu0
        %v2684 = vadd.f32 0.0, %v2683
        %v2685 = vpop.f32.mrf.mxu0
        %v2686 = vpop.f32.mrf.mxu0
        %2687 = vdwg.mxu0
        %2688 = vmatprep.subr.bf16.mxu0 %v2228
        %2689 = vmatpush1.bf16.msra.mxu0 %v2227
        %2690 = vmatprep.subr.bf16.mxu0 %v2218
        %2691 = vmatpush1.bf16.msra.mxu0 %v2217
        %2692 = vmatprep.subr.bf16.mxu0 %v2208
        %2693 = vmatpush1.bf16.msra.mxu0 %v2207
        %2694 = vmatprep.subr.bf16.mxu0 %v2198
        %2695 = vmatpush1.bf16.msra.mxu0 %v2197
        %2696 = vmatprep.subr.bf16.mxu0 %v2188
        %2697 = vmatpush1.bf16.msra.mxu0 %v2187
        %2698 = vmatprep.subr.bf16.mxu0 %v2178
        %2699 = vmatpush1.bf16.msra.mxu0 %v2177
        %2700 = vmatprep.subr.bf16.mxu0 %v2168
        %2701 = vmatpush1.bf16.msra.mxu0 %v2167
        %2702 = vmatprep.subr.bf16.mxu0 %v2158
        %2703 = vmatpush1.bf16.msra.mxu0 %v2157
        %2704 = vmatprep.subr.bf16.mxu0 %v2308
        %2705 = vmatpush2.bf16.msra.mxu0 %v2307
        %2706 = vmatprep.subr.bf16.mxu0 %v2298
        %2707 = vmatpush2.bf16.msra.mxu0 %v2297
        %2708 = vmatprep.subr.bf16.mxu0 %v2288
        %2709 = vmatpush2.bf16.msra.mxu0 %v2287
        %2710 = vmatprep.subr.bf16.mxu0 %v2278
        %2711 = vmatpush2.bf16.msra.mxu0 %v2277
        %2712 = vmatprep.subr.bf16.mxu0 %v2268
        %2713 = vmatpush2.bf16.msra.mxu0 %v2267
        %2714 = vmatprep.subr.bf16.mxu0 %v2258
        %2715 = vmatpush2.bf16.msra.mxu0 %v2257
        %2716 = vmatprep.subr.bf16.mxu0 %v2248
        %2717 = vmatpush2.bf16.msra.mxu0 %v2247
        %2718 = vmatprep.subr.bf16.mxu0 %v2238
        %2719 = vmatpush2.bf16.msra.mxu0 %v2237
        %2720 = vmatprep.mubr.bf16.mxu0 %v1024
        %2721 = vmatmul.mubr.bf16.gmra.mxu0 %v1023
        %v2722 = vpop.f32.mrf.mxu0
        %v2723 = vadd.f32 %v2672, %v2722
        %v2724 = vpop.f32.mrf.mxu0
        %v2725 = vadd.f32 %v2674, %v2724
        %v2726 = vpop.f32.mrf.mxu0
        %v2727 = vadd.f32 %v2676, %v2726
        %v2728 = vpop.f32.mrf.mxu0
        %v2729 = vadd.f32 %v2678, %v2728
        %2730 = vmatprep.mubr.bf16.mxu0 %v1028
        %2731 = vmatmul.mubr.bf16.gmra.mxu0 %v1027
        %v2732 = vpop.f32.mrf.mxu0
        %v2733 = vadd.f32 %v2682, %v2732
        %v2734 = vpop.f32.mrf.mxu0
        %v2735 = vadd.f32 %v2684, %v2734
        %v2736 = vpop.f32.mrf.mxu0
        %v2737 = vpop.f32.mrf.mxu0
        %2738 = vdwg.mxu0
        %2739 = vmatprep.subr.bf16.mxu0 %v2070
        %2740 = vmatpush1.bf16.msra.mxu0 %v2069
        %2741 = vmatprep.subr.bf16.mxu0 %v2060
        %2742 = vmatpush1.bf16.msra.mxu0 %v2059
        %2743 = vmatprep.subr.bf16.mxu0 %v2050
        %2744 = vmatpush1.bf16.msra.mxu0 %v2049
        %2745 = vmatprep.subr.bf16.mxu0 %v2040
        %2746 = vmatpush1.bf16.msra.mxu0 %v2039
        %2747 = vmatprep.subr.bf16.mxu0 %v2030
        %2748 = vmatpush1.bf16.msra.mxu0 %v2029
        %2749 = vmatprep.subr.bf16.mxu0 %v2020
        %2750 = vmatpush1.bf16.msra.mxu0 %v2019
        %2751 = vmatprep.subr.bf16.mxu0 %v2010
        %2752 = vmatpush1.bf16.msra.mxu0 %v2009
        %2753 = vmatprep.subr.bf16.mxu0 %v2000
        %2754 = vmatpush1.bf16.msra.mxu0 %v1999
        %2755 = vmatprep.subr.bf16.mxu0 %v2150
        %2756 = vmatpush2.bf16.msra.mxu0 %v2149
        %2757 = vmatprep.subr.bf16.mxu0 %v2140
        %2758 = vmatpush2.bf16.msra.mxu0 %v2139
        %2759 = vmatprep.subr.bf16.mxu0 %v2130
        %2760 = vmatpush2.bf16.msra.mxu0 %v2129
        %2761 = vmatprep.subr.bf16.mxu0 %v2120
        %2762 = vmatpush2.bf16.msra.mxu0 %v2119
        %2763 = vmatprep.subr.bf16.mxu0 %v2110
        %2764 = vmatpush2.bf16.msra.mxu0 %v2109
        %2765 = vmatprep.subr.bf16.mxu0 %v2100
        %2766 = vmatpush2.bf16.msra.mxu0 %v2099
        %2767 = vmatprep.subr.bf16.mxu0 %v2090
        %2768 = vmatpush2.bf16.msra.mxu0 %v2089
        %2769 = vmatprep.subr.bf16.mxu0 %v2080
        %2770 = vmatpush2.bf16.msra.mxu0 %v2079
        %2771 = vmatprep.mubr.bf16.mxu0 %v1022
        %2772 = vmatmul.mubr.bf16.gmra.mxu0 %v1021
        %v2773 = vpop.f32.mrf.mxu0
        %v2774 = vadd.f32 0.0, %v2773
        %v2775 = vpop.f32.mrf.mxu0
        %v2776 = vadd.f32 0.0, %v2775
        %v2777 = vpop.f32.mrf.mxu0
        %v2778 = vadd.f32 0.0, %v2777
        %v2779 = vpop.f32.mrf.mxu0
        %v2780 = vadd.f32 0.0, %v2779
        %2781 = vmatprep.mubr.bf16.mxu0 %v1026
        %2782 = vmatmul.mubr.bf16.gmra.mxu0 %v1025
        %v2783 = vpop.f32.mrf.mxu0
        %v2784 = vadd.f32 0.0, %v2783
        %v2785 = vpop.f32.mrf.mxu0
        %v2786 = vadd.f32 0.0, %v2785
        %v2787 = vpop.f32.mrf.mxu0
        %v2788 = vpop.f32.mrf.mxu0
        %2789 = vdwg.mxu0
        %2790 = vmatprep.subr.bf16.mxu0 %v2230
        %2791 = vmatpush1.bf16.msra.mxu0 %v2229
        %2792 = vmatprep.subr.bf16.mxu0 %v2220
        %2793 = vmatpush1.bf16.msra.mxu0 %v2219
        %2794 = vmatprep.subr.bf16.mxu0 %v2210
        %2795 = vmatpush1.bf16.msra.mxu0 %v2209
        %2796 = vmatprep.subr.bf16.mxu0 %v2200
        %2797 = vmatpush1.bf16.msra.mxu0 %v2199
        %2798 = vmatprep.subr.bf16.mxu0 %v2190
        %2799 = vmatpush1.bf16.msra.mxu0 %v2189
        %2800 = vmatprep.subr.bf16.mxu0 %v2180
        %2801 = vmatpush1.bf16.msra.mxu0 %v2179
        %2802 = vmatprep.subr.bf16.mxu0 %v2170
        %2803 = vmatpush1.bf16.msra.mxu0 %v2169
        %2804 = vmatprep.subr.bf16.mxu0 %v2160
        %2805 = vmatpush1.bf16.msra.mxu0 %v2159
        %2806 = vmatprep.subr.bf16.mxu0 %v2310
        %2807 = vmatpush2.bf16.msra.mxu0 %v2309
        %2808 = vmatprep.subr.bf16.mxu0 %v2300
        %2809 = vmatpush2.bf16.msra.mxu0 %v2299
        %2810 = vmatprep.subr.bf16.mxu0 %v2290
        %2811 = vmatpush2.bf16.msra.mxu0 %v2289
        %2812 = vmatprep.subr.bf16.mxu0 %v2280
        %2813 = vmatpush2.bf16.msra.mxu0 %v2279
        %2814 = vmatprep.subr.bf16.mxu0 %v2270
        %2815 = vmatpush2.bf16.msra.mxu0 %v2269
        %2816 = vmatprep.subr.bf16.mxu0 %v2260
        %2817 = vmatpush2.bf16.msra.mxu0 %v2259
        %2818 = vmatprep.subr.bf16.mxu0 %v2250
        %2819 = vmatpush2.bf16.msra.mxu0 %v2249
        %2820 = vmatprep.subr.bf16.mxu0 %v2240
        %2821 = vmatpush2.bf16.msra.mxu0 %v2239
        %2822 = vmatprep.mubr.bf16.mxu0 %v1024
        %2823 = vmatmul.mubr.bf16.gmra.mxu0 %v1023
        %v2824 = vpop.f32.mrf.mxu0
        %v2825 = vadd.f32 %v2774, %v2824
        %v2826 = vpop.f32.mrf.mxu0
        %v2827 = vadd.f32 %v2776, %v2826
        %v2828 = vpop.f32.mrf.mxu0
        %v2829 = vadd.f32 %v2778, %v2828
        %v2830 = vpop.f32.mrf.mxu0
        %v2831 = vadd.f32 %v2780, %v2830
        %2832 = vmatprep.mubr.bf16.mxu0 %v1028
        %2833 = vmatmul.mubr.bf16.gmra.mxu0 %v1027
        %v2834 = vpop.f32.mrf.mxu0
        %v2835 = vadd.f32 %v2784, %v2834
        %v2836 = vpop.f32.mrf.mxu0
        %v2837 = vadd.f32 %v2786, %v2836
        %v2838 = vpop.f32.mrf.mxu0
        %v2839 = vpop.f32.mrf.mxu0
        %2840 = vdwg.mxu0
        %2841 = vmatprep.subr.bf16.mxu0 %v2072
        %2842 = vmatpush1.bf16.msra.mxu0 %v2071
        %2843 = vmatprep.subr.bf16.mxu0 %v2062
        %2844 = vmatpush1.bf16.msra.mxu0 %v2061
        %2845 = vmatprep.subr.bf16.mxu0 %v2052
        %2846 = vmatpush1.bf16.msra.mxu0 %v2051
        %2847 = vmatprep.subr.bf16.mxu0 %v2042
        %2848 = vmatpush1.bf16.msra.mxu0 %v2041
        %2849 = vmatprep.subr.bf16.mxu0 %v2032
        %2850 = vmatpush1.bf16.msra.mxu0 %v2031
        %2851 = vmatprep.subr.bf16.mxu0 %v2022
        %2852 = vmatpush1.bf16.msra.mxu0 %v2021
        %2853 = vmatprep.subr.bf16.mxu0 %v2012
        %2854 = vmatpush1.bf16.msra.mxu0 %v2011
        %2855 = vmatprep.subr.bf16.mxu0 %v2002
        %2856 = vmatpush1.bf16.msra.mxu0 %v2001
        %2857 = vmatprep.subr.bf16.mxu0 %v2152
        %2858 = vmatpush2.bf16.msra.mxu0 %v2151
        %2859 = vmatprep.subr.bf16.mxu0 %v2142
        %2860 = vmatpush2.bf16.msra.mxu0 %v2141
        %2861 = vmatprep.subr.bf16.mxu0 %v2132
        %2862 = vmatpush2.bf16.msra.mxu0 %v2131
        %2863 = vmatprep.subr.bf16.mxu0 %v2122
        %2864 = vmatpush2.bf16.msra.mxu0 %v2121
        %2865 = vmatprep.subr.bf16.mxu0 %v2112
        %2866 = vmatpush2.bf16.msra.mxu0 %v2111
        %2867 = vmatprep.subr.bf16.mxu0 %v2102
        %2868 = vmatpush2.bf16.msra.mxu0 %v2101
        %2869 = vmatprep.subr.bf16.mxu0 %v2092
        %2870 = vmatpush2.bf16.msra.mxu0 %v2091
        %2871 = vmatprep.subr.bf16.mxu0 %v2082
        %2872 = vmatpush2.bf16.msra.mxu0 %v2081
        %2873 = vmatprep.mubr.bf16.mxu0 %v1022
        %2874 = vmatmul.mubr.bf16.gmra.mxu0 %v1021
        %v2875 = vpop.f32.mrf.mxu0
        %v2876 = vadd.f32 0.0, %v2875
        %v2877 = vpop.f32.mrf.mxu0
        %v2878 = vadd.f32 0.0, %v2877
        %v2879 = vpop.f32.mrf.mxu0
        %v2880 = vadd.f32 0.0, %v2879
        %v2881 = vpop.f32.mrf.mxu0
        %v2882 = vadd.f32 0.0, %v2881
        %2883 = vmatprep.mubr.bf16.mxu0 %v1026
        %2884 = vmatmul.mubr.bf16.gmra.mxu0 %v1025
        %v2885 = vpop.f32.mrf.mxu0
        %v2886 = vadd.f32 0.0, %v2885
        %v2887 = vpop.f32.mrf.mxu0
        %v2888 = vadd.f32 0.0, %v2887
        %v2889 = vpop.f32.mrf.mxu0
        %v2890 = vpop.f32.mrf.mxu0
        %2891 = vdwg.mxu0
        %2892 = vmatprep.subr.bf16.mxu0 %v2232
        %2893 = vmatpush1.bf16.msra.mxu0 %v2231
        %2894 = vmatprep.subr.bf16.mxu0 %v2222
        %2895 = vmatpush1.bf16.msra.mxu0 %v2221
        %2896 = vmatprep.subr.bf16.mxu0 %v2212
        %2897 = vmatpush1.bf16.msra.mxu0 %v2211
        %2898 = vmatprep.subr.bf16.mxu0 %v2202
        %2899 = vmatpush1.bf16.msra.mxu0 %v2201
        %2900 = vmatprep.subr.bf16.mxu0 %v2192
        %2901 = vmatpush1.bf16.msra.mxu0 %v2191
        %2902 = vmatprep.subr.bf16.mxu0 %v2182
        %2903 = vmatpush1.bf16.msra.mxu0 %v2181
        %2904 = vmatprep.subr.bf16.mxu0 %v2172
        %2905 = vmatpush1.bf16.msra.mxu0 %v2171
        %2906 = vmatprep.subr.bf16.mxu0 %v2162
        %2907 = vmatpush1.bf16.msra.mxu0 %v2161
        %2908 = vmatprep.subr.bf16.mxu0 %v2312
        %2909 = vmatpush2.bf16.msra.mxu0 %v2311
        %2910 = vmatprep.subr.bf16.mxu0 %v2302
        %2911 = vmatpush2.bf16.msra.mxu0 %v2301
        %2912 = vmatprep.subr.bf16.mxu0 %v2292
        %2913 = vmatpush2.bf16.msra.mxu0 %v2291
        %2914 = vmatprep.subr.bf16.mxu0 %v2282
        %2915 = vmatpush2.bf16.msra.mxu0 %v2281
        %2916 = vmatprep.subr.bf16.mxu0 %v2272
        %2917 = vmatpush2.bf16.msra.mxu0 %v2271
        %2918 = vmatprep.subr.bf16.mxu0 %v2262
        %2919 = vmatpush2.bf16.msra.mxu0 %v2261
        %2920 = vmatprep.subr.bf16.mxu0 %v2252
        %2921 = vmatpush2.bf16.msra.mxu0 %v2251
        %2922 = vmatprep.subr.bf16.mxu0 %v2242
        %2923 = vmatpush2.bf16.msra.mxu0 %v2241
        %2924 = vmatprep.mubr.bf16.mxu0 %v1024
        %2925 = vmatmul.mubr.bf16.gmra.mxu0 %v1023
        %v2926 = vpop.f32.mrf.mxu0
        %v2927 = vadd.f32 %v2876, %v2926
        %v2928 = vpop.f32.mrf.mxu0
        %v2929 = vadd.f32 %v2878, %v2928
        %v2930 = vpop.f32.mrf.mxu0
        %v2931 = vadd.f32 %v2880, %v2930
        %v2932 = vpop.f32.mrf.mxu0
        %v2933 = vadd.f32 %v2882, %v2932
        %2934 = vmatprep.mubr.bf16.mxu0 %v1028
        %2935 = vmatmul.mubr.bf16.gmra.mxu0 %v1027
        %v2936 = vpop.f32.mrf.mxu0
        %v2937 = vadd.f32 %v2886, %v2936
        %v2938 = vpop.f32.mrf.mxu0
        %v2939 = vadd.f32 %v2888, %v2938
        %v2940 = vpop.f32.mrf.mxu0
        %v2941 = vpop.f32.mrf.mxu0
        %2942 = vdwg.mxu0
        %2943 = vmatprep.subr.bf16.mxu0 %v2074
        %2944 = vmatpush1.bf16.msra.mxu0 %v2073
        %2945 = vmatprep.subr.bf16.mxu0 %v2064
        %2946 = vmatpush1.bf16.msra.mxu0 %v2063
        %2947 = vmatprep.subr.bf16.mxu0 %v2054
        %2948 = vmatpush1.bf16.msra.mxu0 %v2053
        %2949 = vmatprep.subr.bf16.mxu0 %v2044
        %2950 = vmatpush1.bf16.msra.mxu0 %v2043
        %2951 = vmatprep.subr.bf16.mxu0 %v2034
        %2952 = vmatpush1.bf16.msra.mxu0 %v2033
        %2953 = vmatprep.subr.bf16.mxu0 %v2024
        %2954 = vmatpush1.bf16.msra.mxu0 %v2023
        %2955 = vmatprep.subr.bf16.mxu0 %v2014
        %2956 = vmatpush1.bf16.msra.mxu0 %v2013
        %2957 = vmatprep.subr.bf16.mxu0 %v2004
        %2958 = vmatpush1.bf16.msra.mxu0 %v2003
        %2959 = vmatprep.subr.bf16.mxu0 %v2154
        %2960 = vmatpush2.bf16.msra.mxu0 %v2153
        %2961 = vmatprep.subr.bf16.mxu0 %v2144
        %2962 = vmatpush2.bf16.msra.mxu0 %v2143
        %2963 = vmatprep.subr.bf16.mxu0 %v2134
        %2964 = vmatpush2.bf16.msra.mxu0 %v2133
        %2965 = vmatprep.subr.bf16.mxu0 %v2124
        %2966 = vmatpush2.bf16.msra.mxu0 %v2123
        %2967 = vmatprep.subr.bf16.mxu0 %v2114
        %2968 = vmatpush2.bf16.msra.mxu0 %v2113
        %2969 = vmatprep.subr.bf16.mxu0 %v2104
        %2970 = vmatpush2.bf16.msra.mxu0 %v2103
        %2971 = vmatprep.subr.bf16.mxu0 %v2094
        %2972 = vmatpush2.bf16.msra.mxu0 %v2093
        %2973 = vmatprep.subr.bf16.mxu0 %v2084
        %2974 = vmatpush2.bf16.msra.mxu0 %v2083
        %2975 = vmatprep.mubr.bf16.mxu0 %v1022
        %2976 = vmatmul.mubr.bf16.gmra.mxu0 %v1021
        %v2977 = vpop.f32.mrf.mxu0
        %v2978 = vadd.f32 0.0, %v2977
        %v2979 = vpop.f32.mrf.mxu0
        %v2980 = vadd.f32 0.0, %v2979
        %v2981 = vpop.f32.mrf.mxu0
        %v2982 = vadd.f32 0.0, %v2981
        %v2983 = vpop.f32.mrf.mxu0
        %v2984 = vadd.f32 0.0, %v2983
        %2985 = vmatprep.mubr.bf16.mxu0 %v1026
        %2986 = vmatmul.mubr.bf16.gmra.mxu0 %v1025
        %v2987 = vpop.f32.mrf.mxu0
        %v2988 = vadd.f32 0.0, %v2987
        %v2989 = vpop.f32.mrf.mxu0
        %v2990 = vadd.f32 0.0, %v2989
        %v2991 = vpop.f32.mrf.mxu0
        %v2992 = vpop.f32.mrf.mxu0
        %2993 = vdwg.mxu0
        %2994 = vmatprep.subr.bf16.mxu0 %v2234
        %2995 = vmatpush1.bf16.msra.mxu0 %v2233
        %2996 = vmatprep.subr.bf16.mxu0 %v2224
        %2997 = vmatpush1.bf16.msra.mxu0 %v2223
        %2998 = vmatprep.subr.bf16.mxu0 %v2214
        %2999 = vmatpush1.bf16.msra.mxu0 %v2213
        %3000 = vmatprep.subr.bf16.mxu0 %v2204
        %3001 = vmatpush1.bf16.msra.mxu0 %v2203
        %3002 = vmatprep.subr.bf16.mxu0 %v2194
        %3003 = vmatpush1.bf16.msra.mxu0 %v2193
        %3004 = vmatprep.subr.bf16.mxu0 %v2184
        %3005 = vmatpush1.bf16.msra.mxu0 %v2183
        %3006 = vmatprep.subr.bf16.mxu0 %v2174
        %3007 = vmatpush1.bf16.msra.mxu0 %v2173
        %3008 = vmatprep.subr.bf16.mxu0 %v2164
        %3009 = vmatpush1.bf16.msra.mxu0 %v2163
        %3010 = vmatprep.subr.bf16.mxu0 %v2314
        %3011 = vmatpush2.bf16.msra.mxu0 %v2313
        %3012 = vmatprep.subr.bf16.mxu0 %v2304
        %3013 = vmatpush2.bf16.msra.mxu0 %v2303
        %3014 = vmatprep.subr.bf16.mxu0 %v2294
        %3015 = vmatpush2.bf16.msra.mxu0 %v2293
        %3016 = vmatprep.subr.bf16.mxu0 %v2284
        %3017 = vmatpush2.bf16.msra.mxu0 %v2283
        %3018 = vmatprep.subr.bf16.mxu0 %v2274
        %3019 = vmatpush2.bf16.msra.mxu0 %v2273
        %3020 = vmatprep.subr.bf16.mxu0 %v2264
        %3021 = vmatpush2.bf16.msra.mxu0 %v2263
        %3022 = vmatprep.subr.bf16.mxu0 %v2254
        %3023 = vmatpush2.bf16.msra.mxu0 %v2253
        %3024 = vmatprep.subr.bf16.mxu0 %v2244
        %3025 = vmatpush2.bf16.msra.mxu0 %v2243
        %3026 = vmatprep.mubr.bf16.mxu0 %v1024
        %3027 = vmatmul.mubr.bf16.gmra.mxu0 %v1023
        %v3028 = vpop.f32.mrf.mxu0
        %v3029 = vadd.f32 %v2978, %v3028
        %v3030 = vpop.f32.mrf.mxu0
        %v3031 = vadd.f32 %v2980, %v3030
        %v3032 = vpop.f32.mrf.mxu0
        %v3033 = vadd.f32 %v2982, %v3032
        %v3034 = vpop.f32.mrf.mxu0
        %v3035 = vadd.f32 %v2984, %v3034
        %3036 = vmatprep.mubr.bf16.mxu0 %v1028
        %3037 = vmatmul.mubr.bf16.gmra.mxu0 %v1027
        %v3038 = vpop.f32.mrf.mxu0
        %v3039 = vadd.f32 %v2988, %v3038
        %v3040 = vpop.f32.mrf.mxu0
        %v3041 = vadd.f32 %v2990, %v3040
        %v3042 = vpop.f32.mrf.mxu0
        %v3043 = vpop.f32.mrf.mxu0
        %3044 = vdwg.mxu0
        %3045 = vmatprep.subr.bf16.mxu0 %v2076
        %3046 = vmatpush1.bf16.msra.mxu0 %v2075
        %3047 = vmatprep.subr.bf16.mxu0 %v2066
        %3048 = vmatpush1.bf16.msra.mxu0 %v2065
        %3049 = vmatprep.subr.bf16.mxu0 %v2056
        %3050 = vmatpush1.bf16.msra.mxu0 %v2055
        %3051 = vmatprep.subr.bf16.mxu0 %v2046
        %3052 = vmatpush1.bf16.msra.mxu0 %v2045
        %3053 = vmatprep.subr.bf16.mxu0 %v2036
        %3054 = vmatpush1.bf16.msra.mxu0 %v2035
        %3055 = vmatprep.subr.bf16.mxu0 %v2026
        %3056 = vmatpush1.bf16.msra.mxu0 %v2025
        %3057 = vmatprep.subr.bf16.mxu0 %v2016
        %3058 = vmatpush1.bf16.msra.mxu0 %v2015
        %3059 = vmatprep.subr.bf16.mxu0 %v2006
        %3060 = vmatpush1.bf16.msra.mxu0 %v2005
        %3061 = vmatprep.subr.bf16.mxu0 %v2156
        %3062 = vmatpush2.bf16.msra.mxu0 %v2155
        %3063 = vmatprep.subr.bf16.mxu0 %v2146
        %3064 = vmatpush2.bf16.msra.mxu0 %v2145
        %3065 = vmatprep.subr.bf16.mxu0 %v2136
        %3066 = vmatpush2.bf16.msra.mxu0 %v2135
        %3067 = vmatprep.subr.bf16.mxu0 %v2126
        %3068 = vmatpush2.bf16.msra.mxu0 %v2125
        %3069 = vmatprep.subr.bf16.mxu0 %v2116
        %3070 = vmatpush2.bf16.msra.mxu0 %v2115
        %3071 = vmatprep.subr.bf16.mxu0 %v2106
        %3072 = vmatpush2.bf16.msra.mxu0 %v2105
        %3073 = vmatprep.subr.bf16.mxu0 %v2096
        %3074 = vmatpush2.bf16.msra.mxu0 %v2095
        %3075 = vmatprep.subr.bf16.mxu0 %v2086
        %3076 = vmatpush2.bf16.msra.mxu0 %v2085
        %3077 = vmatprep.mubr.bf16.mxu0 %v1022
        %3078 = vmatmul.mubr.bf16.gmra.mxu0 %v1021
        %v3079 = vpop.f32.mrf.mxu0
        %v3080 = vadd.f32 0.0, %v3079
        %v3081 = vpop.f32.mrf.mxu0
        %v3082 = vadd.f32 0.0, %v3081
        %v3083 = vpop.f32.mrf.mxu0
        %v3084 = vadd.f32 0.0, %v3083
        %v3085 = vpop.f32.mrf.mxu0
        %v3086 = vadd.f32 0.0, %v3085
        %3087 = vmatprep.mubr.bf16.mxu0 %v1026
        %3088 = vmatmul.mubr.bf16.gmra.mxu0 %v1025
        %v3089 = vpop.f32.mrf.mxu0
        %v3090 = vadd.f32 0.0, %v3089
        %v3091 = vpop.f32.mrf.mxu0
        %v3092 = vadd.f32 0.0, %v3091
        %v3093 = vpop.f32.mrf.mxu0
        %v3094 = vpop.f32.mrf.mxu0
        %3095 = vdwg.mxu0
        %3096 = vmatprep.subr.bf16.mxu0 %v2236
        %3097 = vmatpush1.bf16.msra.mxu0 %v2235
        %3098 = vmatprep.subr.bf16.mxu0 %v2226
        %3099 = vmatpush1.bf16.msra.mxu0 %v2225
        %3100 = vmatprep.subr.bf16.mxu0 %v2216
        %3101 = vmatpush1.bf16.msra.mxu0 %v2215
        %3102 = vmatprep.subr.bf16.mxu0 %v2206
        %3103 = vmatpush1.bf16.msra.mxu0 %v2205
        %3104 = vmatprep.subr.bf16.mxu0 %v2196
        %3105 = vmatpush1.bf16.msra.mxu0 %v2195
        %3106 = vmatprep.subr.bf16.mxu0 %v2186
        %3107 = vmatpush1.bf16.msra.mxu0 %v2185
        %3108 = vmatprep.subr.bf16.mxu0 %v2176
        %3109 = vmatpush1.bf16.msra.mxu0 %v2175
        %3110 = vmatprep.subr.bf16.mxu0 %v2166
        %3111 = vmatpush1.bf16.msra.mxu0 %v2165
        %3112 = vmatprep.subr.bf16.mxu0 %v2316
        %3113 = vmatpush2.bf16.msra.mxu0 %v2315
        %3114 = vmatprep.subr.bf16.mxu0 %v2306
        %3115 = vmatpush2.bf16.msra.mxu0 %v2305
        %3116 = vmatprep.subr.bf16.mxu0 %v2296
        %3117 = vmatpush2.bf16.msra.mxu0 %v2295
        %3118 = vmatprep.subr.bf16.mxu0 %v2286
        %3119 = vmatpush2.bf16.msra.mxu0 %v2285
        %3120 = vmatprep.subr.bf16.mxu0 %v2276
        %3121 = vmatpush2.bf16.msra.mxu0 %v2275
        %3122 = vmatprep.subr.bf16.mxu0 %v2266
        %3123 = vmatpush2.bf16.msra.mxu0 %v2265
        %3124 = vmatprep.subr.bf16.mxu0 %v2256
        %3125 = vmatpush2.bf16.msra.mxu0 %v2255
        %3126 = vmatprep.subr.bf16.mxu0 %v2246
        %3127 = vmatpush2.bf16.msra.mxu0 %v2245
        %3128 = vmatprep.mubr.bf16.mxu0 %v1024
        %3129 = vmatmul.mubr.bf16.gmra.mxu0 %v1023
        %v3130 = vpop.f32.mrf.mxu0
        %v3131 = vadd.f32 %v3080, %v3130
        %v3132 = vpop.f32.mrf.mxu0
        %v3133 = vadd.f32 %v3082, %v3132
        %v3134 = vpop.f32.mrf.mxu0
        %v3135 = vadd.f32 %v3084, %v3134
        %v3136 = vpop.f32.mrf.mxu0
        %v3137 = vadd.f32 %v3086, %v3136
        %3138 = vmatprep.mubr.bf16.mxu0 %v1028
        %3139 = vmatmul.mubr.bf16.gmra.mxu0 %v1027
        %v3140 = vpop.f32.mrf.mxu0
        %v3141 = vadd.f32 %v3090, %v3140
        %v3142 = vpop.f32.mrf.mxu0
        %v3143 = vadd.f32 %v3092, %v3142
        %v3144 = vpop.f32.mrf.mxu0
        %v3145 = vpop.f32.mrf.mxu0
        %3146 = vdwg.mxu0
        %v3153 = vunpack.c.l.b16 %v351
        %v3154 = vunpack.c.h.b16 %v351
        %v3155 = vunpack.c.l.b16 %v352
        %v3156 = vunpack.c.h.b16 %v352
        %v3157 = vunpack.c.l.b16 %v353
        %v3158 = vunpack.c.h.b16 %v353
        %v3159 = vunpack.c.l.b16 %v354
        %v3160 = vunpack.c.h.b16 %v354
        %v3161 = vunpack.c.l.b16 %v355
        %v3162 = vunpack.c.h.b16 %v355
        %v3163 = vunpack.c.l.b16 %v356
        %v3164 = vunpack.c.h.b16 %v356
        %v3165 = vpack.c.b16 %v3157, %v3153
        %v3166 = vpack.c.b16 %v3158, %v3154
        %v3167 = vpack.c.b16 %v3159, %v3155
        %v3168 = vpack.c.b16 %v3160, %v3156
        %v3169 = vpack.c.b16 %v3161, %v3161
        %v3170 = vpack.c.b16 %v3162, %v3162
        %v3171 = vpack.c.b16 %v3163, %v3163
        %v3172 = vpack.c.b16 %v3164, %v3164
        %v3501 = vunpack.c.l.b16 %v357
        %v3502 = vunpack.c.h.b16 %v357
        %v3503 = vunpack.c.l.b16 %v358
        %v3504 = vunpack.c.h.b16 %v358
        %v3505 = vunpack.c.l.b16 %v359
        %v3506 = vunpack.c.h.b16 %v359
        %v3507 = vunpack.c.l.b16 %v360
        %v3508 = vunpack.c.h.b16 %v360
        %v3509 = vunpack.c.l.b16 %v361
        %v3510 = vunpack.c.h.b16 %v361
        %v3511 = vunpack.c.l.b16 %v362
        %v3512 = vunpack.c.h.b16 %v362
        %v3513 = vunpack.c.l.b16 %v363
        %v3514 = vunpack.c.h.b16 %v363
        %v3515 = vunpack.c.l.b16 %v364
        %v3516 = vunpack.c.h.b16 %v364
        %v3517 = vunpack.c.l.b16 %v365
        %v3518 = vunpack.c.h.b16 %v365
        %v3519 = vunpack.c.l.b16 %v366
        %v3520 = vunpack.c.h.b16 %v366
        %v3521 = vunpack.c.l.b16 %v367
        %v3522 = vunpack.c.h.b16 %v367
        %v3523 = vunpack.c.l.b16 %v368
        %v3524 = vunpack.c.h.b16 %v368
        %v3525 = vunpack.c.l.b16 %v369
        %v3526 = vunpack.c.h.b16 %v369
        %v3527 = vunpack.c.l.b16 %v370
        %v3528 = vunpack.c.h.b16 %v370
        %v3529 = vunpack.c.l.b16 %v371
        %v3530 = vunpack.c.h.b16 %v371
        %v3531 = vunpack.c.l.b16 %v372
        %v3532 = vunpack.c.h.b16 %v372
        %v3533 = vunpack.c.l.b16 %v373
        %v3534 = vunpack.c.h.b16 %v373
        %v3535 = vunpack.c.l.b16 %v374
        %v3536 = vunpack.c.h.b16 %v374
        %v3537 = vunpack.c.l.b16 %v375
        %v3538 = vunpack.c.h.b16 %v375
        %v3539 = vunpack.c.l.b16 %v376
        %v3540 = vunpack.c.h.b16 %v376
        %v3541 = vunpack.c.l.b16 %v377
        %v3542 = vunpack.c.h.b16 %v377
        %v3543 = vunpack.c.l.b16 %v378
        %v3544 = vunpack.c.h.b16 %v378
        %v3545 = vunpack.c.l.b16 %v379
        %v3546 = vunpack.c.h.b16 %v379
        %v3547 = vunpack.c.l.b16 %v380
        %v3548 = vunpack.c.h.b16 %v380
        %v3549 = vunpack.c.l.b16 %v381
        %v3550 = vunpack.c.h.b16 %v381
        %v3551 = vunpack.c.l.b16 %v382
        %v3552 = vunpack.c.h.b16 %v382
        %v3553 = vunpack.c.l.b16 %v383
        %v3554 = vunpack.c.h.b16 %v383
        %v3555 = vunpack.c.l.b16 %v384
        %v3556 = vunpack.c.h.b16 %v384
        %v3557 = vunpack.c.l.b16 %v385
        %v3558 = vunpack.c.h.b16 %v385
        %v3559 = vunpack.c.l.b16 %v386
        %v3560 = vunpack.c.h.b16 %v386
        %v3561 = vunpack.c.l.b16 %v387
        %v3562 = vunpack.c.h.b16 %v387
        %v3563 = vunpack.c.l.b16 %v388
        %v3564 = vunpack.c.h.b16 %v388
        %v3565 = vunpack.c.l.b16 %v389
        %v3566 = vunpack.c.h.b16 %v389
        %v3567 = vunpack.c.l.b16 %v390
        %v3568 = vunpack.c.h.b16 %v390
        %v3569 = vunpack.c.l.b16 %v391
        %v3570 = vunpack.c.h.b16 %v391
        %v3571 = vunpack.c.l.b16 %v392
        %v3572 = vunpack.c.h.b16 %v392
        %v3573 = vunpack.c.l.b16 %v393
        %v3574 = vunpack.c.h.b16 %v393
        %v3575 = vunpack.c.l.b16 %v394
        %v3576 = vunpack.c.h.b16 %v394
        %v3577 = vunpack.c.l.b16 %v395
        %v3578 = vunpack.c.h.b16 %v395
        %v3579 = vunpack.c.l.b16 %v396
        %v3580 = vunpack.c.h.b16 %v396
        %v3581 = vunpack.c.l.b16 %v397
        %v3582 = vunpack.c.h.b16 %v397
        %v3583 = vunpack.c.l.b16 %v398
        %v3584 = vunpack.c.h.b16 %v398
        %v3585 = vunpack.c.l.b16 %v399
        %v3586 = vunpack.c.h.b16 %v399
        %v3587 = vunpack.c.l.b16 %v400
        %v3588 = vunpack.c.h.b16 %v400
        %v3589 = vunpack.c.l.b16 %v401
        %v3590 = vunpack.c.h.b16 %v401
        %v3591 = vunpack.c.l.b16 %v402
        %v3592 = vunpack.c.h.b16 %v402
        %v3593 = vunpack.c.l.b16 %v403
        %v3594 = vunpack.c.h.b16 %v403
        %v3595 = vunpack.c.l.b16 %v404
        %v3596 = vunpack.c.h.b16 %v404
        %v3597 = vunpack.c.l.b16 %v405
        %v3598 = vunpack.c.h.b16 %v405
        %v3599 = vunpack.c.l.b16 %v406
        %v3600 = vunpack.c.h.b16 %v406
        %v3601 = vunpack.c.l.b16 %v407
        %v3602 = vunpack.c.h.b16 %v407
        %v3603 = vunpack.c.l.b16 %v408
        %v3604 = vunpack.c.h.b16 %v408
        %v3605 = vunpack.c.l.b16 %v409
        %v3606 = vunpack.c.h.b16 %v409
        %v3607 = vunpack.c.l.b16 %v410
        %v3608 = vunpack.c.h.b16 %v410
        %v3609 = vunpack.c.l.b16 %v411
        %v3610 = vunpack.c.h.b16 %v411
        %v3611 = vunpack.c.l.b16 %v412
        %v3612 = vunpack.c.h.b16 %v412
        %v3613 = vunpack.c.l.b16 %v413
        %v3614 = vunpack.c.h.b16 %v413
        %v3615 = vunpack.c.l.b16 %v414
        %v3616 = vunpack.c.h.b16 %v414
        %v3617 = vunpack.c.l.b16 %v415
        %v3618 = vunpack.c.h.b16 %v415
        %v3619 = vunpack.c.l.b16 %v416
        %v3620 = vunpack.c.h.b16 %v416
        %v3621 = vunpack.c.l.b16 %v417
        %v3622 = vunpack.c.h.b16 %v417
        %v3623 = vunpack.c.l.b16 %v418
        %v3624 = vunpack.c.h.b16 %v418
        %v3625 = vunpack.c.l.b16 %v419
        %v3626 = vunpack.c.h.b16 %v419
        %v3627 = vunpack.c.l.b16 %v420
        %v3628 = vunpack.c.h.b16 %v420
        %v3629 = vunpack.c.l.b16 %v421
        %v3630 = vunpack.c.h.b16 %v421
        %v3631 = vunpack.c.l.b16 %v422
        %v3632 = vunpack.c.h.b16 %v422
        %v3633 = vunpack.c.l.b16 %v423
        %v3634 = vunpack.c.h.b16 %v423
        %v3635 = vunpack.c.l.b16 %v424
        %v3636 = vunpack.c.h.b16 %v424
        %v3637 = vunpack.c.l.b16 %v425
        %v3638 = vunpack.c.h.b16 %v425
        %v3639 = vunpack.c.l.b16 %v426
        %v3640 = vunpack.c.h.b16 %v426
        %v3641 = vunpack.c.l.b16 %v427
        %v3642 = vunpack.c.h.b16 %v427
        %v3643 = vunpack.c.l.b16 %v428
        %v3644 = vunpack.c.h.b16 %v428
        %v3645 = vunpack.c.l.b16 %v429
        %v3646 = vunpack.c.h.b16 %v429
        %v3647 = vunpack.c.l.b16 %v430
        %v3648 = vunpack.c.h.b16 %v430
        %v3649 = vunpack.c.l.b16 %v431
        %v3650 = vunpack.c.h.b16 %v431
        %v3651 = vunpack.c.l.b16 %v432
        %v3652 = vunpack.c.h.b16 %v432
        %v3653 = vunpack.c.l.b16 %v433
        %v3654 = vunpack.c.h.b16 %v433
        %v3655 = vunpack.c.l.b16 %v434
        %v3656 = vunpack.c.h.b16 %v434
        %v3657 = vunpack.c.l.b16 %v435
        %v3658 = vunpack.c.h.b16 %v435
        %v3659 = vunpack.c.l.b16 %v436
        %v3660 = vunpack.c.h.b16 %v436
        %v3661 = vunpack.c.l.b16 %v437
        %v3662 = vunpack.c.h.b16 %v437
        %v3663 = vunpack.c.l.b16 %v438
        %v3664 = vunpack.c.h.b16 %v438
        %v3665 = vunpack.c.l.b16 %v439
        %v3666 = vunpack.c.h.b16 %v439
        %v3667 = vunpack.c.l.b16 %v440
        %v3668 = vunpack.c.h.b16 %v440
        %v3669 = vunpack.c.l.b16 %v441
        %v3670 = vunpack.c.h.b16 %v441
        %v3671 = vunpack.c.l.b16 %v442
        %v3672 = vunpack.c.h.b16 %v442
        %v3673 = vunpack.c.l.b16 %v443
        %v3674 = vunpack.c.h.b16 %v443
        %v3675 = vunpack.c.l.b16 %v444
        %v3676 = vunpack.c.h.b16 %v444
        %v3677 = vunpack.c.l.b16 %v445
        %v3678 = vunpack.c.h.b16 %v445
        %v3679 = vunpack.c.l.b16 %v446
        %v3680 = vunpack.c.h.b16 %v446
        %v3681 = vunpack.c.l.b16 %v447
        %v3682 = vunpack.c.h.b16 %v447
        %v3683 = vunpack.c.l.b16 %v448
        %v3684 = vunpack.c.h.b16 %v448
        %v3685 = vunpack.c.l.b16 %v449
        %v3686 = vunpack.c.h.b16 %v449
        %v3687 = vunpack.c.l.b16 %v450
        %v3688 = vunpack.c.h.b16 %v450
        %v3689 = vunpack.c.l.b16 %v451
        %v3690 = vunpack.c.h.b16 %v451
        %v3691 = vunpack.c.l.b16 %v452
        %v3692 = vunpack.c.h.b16 %v452
        %v3693 = vunpack.c.l.b16 %v453
        %v3694 = vunpack.c.h.b16 %v453
        %v3695 = vunpack.c.l.b16 %v454
        %v3696 = vunpack.c.h.b16 %v454
        %v3697 = vunpack.c.l.b16 %v455
        %v3698 = vunpack.c.h.b16 %v455
        %v3699 = vunpack.c.l.b16 %v456
        %v3700 = vunpack.c.h.b16 %v456
        %v3701 = vunpack.c.l.b16 %v457
        %v3702 = vunpack.c.h.b16 %v457
        %v3703 = vunpack.c.l.b16 %v458
        %v3704 = vunpack.c.h.b16 %v458
        %v3705 = vunpack.c.l.b16 %v459
        %v3706 = vunpack.c.h.b16 %v459
        %v3707 = vunpack.c.l.b16 %v460
        %v3708 = vunpack.c.h.b16 %v460
        %v3709 = vunpack.c.l.b16 %v461
        %v3710 = vunpack.c.h.b16 %v461
        %v3711 = vunpack.c.l.b16 %v462
        %v3712 = vunpack.c.h.b16 %v462
        %v3713 = vunpack.c.l.b16 %v463
        %v3714 = vunpack.c.h.b16 %v463
        %v3715 = vunpack.c.l.b16 %v464
        %v3716 = vunpack.c.h.b16 %v464
        %v3717 = vunpack.c.l.b16 %v465
        %v3718 = vunpack.c.h.b16 %v465
        %v3719 = vunpack.c.l.b16 %v466
        %v3720 = vunpack.c.h.b16 %v466
        %v3721 = vunpack.c.l.b16 %v467
        %v3722 = vunpack.c.h.b16 %v467
        %v3723 = vunpack.c.l.b16 %v468
        %v3724 = vunpack.c.h.b16 %v468
        %v3725 = vunpack.c.l.b16 %v469
        %v3726 = vunpack.c.h.b16 %v469
        %v3727 = vunpack.c.l.b16 %v470
        %v3728 = vunpack.c.h.b16 %v470
        %v3729 = vunpack.c.l.b16 %v471
        %v3730 = vunpack.c.h.b16 %v471
        %v3731 = vunpack.c.l.b16 %v472
        %v3732 = vunpack.c.h.b16 %v472
        %v3733 = vunpack.c.l.b16 %v473
        %v3734 = vunpack.c.h.b16 %v473
        %v3735 = vunpack.c.l.b16 %v474
        %v3736 = vunpack.c.h.b16 %v474
        %v3737 = vunpack.c.l.b16 %v475
        %v3738 = vunpack.c.h.b16 %v475
        %v3739 = vunpack.c.l.b16 %v476
        %v3740 = vunpack.c.h.b16 %v476
        %v3741 = vunpack.c.l.b16 %v477
        %v3742 = vunpack.c.h.b16 %v477
        %v3743 = vunpack.c.l.b16 %v478
        %v3744 = vunpack.c.h.b16 %v478
        %v3745 = vunpack.c.l.b16 %v479
        %v3746 = vunpack.c.h.b16 %v479
        %v3747 = vunpack.c.l.b16 %v480
        %v3748 = vunpack.c.h.b16 %v480
        %v3749 = vunpack.c.l.b16 %v481
        %v3750 = vunpack.c.h.b16 %v481
        %v3751 = vunpack.c.l.b16 %v482
        %v3752 = vunpack.c.h.b16 %v482
        %v3753 = vunpack.c.l.b16 %v483
        %v3754 = vunpack.c.h.b16 %v483
        %v3755 = vunpack.c.l.b16 %v484
        %v3756 = vunpack.c.h.b16 %v484
        %v3757 = vunpack.c.l.b16 %v485
        %v3758 = vunpack.c.h.b16 %v485
        %v3759 = vunpack.c.l.b16 %v486
        %v3760 = vunpack.c.h.b16 %v486
        %v3761 = vunpack.c.l.b16 %v487
        %v3762 = vunpack.c.h.b16 %v487
        %v3763 = vunpack.c.l.b16 %v488
        %v3764 = vunpack.c.h.b16 %v488
        %v3765 = vunpack.c.l.b16 %v489
        %v3766 = vunpack.c.h.b16 %v489
        %v3767 = vunpack.c.l.b16 %v490
        %v3768 = vunpack.c.h.b16 %v490
        %v3769 = vunpack.c.l.b16 %v491
        %v3770 = vunpack.c.h.b16 %v491
        %v3771 = vunpack.c.l.b16 %v492
        %v3772 = vunpack.c.h.b16 %v492
        %v3773 = vunpack.c.l.b16 %v493
        %v3774 = vunpack.c.h.b16 %v493
        %v3775 = vunpack.c.l.b16 %v494
        %v3776 = vunpack.c.h.b16 %v494
        %v3777 = vunpack.c.l.b16 %v495
        %v3778 = vunpack.c.h.b16 %v495
        %v3779 = vunpack.c.l.b16 %v496
        %v3780 = vunpack.c.h.b16 %v496
        %v3781 = vunpack.c.l.b16 %v497
        %v3782 = vunpack.c.h.b16 %v497
        %v3783 = vunpack.c.l.b16 %v498
        %v3784 = vunpack.c.h.b16 %v498
        %v3785 = vunpack.c.l.b16 %v499
        %v3786 = vunpack.c.h.b16 %v499
        %v3787 = vunpack.c.l.b16 %v500
        %v3788 = vunpack.c.h.b16 %v500
        %v3789 = vunpack.c.l.b16 %v501
        %v3790 = vunpack.c.h.b16 %v501
        %v3791 = vunpack.c.l.b16 %v502
        %v3792 = vunpack.c.h.b16 %v502
        %v3793 = vunpack.c.l.b16 %v503
        %v3794 = vunpack.c.h.b16 %v503
        %v3795 = vunpack.c.l.b16 %v504
        %v3796 = vunpack.c.h.b16 %v504
        %v3797 = vunpack.c.l.b16 %v505
        %v3798 = vunpack.c.h.b16 %v505
        %v3799 = vunpack.c.l.b16 %v506
        %v3800 = vunpack.c.h.b16 %v506
        %v3801 = vunpack.c.l.b16 %v507
        %v3802 = vunpack.c.h.b16 %v507
        %v3803 = vunpack.c.l.b16 %v508
        %v3804 = vunpack.c.h.b16 %v508
        %v3805 = vunpack.c.l.b16 %v509
        %v3806 = vunpack.c.h.b16 %v509
        %v3807 = vunpack.c.l.b16 %v510
        %v3808 = vunpack.c.h.b16 %v510
        %v3809 = vunpack.c.l.b16 %v511
        %v3810 = vunpack.c.h.b16 %v511
        %v3811 = vunpack.c.l.b16 %v512
        %v3812 = vunpack.c.h.b16 %v512
        %v3813 = vunpack.c.l.b16 %v513
        %v3814 = vunpack.c.h.b16 %v513
        %v3815 = vunpack.c.l.b16 %v514
        %v3816 = vunpack.c.h.b16 %v514
        %v3817 = vunpack.c.l.b16 %v515
        %v3818 = vunpack.c.h.b16 %v515
        %v3819 = vunpack.c.l.b16 %v516
        %v3820 = vunpack.c.h.b16 %v516
        %v3821 = vunpack.c.l.b16 %v517
        %v3822 = vunpack.c.h.b16 %v517
        %v3823 = vunpack.c.l.b16 %v518
        %v3824 = vunpack.c.h.b16 %v518
        %v3825 = vunpack.c.l.b16 %v519
        %v3826 = vunpack.c.h.b16 %v519
        %v3827 = vunpack.c.l.b16 %v520
        %v3828 = vunpack.c.h.b16 %v520
        %v3829 = vunpack.c.l.b16 %v521
        %v3830 = vunpack.c.h.b16 %v521
        %v3831 = vunpack.c.l.b16 %v522
        %v3832 = vunpack.c.h.b16 %v522
        %v3833 = vunpack.c.l.b16 %v523
        %v3834 = vunpack.c.h.b16 %v523
        %v3835 = vunpack.c.l.b16 %v524
        %v3836 = vunpack.c.h.b16 %v524
        %v3837 = vunpack.c.l.b16 %v525
        %v3838 = vunpack.c.h.b16 %v525
        %v3839 = vunpack.c.l.b16 %v526
        %v3840 = vunpack.c.h.b16 %v526
        %v3841 = vunpack.c.l.b16 %v527
        %v3842 = vunpack.c.h.b16 %v527
        %v3843 = vunpack.c.l.b16 %v528
        %v3844 = vunpack.c.h.b16 %v528
        %v3845 = vunpack.c.l.b16 %v529
        %v3846 = vunpack.c.h.b16 %v529
        %v3847 = vunpack.c.l.b16 %v530
        %v3848 = vunpack.c.h.b16 %v530
        %v3849 = vunpack.c.l.b16 %v531
        %v3850 = vunpack.c.h.b16 %v531
        %v3851 = vunpack.c.l.b16 %v532
        %v3852 = vunpack.c.h.b16 %v532
        %v3853 = vunpack.c.l.b16 %v533
        %v3854 = vunpack.c.h.b16 %v533
        %v3855 = vunpack.c.l.b16 %v534
        %v3856 = vunpack.c.h.b16 %v534
        %v3857 = vunpack.c.l.b16 %v535
        %v3858 = vunpack.c.h.b16 %v535
        %v3859 = vunpack.c.l.b16 %v536
        %v3860 = vunpack.c.h.b16 %v536
        %v3861 = vunpack.c.l.b16 %v537
        %v3862 = vunpack.c.h.b16 %v537
        %v3863 = vunpack.c.l.b16 %v538
        %v3864 = vunpack.c.h.b16 %v538
        %v3865 = vunpack.c.l.b16 %v539
        %v3866 = vunpack.c.h.b16 %v539
        %v3867 = vunpack.c.l.b16 %v540
        %v3868 = vunpack.c.h.b16 %v540
        %v3869 = vunpack.c.l.b16 %v541
        %v3870 = vunpack.c.h.b16 %v541
        %v3871 = vunpack.c.l.b16 %v542
        %v3872 = vunpack.c.h.b16 %v542
        %v3873 = vunpack.c.l.b16 %v543
        %v3874 = vunpack.c.h.b16 %v543
        %v3875 = vunpack.c.l.b16 %v544
        %v3876 = vunpack.c.h.b16 %v544
        %v3877 = vunpack.c.l.b16 %v545
        %v3878 = vunpack.c.h.b16 %v545
        %v3879 = vunpack.c.l.b16 %v546
        %v3880 = vunpack.c.h.b16 %v546
        %v3881 = vunpack.c.l.b16 %v547
        %v3882 = vunpack.c.h.b16 %v547
        %v3883 = vunpack.c.l.b16 %v548
        %v3884 = vunpack.c.h.b16 %v548
        %v3885 = vunpack.c.l.b16 %v549
        %v3886 = vunpack.c.h.b16 %v549
        %v3887 = vunpack.c.l.b16 %v550
        %v3888 = vunpack.c.h.b16 %v550
        %v3889 = vunpack.c.l.b16 %v551
        %v3890 = vunpack.c.h.b16 %v551
        %v3891 = vunpack.c.l.b16 %v552
        %v3892 = vunpack.c.h.b16 %v552
        %v3893 = vunpack.c.l.b16 %v553
        %v3894 = vunpack.c.h.b16 %v553
        %v3895 = vunpack.c.l.b16 %v554
        %v3896 = vunpack.c.h.b16 %v554
        %v3897 = vunpack.c.l.b16 %v555
        %v3898 = vunpack.c.h.b16 %v555
        %v3899 = vunpack.c.l.b16 %v556
        %v3900 = vunpack.c.h.b16 %v556
        %v3901 = vunpack.c.l.b16 %v557
        %v3902 = vunpack.c.h.b16 %v557
        %v3903 = vunpack.c.l.b16 %v558
        %v3904 = vunpack.c.h.b16 %v558
        %v3905 = vunpack.c.l.b16 %v559
        %v3906 = vunpack.c.h.b16 %v559
        %v3907 = vunpack.c.l.b16 %v560
        %v3908 = vunpack.c.h.b16 %v560
        %v3909 = vunpack.c.l.b16 %v561
        %v3910 = vunpack.c.h.b16 %v561
        %v3911 = vunpack.c.l.b16 %v562
        %v3912 = vunpack.c.h.b16 %v562
        %v3913 = vunpack.c.l.b16 %v563
        %v3914 = vunpack.c.h.b16 %v563
        %v3915 = vunpack.c.l.b16 %v564
        %v3916 = vunpack.c.h.b16 %v564
        %v3917 = vunpack.c.l.b16 %v565
        %v3918 = vunpack.c.h.b16 %v565
        %v3919 = vunpack.c.l.b16 %v566
        %v3920 = vunpack.c.h.b16 %v566
        %v3921 = vunpack.c.l.b16 %v567
        %v3922 = vunpack.c.h.b16 %v567
        %v3923 = vunpack.c.l.b16 %v568
        %v3924 = vunpack.c.h.b16 %v568
        %v3925 = vunpack.c.l.b16 %v569
        %v3926 = vunpack.c.h.b16 %v569
        %v3927 = vunpack.c.l.b16 %v570
        %v3928 = vunpack.c.h.b16 %v570
        %v3929 = vunpack.c.l.b16 %v571
        %v3930 = vunpack.c.h.b16 %v571
        %v3931 = vunpack.c.l.b16 %v572
        %v3932 = vunpack.c.h.b16 %v572
        %v3933 = vunpack.c.l.b16 %v573
        %v3934 = vunpack.c.h.b16 %v573
        %v3935 = vunpack.c.l.b16 %v574
        %v3936 = vunpack.c.h.b16 %v574
        %v3937 = vunpack.c.l.b16 %v575
        %v3938 = vunpack.c.h.b16 %v575
        %v3939 = vunpack.c.l.b16 %v576
        %v3940 = vunpack.c.h.b16 %v576
        %v3941 = vunpack.c.l.b16 %v577
        %v3942 = vunpack.c.h.b16 %v577
        %v3943 = vunpack.c.l.b16 %v578
        %v3944 = vunpack.c.h.b16 %v578
        %v3945 = vunpack.c.l.b16 %v579
        %v3946 = vunpack.c.h.b16 %v579
        %v3947 = vunpack.c.l.b16 %v580
        %v3948 = vunpack.c.h.b16 %v580
        %v3949 = vunpack.c.l.b16 %v581
        %v3950 = vunpack.c.h.b16 %v581
        %v3951 = vunpack.c.l.b16 %v582
        %v3952 = vunpack.c.h.b16 %v582
        %v3953 = vunpack.c.l.b16 %v583
        %v3954 = vunpack.c.h.b16 %v583
        %v3955 = vunpack.c.l.b16 %v584
        %v3956 = vunpack.c.h.b16 %v584
        %v3957 = vunpack.c.l.b16 %v585
        %v3958 = vunpack.c.h.b16 %v585
        %v3959 = vunpack.c.l.b16 %v586
        %v3960 = vunpack.c.h.b16 %v586
        %v3961 = vunpack.c.l.b16 %v587
        %v3962 = vunpack.c.h.b16 %v587
        %v3963 = vunpack.c.l.b16 %v588
        %v3964 = vunpack.c.h.b16 %v588
        %v3965 = vunpack.c.l.b16 %v589
        %v3966 = vunpack.c.h.b16 %v589
        %v3967 = vunpack.c.l.b16 %v590
        %v3968 = vunpack.c.h.b16 %v590
        %v3969 = vunpack.c.l.b16 %v591
        %v3970 = vunpack.c.h.b16 %v591
        %v3971 = vunpack.c.l.b16 %v592
        %v3972 = vunpack.c.h.b16 %v592
        %v3973 = vunpack.c.l.b16 %v593
        %v3974 = vunpack.c.h.b16 %v593
        %v3975 = vunpack.c.l.b16 %v594
        %v3976 = vunpack.c.h.b16 %v594
        %v3977 = vunpack.c.l.b16 %v595
        %v3978 = vunpack.c.h.b16 %v595
        %v3979 = vunpack.c.l.b16 %v596
        %v3980 = vunpack.c.h.b16 %v596
        %v3981 = vunpack.c.l.b16 %v597
        %v3982 = vunpack.c.h.b16 %v597
        %v3983 = vunpack.c.l.b16 %v598
        %v3984 = vunpack.c.h.b16 %v598
        %v3985 = vunpack.c.l.b16 %v599
        %v3986 = vunpack.c.h.b16 %v599
        %v3987 = vunpack.c.l.b16 %v600
        %v3988 = vunpack.c.h.b16 %v600
        %v3989 = vunpack.c.l.b16 %v601
        %v3990 = vunpack.c.h.b16 %v601
        %v3991 = vunpack.c.l.b16 %v602
        %v3992 = vunpack.c.h.b16 %v602
        %v3993 = vunpack.c.l.b16 %v603
        %v3994 = vunpack.c.h.b16 %v603
        %v3995 = vunpack.c.l.b16 %v604
        %v3996 = vunpack.c.h.b16 %v604
        %v3997 = vunpack.c.l.b16 %v605
        %v3998 = vunpack.c.h.b16 %v605
        %v3999 = vunpack.c.l.b16 %v606
        %v4000 = vunpack.c.h.b16 %v606
        %v4001 = vunpack.c.l.b16 %v607
        %v4002 = vunpack.c.h.b16 %v607
        %v4003 = vunpack.c.l.b16 %v608
        %v4004 = vunpack.c.h.b16 %v608
        %v4005 = vunpack.c.l.b16 %v609
        %v4006 = vunpack.c.h.b16 %v609
        %v4007 = vunpack.c.l.b16 %v610
        %v4008 = vunpack.c.h.b16 %v610
        %v4009 = vunpack.c.l.b16 %v611
        %v4010 = vunpack.c.h.b16 %v611
        %v4011 = vunpack.c.l.b16 %v612
        %v4012 = vunpack.c.h.b16 %v612
        %v4013 = vunpack.c.l.b16 %v613
        %v4014 = vunpack.c.h.b16 %v613
        %v4015 = vunpack.c.l.b16 %v614
        %v4016 = vunpack.c.h.b16 %v614
        %v4017 = vunpack.c.l.b16 %v615
        %v4018 = vunpack.c.h.b16 %v615
        %v4019 = vunpack.c.l.b16 %v616
        %v4020 = vunpack.c.h.b16 %v616
        %v4021 = vunpack.c.l.b16 %v617
        %v4022 = vunpack.c.h.b16 %v617
        %v4023 = vunpack.c.l.b16 %v618
        %v4024 = vunpack.c.h.b16 %v618
        %v4025 = vunpack.c.l.b16 %v619
        %v4026 = vunpack.c.h.b16 %v619
        %v4027 = vunpack.c.l.b16 %v620
        %v4028 = vunpack.c.h.b16 %v620
        %v4029 = vunpack.c.l.b16 %v621
        %v4030 = vunpack.c.h.b16 %v621
        %v4031 = vunpack.c.l.b16 %v622
        %v4032 = vunpack.c.h.b16 %v622
        %v4033 = vunpack.c.l.b16 %v623
        %v4034 = vunpack.c.h.b16 %v623
        %v4035 = vunpack.c.l.b16 %v624
        %v4036 = vunpack.c.h.b16 %v624
        %v4037 = vunpack.c.l.b16 %v625
        %v4038 = vunpack.c.h.b16 %v625
        %v4039 = vunpack.c.l.b16 %v626
        %v4040 = vunpack.c.h.b16 %v626
        %v4041 = vunpack.c.l.b16 %v627
        %v4042 = vunpack.c.h.b16 %v627
        %v4043 = vunpack.c.l.b16 %v628
        %v4044 = vunpack.c.h.b16 %v628
        %v4045 = vunpack.c.l.b16 %v629
        %v4046 = vunpack.c.h.b16 %v629
        %v4047 = vunpack.c.l.b16 %v630
        %v4048 = vunpack.c.h.b16 %v630
        %v4049 = vunpack.c.l.b16 %v631
        %v4050 = vunpack.c.h.b16 %v631
        %v4051 = vunpack.c.l.b16 %v632
        %v4052 = vunpack.c.h.b16 %v632
        %v4053 = vunpack.c.l.b16 %v633
        %v4054 = vunpack.c.h.b16 %v633
        %v4055 = vunpack.c.l.b16 %v634
        %v4056 = vunpack.c.h.b16 %v634
        %v4057 = vunpack.c.l.b16 %v635
        %v4058 = vunpack.c.h.b16 %v635
        %v4059 = vunpack.c.l.b16 %v636
        %v4060 = vunpack.c.h.b16 %v636
        %v4061 = vunpack.c.l.b16 %v637
        %v4062 = vunpack.c.h.b16 %v637
        %v4063 = vunpack.c.l.b16 %v638
        %v4064 = vunpack.c.h.b16 %v638
        %v4065 = vunpack.c.l.b16 %v639
        %v4066 = vunpack.c.h.b16 %v639
        %v4067 = vunpack.c.l.b16 %v640
        %v4068 = vunpack.c.h.b16 %v640
        %v4069 = vunpack.c.l.b16 %v641
        %v4070 = vunpack.c.h.b16 %v641
        %v4071 = vunpack.c.l.b16 %v642
        %v4072 = vunpack.c.h.b16 %v642
        %v4073 = vunpack.c.l.b16 %v643
        %v4074 = vunpack.c.h.b16 %v643
        %v4075 = vunpack.c.l.b16 %v644
        %v4076 = vunpack.c.h.b16 %v644
        %v4077 = vunpack.c.l.b16 %v645
        %v4078 = vunpack.c.h.b16 %v645
        %v4079 = vunpack.c.l.b16 %v646
        %v4080 = vunpack.c.h.b16 %v646
        %v4081 = vunpack.c.l.b16 %v647
        %v4082 = vunpack.c.h.b16 %v647
        %v4083 = vunpack.c.l.b16 %v648
        %v4084 = vunpack.c.h.b16 %v648
        %v4085 = vunpack.c.l.b16 %v649
        %v4086 = vunpack.c.h.b16 %v649
        %v4087 = vunpack.c.l.b16 %v650
        %v4088 = vunpack.c.h.b16 %v650
        %v4089 = vunpack.c.l.b16 %v651
        %v4090 = vunpack.c.h.b16 %v651
        %v4091 = vunpack.c.l.b16 %v652
        %v4092 = vunpack.c.h.b16 %v652
        %v4093 = vunpack.c.l.b16 %v653
        %v4094 = vunpack.c.h.b16 %v653
        %v4095 = vunpack.c.l.b16 %v654
        %v4096 = vunpack.c.h.b16 %v654
        %v4097 = vunpack.c.l.b16 %v655
        %v4098 = vunpack.c.h.b16 %v655
        %v4099 = vunpack.c.l.b16 %v656
        %v4100 = vunpack.c.h.b16 %v656
        %v4101 = vunpack.c.l.b16 %v657
        %v4102 = vunpack.c.h.b16 %v657
        %v4103 = vunpack.c.l.b16 %v658
        %v4104 = vunpack.c.h.b16 %v658
        %v4105 = vunpack.c.l.b16 %v659
        %v4106 = vunpack.c.h.b16 %v659
        %v4107 = vunpack.c.l.b16 %v660
        %v4108 = vunpack.c.h.b16 %v660
        %v4109 = vunpack.c.l.b16 %v661
        %v4110 = vunpack.c.h.b16 %v661
        %v4111 = vunpack.c.l.b16 %v662
        %v4112 = vunpack.c.h.b16 %v662
        %v4113 = vunpack.c.l.b16 %v663
        %v4114 = vunpack.c.h.b16 %v663
        %v4115 = vunpack.c.l.b16 %v664
        %v4116 = vunpack.c.h.b16 %v664
        %v4117 = vunpack.c.l.b16 %v665
        %v4118 = vunpack.c.h.b16 %v665
        %v4119 = vunpack.c.l.b16 %v666
        %v4120 = vunpack.c.h.b16 %v666
        %v4121 = vunpack.c.l.b16 %v667
        %v4122 = vunpack.c.h.b16 %v667
        %v4123 = vunpack.c.l.b16 %v668
        %v4124 = vunpack.c.h.b16 %v668
        %v4125 = vunpack.c.l.b16 %v669
        %v4126 = vunpack.c.h.b16 %v669
        %v4127 = vunpack.c.l.b16 %v670
        %v4128 = vunpack.c.h.b16 %v670
        %v4129 = vunpack.c.l.b16 %v671
        %v4130 = vunpack.c.h.b16 %v671
        %v4131 = vunpack.c.l.b16 %v672
        %v4132 = vunpack.c.h.b16 %v672
        %v4133 = vunpack.c.l.b16 %v673
        %v4134 = vunpack.c.h.b16 %v673
        %v4135 = vunpack.c.l.b16 %v674
        %v4136 = vunpack.c.h.b16 %v674
        %v4137 = vunpack.c.l.b16 %v675
        %v4138 = vunpack.c.h.b16 %v675
        %v4139 = vunpack.c.l.b16 %v676
        %v4140 = vunpack.c.h.b16 %v676
        %v4141 = vpack.c.b16 %v3511, %v3501
        %v4142 = vpack.c.b16 %v3512, %v3502
        %v4143 = vpack.c.b16 %v3513, %v3503
        %v4144 = vpack.c.b16 %v3514, %v3504
        %v4145 = vpack.c.b16 %v3515, %v3505
        %v4146 = vpack.c.b16 %v3516, %v3506
        %v4147 = vpack.c.b16 %v3517, %v3507
        %v4148 = vpack.c.b16 %v3518, %v3508
        %v4149 = vpack.c.b16 %v3519, %v3509
        %v4150 = vpack.c.b16 %v3520, %v3510
        %v4151 = vpack.c.b16 %v3531, %v3521
        %v4152 = vpack.c.b16 %v3532, %v3522
        %v4153 = vpack.c.b16 %v3533, %v3523
        %v4154 = vpack.c.b16 %v3534, %v3524
        %v4155 = vpack.c.b16 %v3535, %v3525
        %v4156 = vpack.c.b16 %v3536, %v3526
        %v4157 = vpack.c.b16 %v3537, %v3527
        %v4158 = vpack.c.b16 %v3538, %v3528
        %v4159 = vpack.c.b16 %v3539, %v3529
        %v4160 = vpack.c.b16 %v3540, %v3530
        %v4161 = vpack.c.b16 %v3551, %v3541
        %v4162 = vpack.c.b16 %v3552, %v3542
        %v4163 = vpack.c.b16 %v3553, %v3543
        %v4164 = vpack.c.b16 %v3554, %v3544
        %v4165 = vpack.c.b16 %v3555, %v3545
        %v4166 = vpack.c.b16 %v3556, %v3546
        %v4167 = vpack.c.b16 %v3557, %v3547
        %v4168 = vpack.c.b16 %v3558, %v3548
        %v4169 = vpack.c.b16 %v3559, %v3549
        %v4170 = vpack.c.b16 %v3560, %v3550
        %v4171 = vpack.c.b16 %v3571, %v3561
        %v4172 = vpack.c.b16 %v3572, %v3562
        %v4173 = vpack.c.b16 %v3573, %v3563
        %v4174 = vpack.c.b16 %v3574, %v3564
        %v4175 = vpack.c.b16 %v3575, %v3565
        %v4176 = vpack.c.b16 %v3576, %v3566
        %v4177 = vpack.c.b16 %v3577, %v3567
        %v4178 = vpack.c.b16 %v3578, %v3568
        %v4179 = vpack.c.b16 %v3579, %v3569
        %v4180 = vpack.c.b16 %v3580, %v3570
        %v4181 = vpack.c.b16 %v3591, %v3581
        %v4182 = vpack.c.b16 %v3592, %v3582
        %v4183 = vpack.c.b16 %v3593, %v3583
        %v4184 = vpack.c.b16 %v3594, %v3584
        %v4185 = vpack.c.b16 %v3595, %v3585
        %v4186 = vpack.c.b16 %v3596, %v3586
        %v4187 = vpack.c.b16 %v3597, %v3587
        %v4188 = vpack.c.b16 %v3598, %v3588
        %v4189 = vpack.c.b16 %v3599, %v3589
        %v4190 = vpack.c.b16 %v3600, %v3590
        %v4191 = vpack.c.b16 %v3611, %v3601
        %v4192 = vpack.c.b16 %v3612, %v3602
        %v4193 = vpack.c.b16 %v3613, %v3603
        %v4194 = vpack.c.b16 %v3614, %v3604
        %v4195 = vpack.c.b16 %v3615, %v3605
        %v4196 = vpack.c.b16 %v3616, %v3606
        %v4197 = vpack.c.b16 %v3617, %v3607
        %v4198 = vpack.c.b16 %v3618, %v3608
        %v4199 = vpack.c.b16 %v3619, %v3609
        %v4200 = vpack.c.b16 %v3620, %v3610
        %v4201 = vpack.c.b16 %v3631, %v3621
        %v4202 = vpack.c.b16 %v3632, %v3622
        %v4203 = vpack.c.b16 %v3633, %v3623
        %v4204 = vpack.c.b16 %v3634, %v3624
        %v4205 = vpack.c.b16 %v3635, %v3625
        %v4206 = vpack.c.b16 %v3636, %v3626
        %v4207 = vpack.c.b16 %v3637, %v3627
        %v4208 = vpack.c.b16 %v3638, %v3628
        %v4209 = vpack.c.b16 %v3639, %v3629
        %v4210 = vpack.c.b16 %v3640, %v3630
        %v4211 = vpack.c.b16 %v3651, %v3641
        %v4212 = vpack.c.b16 %v3652, %v3642
        %v4213 = vpack.c.b16 %v3653, %v3643
        %v4214 = vpack.c.b16 %v3654, %v3644
        %v4215 = vpack.c.b16 %v3655, %v3645
        %v4216 = vpack.c.b16 %v3656, %v3646
        %v4217 = vpack.c.b16 %v3657, %v3647
        %v4218 = vpack.c.b16 %v3658, %v3648
        %v4219 = vpack.c.b16 %v3659, %v3649
        %v4220 = vpack.c.b16 %v3660, %v3650
        %v4221 = vpack.c.b16 %v3671, %v3661
        %v4222 = vpack.c.b16 %v3672, %v3662
        %v4223 = vpack.c.b16 %v3673, %v3663
        %v4224 = vpack.c.b16 %v3674, %v3664
        %v4225 = vpack.c.b16 %v3675, %v3665
        %v4226 = vpack.c.b16 %v3676, %v3666
        %v4227 = vpack.c.b16 %v3677, %v3667
        %v4228 = vpack.c.b16 %v3678, %v3668
        %v4229 = vpack.c.b16 %v3679, %v3669
        %v4230 = vpack.c.b16 %v3680, %v3670
        %v4231 = vpack.c.b16 %v3691, %v3681
        %v4232 = vpack.c.b16 %v3692, %v3682
        %v4233 = vpack.c.b16 %v3693, %v3683
        %v4234 = vpack.c.b16 %v3694, %v3684
        %v4235 = vpack.c.b16 %v3695, %v3685
        %v4236 = vpack.c.b16 %v3696, %v3686
        %v4237 = vpack.c.b16 %v3697, %v3687
        %v4238 = vpack.c.b16 %v3698, %v3688
        %v4239 = vpack.c.b16 %v3699, %v3689
        %v4240 = vpack.c.b16 %v3700, %v3690
        %v4241 = vpack.c.b16 %v3711, %v3701
        %v4242 = vpack.c.b16 %v3712, %v3702
        %v4243 = vpack.c.b16 %v3713, %v3703
        %v4244 = vpack.c.b16 %v3714, %v3704
        %v4245 = vpack.c.b16 %v3715, %v3705
        %v4246 = vpack.c.b16 %v3716, %v3706
        %v4247 = vpack.c.b16 %v3717, %v3707
        %v4248 = vpack.c.b16 %v3718, %v3708
        %v4249 = vpack.c.b16 %v3719, %v3709
        %v4250 = vpack.c.b16 %v3720, %v3710
        %v4251 = vpack.c.b16 %v3731, %v3721
        %v4252 = vpack.c.b16 %v3732, %v3722
        %v4253 = vpack.c.b16 %v3733, %v3723
        %v4254 = vpack.c.b16 %v3734, %v3724
        %v4255 = vpack.c.b16 %v3735, %v3725
        %v4256 = vpack.c.b16 %v3736, %v3726
        %v4257 = vpack.c.b16 %v3737, %v3727
        %v4258 = vpack.c.b16 %v3738, %v3728
        %v4259 = vpack.c.b16 %v3739, %v3729
        %v4260 = vpack.c.b16 %v3740, %v3730
        %v4261 = vpack.c.b16 %v3751, %v3741
        %v4262 = vpack.c.b16 %v3752, %v3742
        %v4263 = vpack.c.b16 %v3753, %v3743
        %v4264 = vpack.c.b16 %v3754, %v3744
        %v4265 = vpack.c.b16 %v3755, %v3745
        %v4266 = vpack.c.b16 %v3756, %v3746
        %v4267 = vpack.c.b16 %v3757, %v3747
        %v4268 = vpack.c.b16 %v3758, %v3748
        %v4269 = vpack.c.b16 %v3759, %v3749
        %v4270 = vpack.c.b16 %v3760, %v3750
        %v4271 = vpack.c.b16 %v3771, %v3761
        %v4272 = vpack.c.b16 %v3772, %v3762
        %v4273 = vpack.c.b16 %v3773, %v3763
        %v4274 = vpack.c.b16 %v3774, %v3764
        %v4275 = vpack.c.b16 %v3775, %v3765
        %v4276 = vpack.c.b16 %v3776, %v3766
        %v4277 = vpack.c.b16 %v3777, %v3767
        %v4278 = vpack.c.b16 %v3778, %v3768
        %v4279 = vpack.c.b16 %v3779, %v3769
        %v4280 = vpack.c.b16 %v3780, %v3770
        %v4281 = vpack.c.b16 %v3791, %v3781
        %v4282 = vpack.c.b16 %v3792, %v3782
        %v4283 = vpack.c.b16 %v3793, %v3783
        %v4284 = vpack.c.b16 %v3794, %v3784
        %v4285 = vpack.c.b16 %v3795, %v3785
        %v4286 = vpack.c.b16 %v3796, %v3786
        %v4287 = vpack.c.b16 %v3797, %v3787
        %v4288 = vpack.c.b16 %v3798, %v3788
        %v4289 = vpack.c.b16 %v3799, %v3789
        %v4290 = vpack.c.b16 %v3800, %v3790
        %v4291 = vpack.c.b16 %v3811, %v3801
        %v4292 = vpack.c.b16 %v3812, %v3802
        %v4293 = vpack.c.b16 %v3813, %v3803
        %v4294 = vpack.c.b16 %v3814, %v3804
        %v4295 = vpack.c.b16 %v3815, %v3805
        %v4296 = vpack.c.b16 %v3816, %v3806
        %v4297 = vpack.c.b16 %v3817, %v3807
        %v4298 = vpack.c.b16 %v3818, %v3808
        %v4299 = vpack.c.b16 %v3819, %v3809
        %v4300 = vpack.c.b16 %v3820, %v3810
        %v4301 = vpack.c.b16 %v3831, %v3821
        %v4302 = vpack.c.b16 %v3832, %v3822
        %v4303 = vpack.c.b16 %v3833, %v3823
        %v4304 = vpack.c.b16 %v3834, %v3824
        %v4305 = vpack.c.b16 %v3835, %v3825
        %v4306 = vpack.c.b16 %v3836, %v3826
        %v4307 = vpack.c.b16 %v3837, %v3827
        %v4308 = vpack.c.b16 %v3838, %v3828
        %v4309 = vpack.c.b16 %v3839, %v3829
        %v4310 = vpack.c.b16 %v3840, %v3830
        %v4311 = vpack.c.b16 %v3851, %v3841
        %v4312 = vpack.c.b16 %v3852, %v3842
        %v4313 = vpack.c.b16 %v3853, %v3843
        %v4314 = vpack.c.b16 %v3854, %v3844
        %v4315 = vpack.c.b16 %v3855, %v3845
        %v4316 = vpack.c.b16 %v3856, %v3846
        %v4317 = vpack.c.b16 %v3857, %v3847
        %v4318 = vpack.c.b16 %v3858, %v3848
        %v4319 = vpack.c.b16 %v3859, %v3849
        %v4320 = vpack.c.b16 %v3860, %v3850
        %v4321 = vpack.c.b16 %v3871, %v3861
        %v4322 = vpack.c.b16 %v3872, %v3862
        %v4323 = vpack.c.b16 %v3873, %v3863
        %v4324 = vpack.c.b16 %v3874, %v3864
        %v4325 = vpack.c.b16 %v3875, %v3865
        %v4326 = vpack.c.b16 %v3876, %v3866
        %v4327 = vpack.c.b16 %v3877, %v3867
        %v4328 = vpack.c.b16 %v3878, %v3868
        %v4329 = vpack.c.b16 %v3879, %v3869
        %v4330 = vpack.c.b16 %v3880, %v3870
        %v4331 = vpack.c.b16 %v3891, %v3881
        %v4332 = vpack.c.b16 %v3892, %v3882
        %v4333 = vpack.c.b16 %v3893, %v3883
        %v4334 = vpack.c.b16 %v3894, %v3884
        %v4335 = vpack.c.b16 %v3895, %v3885
        %v4336 = vpack.c.b16 %v3896, %v3886
        %v4337 = vpack.c.b16 %v3897, %v3887
        %v4338 = vpack.c.b16 %v3898, %v3888
        %v4339 = vpack.c.b16 %v3899, %v3889
        %v4340 = vpack.c.b16 %v3900, %v3890
        %v4341 = vpack.c.b16 %v3911, %v3901
        %v4342 = vpack.c.b16 %v3912, %v3902
        %v4343 = vpack.c.b16 %v3913, %v3903
        %v4344 = vpack.c.b16 %v3914, %v3904
        %v4345 = vpack.c.b16 %v3915, %v3905
        %v4346 = vpack.c.b16 %v3916, %v3906
        %v4347 = vpack.c.b16 %v3917, %v3907
        %v4348 = vpack.c.b16 %v3918, %v3908
        %v4349 = vpack.c.b16 %v3919, %v3909
        %v4350 = vpack.c.b16 %v3920, %v3910
        %v4351 = vpack.c.b16 %v3931, %v3921
        %v4352 = vpack.c.b16 %v3932, %v3922
        %v4353 = vpack.c.b16 %v3933, %v3923
        %v4354 = vpack.c.b16 %v3934, %v3924
        %v4355 = vpack.c.b16 %v3935, %v3925
        %v4356 = vpack.c.b16 %v3936, %v3926
        %v4357 = vpack.c.b16 %v3937, %v3927
        %v4358 = vpack.c.b16 %v3938, %v3928
        %v4359 = vpack.c.b16 %v3939, %v3929
        %v4360 = vpack.c.b16 %v3940, %v3930
        %v4361 = vpack.c.b16 %v3951, %v3941
        %v4362 = vpack.c.b16 %v3952, %v3942
        %v4363 = vpack.c.b16 %v3953, %v3943
        %v4364 = vpack.c.b16 %v3954, %v3944
        %v4365 = vpack.c.b16 %v3955, %v3945
        %v4366 = vpack.c.b16 %v3956, %v3946
        %v4367 = vpack.c.b16 %v3957, %v3947
        %v4368 = vpack.c.b16 %v3958, %v3948
        %v4369 = vpack.c.b16 %v3959, %v3949
        %v4370 = vpack.c.b16 %v3960, %v3950
        %v4371 = vpack.c.b16 %v3971, %v3961
        %v4372 = vpack.c.b16 %v3972, %v3962
        %v4373 = vpack.c.b16 %v3973, %v3963
        %v4374 = vpack.c.b16 %v3974, %v3964
        %v4375 = vpack.c.b16 %v3975, %v3965
        %v4376 = vpack.c.b16 %v3976, %v3966
        %v4377 = vpack.c.b16 %v3977, %v3967
        %v4378 = vpack.c.b16 %v3978, %v3968
        %v4379 = vpack.c.b16 %v3979, %v3969
        %v4380 = vpack.c.b16 %v3980, %v3970
        %v4381 = vpack.c.b16 %v3991, %v3981
        %v4382 = vpack.c.b16 %v3992, %v3982
        %v4383 = vpack.c.b16 %v3993, %v3983
        %v4384 = vpack.c.b16 %v3994, %v3984
        %v4385 = vpack.c.b16 %v3995, %v3985
        %v4386 = vpack.c.b16 %v3996, %v3986
        %v4387 = vpack.c.b16 %v3997, %v3987
        %v4388 = vpack.c.b16 %v3998, %v3988
        %v4389 = vpack.c.b16 %v3999, %v3989
        %v4390 = vpack.c.b16 %v4000, %v3990
        %v4391 = vpack.c.b16 %v4011, %v4001
        %v4392 = vpack.c.b16 %v4012, %v4002
        %v4393 = vpack.c.b16 %v4013, %v4003
        %v4394 = vpack.c.b16 %v4014, %v4004
        %v4395 = vpack.c.b16 %v4015, %v4005
        %v4396 = vpack.c.b16 %v4016, %v4006
        %v4397 = vpack.c.b16 %v4017, %v4007
        %v4398 = vpack.c.b16 %v4018, %v4008
        %v4399 = vpack.c.b16 %v4019, %v4009
        %v4400 = vpack.c.b16 %v4020, %v4010
        %v4401 = vpack.c.b16 %v4031, %v4021
        %v4402 = vpack.c.b16 %v4032, %v4022
        %v4403 = vpack.c.b16 %v4033, %v4023
        %v4404 = vpack.c.b16 %v4034, %v4024
        %v4405 = vpack.c.b16 %v4035, %v4025
        %v4406 = vpack.c.b16 %v4036, %v4026
        %v4407 = vpack.c.b16 %v4037, %v4027
        %v4408 = vpack.c.b16 %v4038, %v4028
        %v4409 = vpack.c.b16 %v4039, %v4029
        %v4410 = vpack.c.b16 %v4040, %v4030
        %v4411 = vpack.c.b16 %v4051, %v4041
        %v4412 = vpack.c.b16 %v4052, %v4042
        %v4413 = vpack.c.b16 %v4053, %v4043
        %v4414 = vpack.c.b16 %v4054, %v4044
        %v4415 = vpack.c.b16 %v4055, %v4045
        %v4416 = vpack.c.b16 %v4056, %v4046
        %v4417 = vpack.c.b16 %v4057, %v4047
        %v4418 = vpack.c.b16 %v4058, %v4048
        %v4419 = vpack.c.b16 %v4059, %v4049
        %v4420 = vpack.c.b16 %v4060, %v4050
        %v4421 = vpack.c.b16 %v4071, %v4061
        %v4422 = vpack.c.b16 %v4072, %v4062
        %v4423 = vpack.c.b16 %v4073, %v4063
        %v4424 = vpack.c.b16 %v4074, %v4064
        %v4425 = vpack.c.b16 %v4075, %v4065
        %v4426 = vpack.c.b16 %v4076, %v4066
        %v4427 = vpack.c.b16 %v4077, %v4067
        %v4428 = vpack.c.b16 %v4078, %v4068
        %v4429 = vpack.c.b16 %v4079, %v4069
        %v4430 = vpack.c.b16 %v4080, %v4070
        %v4431 = vpack.c.b16 %v4091, %v4081
        %v4432 = vpack.c.b16 %v4092, %v4082
        %v4433 = vpack.c.b16 %v4093, %v4083
        %v4434 = vpack.c.b16 %v4094, %v4084
        %v4435 = vpack.c.b16 %v4095, %v4085
        %v4436 = vpack.c.b16 %v4096, %v4086
        %v4437 = vpack.c.b16 %v4097, %v4087
        %v4438 = vpack.c.b16 %v4098, %v4088
        %v4439 = vpack.c.b16 %v4099, %v4089
        %v4440 = vpack.c.b16 %v4100, %v4090
        %v4441 = vpack.c.b16 %v4111, %v4101
        %v4442 = vpack.c.b16 %v4112, %v4102
        %v4443 = vpack.c.b16 %v4113, %v4103
        %v4444 = vpack.c.b16 %v4114, %v4104
        %v4445 = vpack.c.b16 %v4115, %v4105
        %v4446 = vpack.c.b16 %v4116, %v4106
        %v4447 = vpack.c.b16 %v4117, %v4107
        %v4448 = vpack.c.b16 %v4118, %v4108
        %v4449 = vpack.c.b16 %v4119, %v4109
        %v4450 = vpack.c.b16 %v4120, %v4110
        %v4451 = vpack.c.b16 %v4131, %v4121
        %v4452 = vpack.c.b16 %v4132, %v4122
        %v4453 = vpack.c.b16 %v4133, %v4123
        %v4454 = vpack.c.b16 %v4134, %v4124
        %v4455 = vpack.c.b16 %v4135, %v4125
        %v4456 = vpack.c.b16 %v4136, %v4126
        %v4457 = vpack.c.b16 %v4137, %v4127
        %v4458 = vpack.c.b16 %v4138, %v4128
        %v4459 = vpack.c.b16 %v4139, %v4129
        %v4460 = vpack.c.b16 %v4140, %v4130
        %4781 = vmatprep.subr.bf16.mxu0 %v4212
        %4782 = vmatpush1.bf16.msra.mxu0 %v4211
        %4783 = vmatprep.subr.bf16.mxu0 %v4202
        %4784 = vmatpush1.bf16.msra.mxu0 %v4201
        %4785 = vmatprep.subr.bf16.mxu0 %v4192
        %4786 = vmatpush1.bf16.msra.mxu0 %v4191
        %4787 = vmatprep.subr.bf16.mxu0 %v4182
        %4788 = vmatpush1.bf16.msra.mxu0 %v4181
        %4789 = vmatprep.subr.bf16.mxu0 %v4172
        %4790 = vmatpush1.bf16.msra.mxu0 %v4171
        %4791 = vmatprep.subr.bf16.mxu0 %v4162
        %4792 = vmatpush1.bf16.msra.mxu0 %v4161
        %4793 = vmatprep.subr.bf16.mxu0 %v4152
        %4794 = vmatpush1.bf16.msra.mxu0 %v4151
        %4795 = vmatprep.subr.bf16.mxu0 %v4142
        %4796 = vmatpush1.bf16.msra.mxu0 %v4141
        %4797 = vmatprep.subr.bf16.mxu0 %v4292
        %4798 = vmatpush2.bf16.msra.mxu0 %v4291
        %4799 = vmatprep.subr.bf16.mxu0 %v4282
        %4800 = vmatpush2.bf16.msra.mxu0 %v4281
        %4801 = vmatprep.subr.bf16.mxu0 %v4272
        %4802 = vmatpush2.bf16.msra.mxu0 %v4271
        %4803 = vmatprep.subr.bf16.mxu0 %v4262
        %4804 = vmatpush2.bf16.msra.mxu0 %v4261
        %4805 = vmatprep.subr.bf16.mxu0 %v4252
        %4806 = vmatpush2.bf16.msra.mxu0 %v4251
        %4807 = vmatprep.subr.bf16.mxu0 %v4242
        %4808 = vmatpush2.bf16.msra.mxu0 %v4241
        %4809 = vmatprep.subr.bf16.mxu0 %v4232
        %4810 = vmatpush2.bf16.msra.mxu0 %v4231
        %4811 = vmatprep.subr.bf16.mxu0 %v4222
        %4812 = vmatpush2.bf16.msra.mxu0 %v4221
        %4813 = vmatprep.mubr.bf16.mxu0 %v3166
        %4814 = vmatmul.mubr.bf16.gmra.mxu0 %v3165
        %v4815 = vpop.f32.mrf.mxu0
        %v4816 = vadd.f32 %v2723, %v4815
        %v4817 = vpop.f32.mrf.mxu0
        %v4818 = vadd.f32 %v2725, %v4817
        %v4819 = vpop.f32.mrf.mxu0
        %v4820 = vadd.f32 %v2727, %v4819
        %v4821 = vpop.f32.mrf.mxu0
        %v4822 = vadd.f32 %v2729, %v4821
        %4823 = vmatprep.mubr.bf16.mxu0 %v3170
        %4824 = vmatmul.mubr.bf16.gmra.mxu0 %v3169
        %v4825 = vpop.f32.mrf.mxu0
        %v4826 = vadd.f32 %v2733, %v4825
        %v4827 = vpop.f32.mrf.mxu0
        %v4828 = vadd.f32 %v2735, %v4827
        %v4829 = vpop.f32.mrf.mxu0
        %v4830 = vpop.f32.mrf.mxu0
        %4831 = vdwg.mxu0
        %4832 = vmatprep.subr.bf16.mxu0 %v4372
        %4833 = vmatpush1.bf16.msra.mxu0 %v4371
        %4834 = vmatprep.subr.bf16.mxu0 %v4362
        %4835 = vmatpush1.bf16.msra.mxu0 %v4361
        %4836 = vmatprep.subr.bf16.mxu0 %v4352
        %4837 = vmatpush1.bf16.msra.mxu0 %v4351
        %4838 = vmatprep.subr.bf16.mxu0 %v4342
        %4839 = vmatpush1.bf16.msra.mxu0 %v4341
        %4840 = vmatprep.subr.bf16.mxu0 %v4332
        %4841 = vmatpush1.bf16.msra.mxu0 %v4331
        %4842 = vmatprep.subr.bf16.mxu0 %v4322
        %4843 = vmatpush1.bf16.msra.mxu0 %v4321
        %4844 = vmatprep.subr.bf16.mxu0 %v4312
        %4845 = vmatpush1.bf16.msra.mxu0 %v4311
        %4846 = vmatprep.subr.bf16.mxu0 %v4302
        %4847 = vmatpush1.bf16.msra.mxu0 %v4301
        %4848 = vmatprep.subr.bf16.mxu0 %v4452
        %4849 = vmatpush2.bf16.msra.mxu0 %v4451
        %4850 = vmatprep.subr.bf16.mxu0 %v4442
        %4851 = vmatpush2.bf16.msra.mxu0 %v4441
        %4852 = vmatprep.subr.bf16.mxu0 %v4432
        %4853 = vmatpush2.bf16.msra.mxu0 %v4431
        %4854 = vmatprep.subr.bf16.mxu0 %v4422
        %4855 = vmatpush2.bf16.msra.mxu0 %v4421
        %4856 = vmatprep.subr.bf16.mxu0 %v4412
        %4857 = vmatpush2.bf16.msra.mxu0 %v4411
        %4858 = vmatprep.subr.bf16.mxu0 %v4402
        %4859 = vmatpush2.bf16.msra.mxu0 %v4401
        %4860 = vmatprep.subr.bf16.mxu0 %v4392
        %4861 = vmatpush2.bf16.msra.mxu0 %v4391
        %4862 = vmatprep.subr.bf16.mxu0 %v4382
        %4863 = vmatpush2.bf16.msra.mxu0 %v4381
        %4864 = vmatprep.mubr.bf16.mxu0 %v3168
        %4865 = vmatmul.mubr.bf16.gmra.mxu0 %v3167
        %v4866 = vpop.f32.mrf.mxu0
        %v4867 = vadd.f32 %v4816, %v4866
        %v4868 = vpop.f32.mrf.mxu0
        %v4869 = vadd.f32 %v4818, %v4868
        %v4870 = vpop.f32.mrf.mxu0
        %v4871 = vadd.f32 %v4820, %v4870
        %v4872 = vpop.f32.mrf.mxu0
        %v4873 = vadd.f32 %v4822, %v4872
        %4874 = vmatprep.mubr.bf16.mxu0 %v3172
        %4875 = vmatmul.mubr.bf16.gmra.mxu0 %v3171
        %v4876 = vpop.f32.mrf.mxu0
        %v4877 = vadd.f32 %v4826, %v4876
        %v4878 = vpop.f32.mrf.mxu0
        %v4879 = vadd.f32 %v4828, %v4878
        %v4880 = vpop.f32.mrf.mxu0
        %v4881 = vpop.f32.mrf.mxu0
        %4882 = vdwg.mxu0
        %4883 = vmatprep.subr.bf16.mxu0 %v4214
        %4884 = vmatpush1.bf16.msra.mxu0 %v4213
        %4885 = vmatprep.subr.bf16.mxu0 %v4204
        %4886 = vmatpush1.bf16.msra.mxu0 %v4203
        %4887 = vmatprep.subr.bf16.mxu0 %v4194
        %4888 = vmatpush1.bf16.msra.mxu0 %v4193
        %4889 = vmatprep.subr.bf16.mxu0 %v4184
        %4890 = vmatpush1.bf16.msra.mxu0 %v4183
        %4891 = vmatprep.subr.bf16.mxu0 %v4174
        %4892 = vmatpush1.bf16.msra.mxu0 %v4173
        %4893 = vmatprep.subr.bf16.mxu0 %v4164
        %4894 = vmatpush1.bf16.msra.mxu0 %v4163
        %4895 = vmatprep.subr.bf16.mxu0 %v4154
        %4896 = vmatpush1.bf16.msra.mxu0 %v4153
        %4897 = vmatprep.subr.bf16.mxu0 %v4144
        %4898 = vmatpush1.bf16.msra.mxu0 %v4143
        %4899 = vmatprep.subr.bf16.mxu0 %v4294
        %4900 = vmatpush2.bf16.msra.mxu0 %v4293
        %4901 = vmatprep.subr.bf16.mxu0 %v4284
        %4902 = vmatpush2.bf16.msra.mxu0 %v4283
        %4903 = vmatprep.subr.bf16.mxu0 %v4274
        %4904 = vmatpush2.bf16.msra.mxu0 %v4273
        %4905 = vmatprep.subr.bf16.mxu0 %v4264
        %4906 = vmatpush2.bf16.msra.mxu0 %v4263
        %4907 = vmatprep.subr.bf16.mxu0 %v4254
        %4908 = vmatpush2.bf16.msra.mxu0 %v4253
        %4909 = vmatprep.subr.bf16.mxu0 %v4244
        %4910 = vmatpush2.bf16.msra.mxu0 %v4243
        %4911 = vmatprep.subr.bf16.mxu0 %v4234
        %4912 = vmatpush2.bf16.msra.mxu0 %v4233
        %4913 = vmatprep.subr.bf16.mxu0 %v4224
        %4914 = vmatpush2.bf16.msra.mxu0 %v4223
        %4915 = vmatprep.mubr.bf16.mxu0 %v3166
        %4916 = vmatmul.mubr.bf16.gmra.mxu0 %v3165
        %v4917 = vpop.f32.mrf.mxu0
        %v4918 = vadd.f32 %v2825, %v4917
        %v4919 = vpop.f32.mrf.mxu0
        %v4920 = vadd.f32 %v2827, %v4919
        %v4921 = vpop.f32.mrf.mxu0
        %v4922 = vadd.f32 %v2829, %v4921
        %v4923 = vpop.f32.mrf.mxu0
        %v4924 = vadd.f32 %v2831, %v4923
        %4925 = vmatprep.mubr.bf16.mxu0 %v3170
        %4926 = vmatmul.mubr.bf16.gmra.mxu0 %v3169
        %v4927 = vpop.f32.mrf.mxu0
        %v4928 = vadd.f32 %v2835, %v4927
        %v4929 = vpop.f32.mrf.mxu0
        %v4930 = vadd.f32 %v2837, %v4929
        %v4931 = vpop.f32.mrf.mxu0
        %v4932 = vpop.f32.mrf.mxu0
        %4933 = vdwg.mxu0
        %4934 = vmatprep.subr.bf16.mxu0 %v4374
        %4935 = vmatpush1.bf16.msra.mxu0 %v4373
        %4936 = vmatprep.subr.bf16.mxu0 %v4364
        %4937 = vmatpush1.bf16.msra.mxu0 %v4363
        %4938 = vmatprep.subr.bf16.mxu0 %v4354
        %4939 = vmatpush1.bf16.msra.mxu0 %v4353
        %4940 = vmatprep.subr.bf16.mxu0 %v4344
        %4941 = vmatpush1.bf16.msra.mxu0 %v4343
        %4942 = vmatprep.subr.bf16.mxu0 %v4334
        %4943 = vmatpush1.bf16.msra.mxu0 %v4333
        %4944 = vmatprep.subr.bf16.mxu0 %v4324
        %4945 = vmatpush1.bf16.msra.mxu0 %v4323
        %4946 = vmatprep.subr.bf16.mxu0 %v4314
        %4947 = vmatpush1.bf16.msra.mxu0 %v4313
        %4948 = vmatprep.subr.bf16.mxu0 %v4304
        %4949 = vmatpush1.bf16.msra.mxu0 %v4303
        %4950 = vmatprep.subr.bf16.mxu0 %v4454
        %4951 = vmatpush2.bf16.msra.mxu0 %v4453
        %4952 = vmatprep.subr.bf16.mxu0 %v4444
        %4953 = vmatpush2.bf16.msra.mxu0 %v4443
        %4954 = vmatprep.subr.bf16.mxu0 %v4434
        %4955 = vmatpush2.bf16.msra.mxu0 %v4433
        %4956 = vmatprep.subr.bf16.mxu0 %v4424
        %4957 = vmatpush2.bf16.msra.mxu0 %v4423
        %4958 = vmatprep.subr.bf16.mxu0 %v4414
        %4959 = vmatpush2.bf16.msra.mxu0 %v4413
        %4960 = vmatprep.subr.bf16.mxu0 %v4404
        %4961 = vmatpush2.bf16.msra.mxu0 %v4403
        %4962 = vmatprep.subr.bf16.mxu0 %v4394
        %4963 = vmatpush2.bf16.msra.mxu0 %v4393
        %4964 = vmatprep.subr.bf16.mxu0 %v4384
        %4965 = vmatpush2.bf16.msra.mxu0 %v4383
        %4966 = vmatprep.mubr.bf16.mxu0 %v3168
        %4967 = vmatmul.mubr.bf16.gmra.mxu0 %v3167
        %v4968 = vpop.f32.mrf.mxu0
        %v4969 = vadd.f32 %v4918, %v4968
        %v4970 = vpop.f32.mrf.mxu0
        %v4971 = vadd.f32 %v4920, %v4970
        %v4972 = vpop.f32.mrf.mxu0
        %v4973 = vadd.f32 %v4922, %v4972
        %v4974 = vpop.f32.mrf.mxu0
        %v4975 = vadd.f32 %v4924, %v4974
        %4976 = vmatprep.mubr.bf16.mxu0 %v3172
        %4977 = vmatmul.mubr.bf16.gmra.mxu0 %v3171
        %v4978 = vpop.f32.mrf.mxu0
        %v4979 = vadd.f32 %v4928, %v4978
        %v4980 = vpop.f32.mrf.mxu0
        %v4981 = vadd.f32 %v4930, %v4980
        %v4982 = vpop.f32.mrf.mxu0
        %v4983 = vpop.f32.mrf.mxu0
        %4984 = vdwg.mxu0
        %4985 = vmatprep.subr.bf16.mxu0 %v4216
        %4986 = vmatpush1.bf16.msra.mxu0 %v4215
        %4987 = vmatprep.subr.bf16.mxu0 %v4206
        %4988 = vmatpush1.bf16.msra.mxu0 %v4205
        %4989 = vmatprep.subr.bf16.mxu0 %v4196
        %4990 = vmatpush1.bf16.msra.mxu0 %v4195
        %4991 = vmatprep.subr.bf16.mxu0 %v4186
        %4992 = vmatpush1.bf16.msra.mxu0 %v4185
        %4993 = vmatprep.subr.bf16.mxu0 %v4176
        %4994 = vmatpush1.bf16.msra.mxu0 %v4175
        %4995 = vmatprep.subr.bf16.mxu0 %v4166
        %4996 = vmatpush1.bf16.msra.mxu0 %v4165
        %4997 = vmatprep.subr.bf16.mxu0 %v4156
        %4998 = vmatpush1.bf16.msra.mxu0 %v4155
        %4999 = vmatprep.subr.bf16.mxu0 %v4146
        %5000 = vmatpush1.bf16.msra.mxu0 %v4145
        %5001 = vmatprep.subr.bf16.mxu0 %v4296
        %5002 = vmatpush2.bf16.msra.mxu0 %v4295
        %5003 = vmatprep.subr.bf16.mxu0 %v4286
        %5004 = vmatpush2.bf16.msra.mxu0 %v4285
        %5005 = vmatprep.subr.bf16.mxu0 %v4276
        %5006 = vmatpush2.bf16.msra.mxu0 %v4275
        %5007 = vmatprep.subr.bf16.mxu0 %v4266
        %5008 = vmatpush2.bf16.msra.mxu0 %v4265
        %5009 = vmatprep.subr.bf16.mxu0 %v4256
        %5010 = vmatpush2.bf16.msra.mxu0 %v4255
        %5011 = vmatprep.subr.bf16.mxu0 %v4246
        %5012 = vmatpush2.bf16.msra.mxu0 %v4245
        %5013 = vmatprep.subr.bf16.mxu0 %v4236
        %5014 = vmatpush2.bf16.msra.mxu0 %v4235
        %5015 = vmatprep.subr.bf16.mxu0 %v4226
        %5016 = vmatpush2.bf16.msra.mxu0 %v4225
        %5017 = vmatprep.mubr.bf16.mxu0 %v3166
        %5018 = vmatmul.mubr.bf16.gmra.mxu0 %v3165
        %v5019 = vpop.f32.mrf.mxu0
        %v5020 = vadd.f32 %v2927, %v5019
        %v5021 = vpop.f32.mrf.mxu0
        %v5022 = vadd.f32 %v2929, %v5021
        %v5023 = vpop.f32.mrf.mxu0
        %v5024 = vadd.f32 %v2931, %v5023
        %v5025 = vpop.f32.mrf.mxu0
        %v5026 = vadd.f32 %v2933, %v5025
        %5027 = vmatprep.mubr.bf16.mxu0 %v3170
        %5028 = vmatmul.mubr.bf16.gmra.mxu0 %v3169
        %v5029 = vpop.f32.mrf.mxu0
        %v5030 = vadd.f32 %v2937, %v5029
        %v5031 = vpop.f32.mrf.mxu0
        %v5032 = vadd.f32 %v2939, %v5031
        %v5033 = vpop.f32.mrf.mxu0
        %v5034 = vpop.f32.mrf.mxu0
        %5035 = vdwg.mxu0
        %5036 = vmatprep.subr.bf16.mxu0 %v4376
        %5037 = vmatpush1.bf16.msra.mxu0 %v4375
        %5038 = vmatprep.subr.bf16.mxu0 %v4366
        %5039 = vmatpush1.bf16.msra.mxu0 %v4365
        %5040 = vmatprep.subr.bf16.mxu0 %v4356
        %5041 = vmatpush1.bf16.msra.mxu0 %v4355
        %5042 = vmatprep.subr.bf16.mxu0 %v4346
        %5043 = vmatpush1.bf16.msra.mxu0 %v4345
        %5044 = vmatprep.subr.bf16.mxu0 %v4336
        %5045 = vmatpush1.bf16.msra.mxu0 %v4335
        %5046 = vmatprep.subr.bf16.mxu0 %v4326
        %5047 = vmatpush1.bf16.msra.mxu0 %v4325
        %5048 = vmatprep.subr.bf16.mxu0 %v4316
        %5049 = vmatpush1.bf16.msra.mxu0 %v4315
        %5050 = vmatprep.subr.bf16.mxu0 %v4306
        %5051 = vmatpush1.bf16.msra.mxu0 %v4305
        %5052 = vmatprep.subr.bf16.mxu0 %v4456
        %5053 = vmatpush2.bf16.msra.mxu0 %v4455
        %5054 = vmatprep.subr.bf16.mxu0 %v4446
        %5055 = vmatpush2.bf16.msra.mxu0 %v4445
        %5056 = vmatprep.subr.bf16.mxu0 %v4436
        %5057 = vmatpush2.bf16.msra.mxu0 %v4435
        %5058 = vmatprep.subr.bf16.mxu0 %v4426
        %5059 = vmatpush2.bf16.msra.mxu0 %v4425
        %5060 = vmatprep.subr.bf16.mxu0 %v4416
        %5061 = vmatpush2.bf16.msra.mxu0 %v4415
        %5062 = vmatprep.subr.bf16.mxu0 %v4406
        %5063 = vmatpush2.bf16.msra.mxu0 %v4405
        %5064 = vmatprep.subr.bf16.mxu0 %v4396
        %5065 = vmatpush2.bf16.msra.mxu0 %v4395
        %5066 = vmatprep.subr.bf16.mxu0 %v4386
        %5067 = vmatpush2.bf16.msra.mxu0 %v4385
        %5068 = vmatprep.mubr.bf16.mxu0 %v3168
        %5069 = vmatmul.mubr.bf16.gmra.mxu0 %v3167
        %v5070 = vpop.f32.mrf.mxu0
        %v5071 = vadd.f32 %v5020, %v5070
        %v5072 = vpop.f32.mrf.mxu0
        %v5073 = vadd.f32 %v5022, %v5072
        %v5074 = vpop.f32.mrf.mxu0
        %v5075 = vadd.f32 %v5024, %v5074
        %v5076 = vpop.f32.mrf.mxu0
        %v5077 = vadd.f32 %v5026, %v5076
        %5078 = vmatprep.mubr.bf16.mxu0 %v3172
        %5079 = vmatmul.mubr.bf16.gmra.mxu0 %v3171
        %v5080 = vpop.f32.mrf.mxu0
        %v5081 = vadd.f32 %v5030, %v5080
        %v5082 = vpop.f32.mrf.mxu0
        %v5083 = vadd.f32 %v5032, %v5082
        %v5084 = vpop.f32.mrf.mxu0
        %v5085 = vpop.f32.mrf.mxu0
        %5086 = vdwg.mxu0
        %5087 = vmatprep.subr.bf16.mxu0 %v4218
        %5088 = vmatpush1.bf16.msra.mxu0 %v4217
        %5089 = vmatprep.subr.bf16.mxu0 %v4208
        %5090 = vmatpush1.bf16.msra.mxu0 %v4207
        %5091 = vmatprep.subr.bf16.mxu0 %v4198
        %5092 = vmatpush1.bf16.msra.mxu0 %v4197
        %5093 = vmatprep.subr.bf16.mxu0 %v4188
        %5094 = vmatpush1.bf16.msra.mxu0 %v4187
        %5095 = vmatprep.subr.bf16.mxu0 %v4178
        %5096 = vmatpush1.bf16.msra.mxu0 %v4177
        %5097 = vmatprep.subr.bf16.mxu0 %v4168
        %5098 = vmatpush1.bf16.msra.mxu0 %v4167
        %5099 = vmatprep.subr.bf16.mxu0 %v4158
        %5100 = vmatpush1.bf16.msra.mxu0 %v4157
        %5101 = vmatprep.subr.bf16.mxu0 %v4148
        %5102 = vmatpush1.bf16.msra.mxu0 %v4147
        %5103 = vmatprep.subr.bf16.mxu0 %v4298
        %5104 = vmatpush2.bf16.msra.mxu0 %v4297
        %5105 = vmatprep.subr.bf16.mxu0 %v4288
        %5106 = vmatpush2.bf16.msra.mxu0 %v4287
        %5107 = vmatprep.subr.bf16.mxu0 %v4278
        %5108 = vmatpush2.bf16.msra.mxu0 %v4277
        %5109 = vmatprep.subr.bf16.mxu0 %v4268
        %5110 = vmatpush2.bf16.msra.mxu0 %v4267
        %5111 = vmatprep.subr.bf16.mxu0 %v4258
        %5112 = vmatpush2.bf16.msra.mxu0 %v4257
        %5113 = vmatprep.subr.bf16.mxu0 %v4248
        %5114 = vmatpush2.bf16.msra.mxu0 %v4247
        %5115 = vmatprep.subr.bf16.mxu0 %v4238
        %5116 = vmatpush2.bf16.msra.mxu0 %v4237
        %5117 = vmatprep.subr.bf16.mxu0 %v4228
        %5118 = vmatpush2.bf16.msra.mxu0 %v4227
        %5119 = vmatprep.mubr.bf16.mxu0 %v3166
        %5120 = vmatmul.mubr.bf16.gmra.mxu0 %v3165
        %v5121 = vpop.f32.mrf.mxu0
        %v5122 = vadd.f32 %v3029, %v5121
        %v5123 = vpop.f32.mrf.mxu0
        %v5124 = vadd.f32 %v3031, %v5123
        %v5125 = vpop.f32.mrf.mxu0
        %v5126 = vadd.f32 %v3033, %v5125
        %v5127 = vpop.f32.mrf.mxu0
        %v5128 = vadd.f32 %v3035, %v5127
        %5129 = vmatprep.mubr.bf16.mxu0 %v3170
        %5130 = vmatmul.mubr.bf16.gmra.mxu0 %v3169
        %v5131 = vpop.f32.mrf.mxu0
        %v5132 = vadd.f32 %v3039, %v5131
        %v5133 = vpop.f32.mrf.mxu0
        %v5134 = vadd.f32 %v3041, %v5133
        %v5135 = vpop.f32.mrf.mxu0
        %v5136 = vpop.f32.mrf.mxu0
        %5137 = vdwg.mxu0
        %5138 = vmatprep.subr.bf16.mxu0 %v4378
        %5139 = vmatpush1.bf16.msra.mxu0 %v4377
        %5140 = vmatprep.subr.bf16.mxu0 %v4368
        %5141 = vmatpush1.bf16.msra.mxu0 %v4367
        %5142 = vmatprep.subr.bf16.mxu0 %v4358
        %5143 = vmatpush1.bf16.msra.mxu0 %v4357
        %5144 = vmatprep.subr.bf16.mxu0 %v4348
        %5145 = vmatpush1.bf16.msra.mxu0 %v4347
        %5146 = vmatprep.subr.bf16.mxu0 %v4338
        %5147 = vmatpush1.bf16.msra.mxu0 %v4337
        %5148 = vmatprep.subr.bf16.mxu0 %v4328
        %5149 = vmatpush1.bf16.msra.mxu0 %v4327
        %5150 = vmatprep.subr.bf16.mxu0 %v4318
        %5151 = vmatpush1.bf16.msra.mxu0 %v4317
        %5152 = vmatprep.subr.bf16.mxu0 %v4308
        %5153 = vmatpush1.bf16.msra.mxu0 %v4307
        %5154 = vmatprep.subr.bf16.mxu0 %v4458
        %5155 = vmatpush2.bf16.msra.mxu0 %v4457
        %5156 = vmatprep.subr.bf16.mxu0 %v4448
        %5157 = vmatpush2.bf16.msra.mxu0 %v4447
        %5158 = vmatprep.subr.bf16.mxu0 %v4438
        %5159 = vmatpush2.bf16.msra.mxu0 %v4437
        %5160 = vmatprep.subr.bf16.mxu0 %v4428
        %5161 = vmatpush2.bf16.msra.mxu0 %v4427
        %5162 = vmatprep.subr.bf16.mxu0 %v4418
        %5163 = vmatpush2.bf16.msra.mxu0 %v4417
        %5164 = vmatprep.subr.bf16.mxu0 %v4408
        %5165 = vmatpush2.bf16.msra.mxu0 %v4407
        %5166 = vmatprep.subr.bf16.mxu0 %v4398
        %5167 = vmatpush2.bf16.msra.mxu0 %v4397
        %5168 = vmatprep.subr.bf16.mxu0 %v4388
        %5169 = vmatpush2.bf16.msra.mxu0 %v4387
        %5170 = vmatprep.mubr.bf16.mxu0 %v3168
        %5171 = vmatmul.mubr.bf16.gmra.mxu0 %v3167
        %v5172 = vpop.f32.mrf.mxu0
        %v5173 = vadd.f32 %v5122, %v5172
        %v5174 = vpop.f32.mrf.mxu0
        %v5175 = vadd.f32 %v5124, %v5174
        %v5176 = vpop.f32.mrf.mxu0
        %v5177 = vadd.f32 %v5126, %v5176
        %v5178 = vpop.f32.mrf.mxu0
        %v5179 = vadd.f32 %v5128, %v5178
        %5180 = vmatprep.mubr.bf16.mxu0 %v3172
        %5181 = vmatmul.mubr.bf16.gmra.mxu0 %v3171
        %v5182 = vpop.f32.mrf.mxu0
        %v5183 = vadd.f32 %v5132, %v5182
        %v5184 = vpop.f32.mrf.mxu0
        %v5185 = vadd.f32 %v5134, %v5184
        %v5186 = vpop.f32.mrf.mxu0
        %v5187 = vpop.f32.mrf.mxu0
        %5188 = vdwg.mxu0
        %5189 = vmatprep.subr.bf16.mxu0 %v4220
        %5190 = vmatpush1.bf16.msra.mxu0 %v4219
        %5191 = vmatprep.subr.bf16.mxu0 %v4210
        %5192 = vmatpush1.bf16.msra.mxu0 %v4209
        %5193 = vmatprep.subr.bf16.mxu0 %v4200
        %5194 = vmatpush1.bf16.msra.mxu0 %v4199
        %5195 = vmatprep.subr.bf16.mxu0 %v4190
        %5196 = vmatpush1.bf16.msra.mxu0 %v4189
        %5197 = vmatprep.subr.bf16.mxu0 %v4180
        %5198 = vmatpush1.bf16.msra.mxu0 %v4179
        %5199 = vmatprep.subr.bf16.mxu0 %v4170
        %5200 = vmatpush1.bf16.msra.mxu0 %v4169
        %5201 = vmatprep.subr.bf16.mxu0 %v4160
        %5202 = vmatpush1.bf16.msra.mxu0 %v4159
        %5203 = vmatprep.subr.bf16.mxu0 %v4150
        %5204 = vmatpush1.bf16.msra.mxu0 %v4149
        %5205 = vmatprep.subr.bf16.mxu0 %v4300
        %5206 = vmatpush2.bf16.msra.mxu0 %v4299
        %5207 = vmatprep.subr.bf16.mxu0 %v4290
        %5208 = vmatpush2.bf16.msra.mxu0 %v4289
        %5209 = vmatprep.subr.bf16.mxu0 %v4280
        %5210 = vmatpush2.bf16.msra.mxu0 %v4279
        %5211 = vmatprep.subr.bf16.mxu0 %v4270
        %5212 = vmatpush2.bf16.msra.mxu0 %v4269
        %5213 = vmatprep.subr.bf16.mxu0 %v4260
        %5214 = vmatpush2.bf16.msra.mxu0 %v4259
        %5215 = vmatprep.subr.bf16.mxu0 %v4250
        %5216 = vmatpush2.bf16.msra.mxu0 %v4249
        %5217 = vmatprep.subr.bf16.mxu0 %v4240
        %5218 = vmatpush2.bf16.msra.mxu0 %v4239
        %5219 = vmatprep.subr.bf16.mxu0 %v4230
        %5220 = vmatpush2.bf16.msra.mxu0 %v4229
        %5221 = vmatprep.mubr.bf16.mxu0 %v3166
        %5222 = vmatmul.mubr.bf16.gmra.mxu0 %v3165
        %v5223 = vpop.f32.mrf.mxu0
        %v5224 = vadd.f32 %v3131, %v5223
        %v5225 = vpop.f32.mrf.mxu0
        %v5226 = vadd.f32 %v3133, %v5225
        %v5227 = vpop.f32.mrf.mxu0
        %v5228 = vadd.f32 %v3135, %v5227
        %v5229 = vpop.f32.mrf.mxu0
        %v5230 = vadd.f32 %v3137, %v5229
        %5231 = vmatprep.mubr.bf16.mxu0 %v3170
        %5232 = vmatmul.mubr.bf16.gmra.mxu0 %v3169
        %v5233 = vpop.f32.mrf.mxu0
        %v5234 = vadd.f32 %v3141, %v5233
        %v5235 = vpop.f32.mrf.mxu0
        %v5236 = vadd.f32 %v3143, %v5235
        %v5237 = vpop.f32.mrf.mxu0
        %v5238 = vpop.f32.mrf.mxu0
        %5239 = vdwg.mxu0
        %5240 = vmatprep.subr.bf16.mxu0 %v4380
        %5241 = vmatpush1.bf16.msra.mxu0 %v4379
        %5242 = vmatprep.subr.bf16.mxu0 %v4370
        %5243 = vmatpush1.bf16.msra.mxu0 %v4369
        %5244 = vmatprep.subr.bf16.mxu0 %v4360
        %5245 = vmatpush1.bf16.msra.mxu0 %v4359
        %5246 = vmatprep.subr.bf16.mxu0 %v4350
        %5247 = vmatpush1.bf16.msra.mxu0 %v4349
        %5248 = vmatprep.subr.bf16.mxu0 %v4340
        %5249 = vmatpush1.bf16.msra.mxu0 %v4339
        %5250 = vmatprep.subr.bf16.mxu0 %v4330
        %5251 = vmatpush1.bf16.msra.mxu0 %v4329
        %5252 = vmatprep.subr.bf16.mxu0 %v4320
        %5253 = vmatpush1.bf16.msra.mxu0 %v4319
        %5254 = vmatprep.subr.bf16.mxu0 %v4310
        %5255 = vmatpush1.bf16.msra.mxu0 %v4309
        %5256 = vmatprep.subr.bf16.mxu0 %v4460
        %5257 = vmatpush2.bf16.msra.mxu0 %v4459
        %5258 = vmatprep.subr.bf16.mxu0 %v4450
        %5259 = vmatpush2.bf16.msra.mxu0 %v4449
        %5260 = vmatprep.subr.bf16.mxu0 %v4440
        %5261 = vmatpush2.bf16.msra.mxu0 %v4439
        %5262 = vmatprep.subr.bf16.mxu0 %v4430
        %5263 = vmatpush2.bf16.msra.mxu0 %v4429
        %5264 = vmatprep.subr.bf16.mxu0 %v4420
        %5265 = vmatpush2.bf16.msra.mxu0 %v4419
        %5266 = vmatprep.subr.bf16.mxu0 %v4410
        %5267 = vmatpush2.bf16.msra.mxu0 %v4409
        %5268 = vmatprep.subr.bf16.mxu0 %v4400
        %5269 = vmatpush2.bf16.msra.mxu0 %v4399
        %5270 = vmatprep.subr.bf16.mxu0 %v4390
        %5271 = vmatpush2.bf16.msra.mxu0 %v4389
        %5272 = vmatprep.mubr.bf16.mxu0 %v3168
        %5273 = vmatmul.mubr.bf16.gmra.mxu0 %v3167
        %v5274 = vpop.f32.mrf.mxu0
        %v5275 = vadd.f32 %v5224, %v5274
        %v5276 = vpop.f32.mrf.mxu0
        %v5277 = vadd.f32 %v5226, %v5276
        %v5278 = vpop.f32.mrf.mxu0
        %v5279 = vadd.f32 %v5228, %v5278
        %v5280 = vpop.f32.mrf.mxu0
        %v5281 = vadd.f32 %v5230, %v5280
        %5282 = vmatprep.mubr.bf16.mxu0 %v3172
        %5283 = vmatmul.mubr.bf16.gmra.mxu0 %v3171
        %v5284 = vpop.f32.mrf.mxu0
        %v5285 = vadd.f32 %v5234, %v5284
        %v5286 = vpop.f32.mrf.mxu0
        %v5287 = vadd.f32 %v5236, %v5286
        %v5288 = vpop.f32.mrf.mxu0
        %v5289 = vpop.f32.mrf.mxu0
        %5290 = vdwg.mxu0
        %v5291 = vmul.f32 %v4867, %v4867
        %v5292 = vmul.f32 %v4869, %v4869
        %v5293 = vmul.f32 %v4969, %v4969
        %v5294 = vmul.f32 %v4971, %v4971
        %v5295 = vmul.f32 %v5071, %v5071
        %v5296 = vmul.f32 %v4871, %v4871
        %v5297 = vmul.f32 %v4873, %v4873
        %v5298 = vmul.f32 %v4973, %v4973
        %v5299 = vmul.f32 %v4975, %v4975
        %v5300 = vmul.f32 %v5075, %v5075
        %v5301 = vmul.f32 %v4877, %v4877
        %v5302 = vmul.f32 %v4879, %v4879
        %v5303 = vmul.f32 %v4979, %v4979
        %v5304 = vmul.f32 %v4981, %v4981
        %v5305 = vmul.f32 %v5081, %v5081
        %v5306 = vmul.f32 %v5073, %v5073
        %v5307 = vmul.f32 %v5173, %v5173
        %v5308 = vmul.f32 %v5175, %v5175
        %v5309 = vmul.f32 %v5275, %v5275
        %v5310 = vmul.f32 %v5277, %v5277
        %v5311 = vmul.f32 %v5077, %v5077
        %v5312 = vmul.f32 %v5177, %v5177
        %v5313 = vmul.f32 %v5179, %v5179
        %v5314 = vmul.f32 %v5279, %v5279
        %v5315 = vmul.f32 %v5281, %v5281
        %v5316 = vmul.f32 %v5083, %v5083
        %v5317 = vmul.f32 %v5183, %v5183
        %v5318 = vmul.f32 %v5185, %v5185
        %v5319 = vmul.f32 %v5285, %v5285
        %v5320 = vmul.f32 %v5287, %v5287
        %v5321 = vadd.f32 %v5291, %v5306
        %v5322 = vadd.f32 %v5292, %v5307
        %v5323 = vadd.f32 %v5293, %v5308
        %v5324 = vadd.f32 %v5294, %v5309
        %v5325 = vadd.f32 %v5295, %v5310
        %v5326 = vadd.f32 %v5296, %v5311
        %v5327 = vadd.f32 %v5297, %v5312
        %v5328 = vadd.f32 %v5298, %v5313
        %v5329 = vadd.f32 %v5299, %v5314
        %v5330 = vadd.f32 %v5300, %v5315
        %v5331 = vadd.f32 %v5301, %v5316
        %v5332 = vadd.f32 %v5302, %v5317
        %v5333 = vadd.f32 %v5303, %v5318
        %v5334 = vadd.f32 %v5304, %v5319
        %v5335 = vadd.f32 %v5305, %v5320
        %v5336 = vpack.c.bf16 %v5326, %v5321
        %v5337 = vpack.c.bf16 %v5327, %v5322
        %v5338 = vpack.c.bf16 %v5328, %v5323
        %v5339 = vpack.c.bf16 %v5329, %v5324
        %v5340 = vpack.c.bf16 %v5330, %v5325
        %v5341 = vpack.c.bf16 %v5331, %v5331
        %v5342 = vpack.c.bf16 %v5332, %v5332
        %v5343 = vpack.c.bf16 %v5333, %v5333
        %v5344 = vpack.c.bf16 %v5334, %v5334
        %v5345 = vpack.c.bf16 %v5335, %v5335
        %v5346 = vld [vmem:[#allocation6] sm:$0xf]
        %v5347 = vld [vmem:[#allocation6 + $0x4] sm:$0xf]
        %v5348 = vld [vmem:[#allocation6 + $0x8] sm:$0xf]
        %v5349 = vld [vmem:[#allocation6 + $0xc] sm:$0xf]
        %v5350 = vld [vmem:[#allocation6 + $0x10] sm:$0xf]
        %v5351 = vld [vmem:[#allocation6 + $0x14] sm:$0xf]
        %v5352 = vld [vmem:[#allocation6 + $0x18] sm:$0xf]
        %v5353 = vld [vmem:[#allocation6 + $0x1c] sm:$0xf]
        %v5354 = vld [vmem:[#allocation6 + $0x20] sm:$0xf]
        %v5355 = vld [vmem:[#allocation6 + $0x24] sm:$0xf]
        %v5356 = vld [vmem:[#allocation6 + $0x28] sm:$0xf]
        %v5357 = vld [vmem:[#allocation6 + $0x2c] sm:$0xf]
        %v5358 = vld [vmem:[#allocation6 + $0x30] sm:$0xf]
        %v5359 = vld [vmem:[#allocation6 + $0x34] sm:$0xf]
        %v5360 = vld [vmem:[#allocation6 + $0x38] sm:$0xf]
        %v5361 = vld [vmem:[#allocation6 + $0x3c] sm:$0xf]
        %v5362 = vld [vmem:[#allocation6 + $0x40] sm:$0xf]
        %v5363 = vld [vmem:[#allocation6 + $0x44] sm:$0xf]
        %v5364 = vld [vmem:[#allocation6 + $0x48] sm:$0xf]
        %v5365 = vld [vmem:[#allocation6 + $0x4c] sm:$0xf]
        %v5366 = vld [vmem:[#allocation6 + $0x50] sm:$0xf]
        %v5367 = vld [vmem:[#allocation6 + $0x54] sm:$0xf]
        %v5368 = vld [vmem:[#allocation6 + $0x58] sm:$0xf]
        %v5369 = vld [vmem:[#allocation6 + $0x5c] sm:$0xf]
        %v5370 = vld [vmem:[#allocation6 + $0x60] sm:$0xf]
        %v5371 = vld [vmem:[#allocation6 + $0x64] sm:$0xf]
        %v5372 = vld [vmem:[#allocation6 + $0x68] sm:$0xf]
        %v5373 = vld [vmem:[#allocation6 + $0x6c] sm:$0xf]
        %v5374 = vld [vmem:[#allocation6 + $0x70] sm:$0xf]
        %v5375 = vld [vmem:[#allocation6 + $0x74] sm:$0xf]
        %v5376 = vld [vmem:[#allocation6 + $0x78] sm:$0xf]
        %v5377 = vld [vmem:[#allocation6 + $0x7c] sm:$0xf]
        %v5378 = vld [vmem:[#allocation6 + $0x80] sm:$0xf]
        %v5379 = vld [vmem:[#allocation6 + $0x84] sm:$0xf]
        %v5380 = vld [vmem:[#allocation6 + $0x88] sm:$0xf]
        %v5381 = vld [vmem:[#allocation6 + $0x8c] sm:$0xf]
        %v5382 = vld [vmem:[#allocation6 + $0x90] sm:$0xf]
        %v5383 = vld [vmem:[#allocation6 + $0x94] sm:$0xf]
        %v5384 = vld [vmem:[#allocation6 + $0x98] sm:$0xf]
        %v5385 = vld [vmem:[#allocation6 + $0x9c] sm:$0xf]
        %v5386 = vld [vmem:[#allocation6 + $0xa0] sm:$0xf]
        %v5387 = vld [vmem:[#allocation6 + $0xa4] sm:$0xf]
        %v5388 = vld [vmem:[#allocation6 + $0xa8] sm:$0xf]
        %v5389 = vld [vmem:[#allocation6 + $0xac] sm:$0xf]
        %v5390 = vld [vmem:[#allocation6 + $0xb0] sm:$0xf]
        %v5391 = vld [vmem:[#allocation6 + $0xb4] sm:$0xf]
        %v5392 = vld [vmem:[#allocation6 + $0xb8] sm:$0xf]
        %v5393 = vld [vmem:[#allocation6 + $0xbc] sm:$0xf]
        %v5394 = vld [vmem:[#allocation6 + $0xc0] sm:$0xf]
        %v5395 = vld [vmem:[#allocation6 + $0xc4] sm:$0xf]
        %v5396 = vld [vmem:[#allocation6 + $0xc8] sm:$0xf]
        %v5397 = vld [vmem:[#allocation6 + $0xcc] sm:$0xf]
        %v5398 = vld [vmem:[#allocation6 + $0xd0] sm:$0xf]
        %v5399 = vld [vmem:[#allocation6 + $0xd4] sm:$0xf]
        %v5400 = vld [vmem:[#allocation6 + $0xd8] sm:$0xf]
        %v5401 = vld [vmem:[#allocation6 + $0xdc] sm:$0xf]
        %v5402 = vld [vmem:[#allocation6 + $0xe0] sm:$0xf]
        %v5403 = vld [vmem:[#allocation6 + $0xe4] sm:$0xf]
        %v5404 = vld [vmem:[#allocation6 + $0xe8] sm:$0xf]
        %v5405 = vld [vmem:[#allocation6 + $0xec] sm:$0xf]
        %v5406 = vld [vmem:[#allocation6 + $0xf0] sm:$0xf]
        %v5407 = vld [vmem:[#allocation6 + $0xf4] sm:$0xf]
        %v5408 = vld [vmem:[#allocation6 + $0xf8] sm:$0xf]
        %v5409 = vld [vmem:[#allocation6 + $0xfc] sm:$0xf]
        %v5410 = vld [vmem:[#allocation6 + $0x100] sm:$0xf]
        %v5411 = vld [vmem:[#allocation6 + $0x104] sm:$0xf]
        %v5412 = vld [vmem:[#allocation6 + $0x108] sm:$0xf]
        %v5413 = vld [vmem:[#allocation6 + $0x10c] sm:$0xf]
        %v5414 = vld [vmem:[#allocation6 + $0x110] sm:$0xf]
        %v5415 = vld [vmem:[#allocation6 + $0x114] sm:$0xf]
        %v5416 = vld [vmem:[#allocation6 + $0x118] sm:$0xf]
        %v5417 = vld [vmem:[#allocation6 + $0x11c] sm:$0xf]
        %v5418 = vld [vmem:[#allocation6 + $0x120] sm:$0xf]
        %v5419 = vld [vmem:[#allocation6 + $0x124] sm:$0xf]
        %v5420 = vld [vmem:[#allocation6 + $0x128] sm:$0xf]
        %v5421 = vld [vmem:[#allocation6 + $0x12c] sm:$0xf]
        %v5422 = vld [vmem:[#allocation6 + $0x130] sm:$0xf]
        %v5423 = vld [vmem:[#allocation6 + $0x134] sm:$0xf]
        %v5424 = vld [vmem:[#allocation6 + $0x138] sm:$0xf]
        %v5425 = vld [vmem:[#allocation6 + $0x13c] sm:$0xf]
        %v5506 = vunpack.c.l.b16 %v5346
        %v5507 = vunpack.c.l.b16 %v5347
        %v5508 = vunpack.c.l.b16 %v5348
        %v5509 = vunpack.c.l.b16 %v5349
        %v5510 = vunpack.c.l.b16 %v5350
        %v5511 = vunpack.c.l.b16 %v5351
        %v5512 = vunpack.c.l.b16 %v5352
        %v5513 = vunpack.c.l.b16 %v5353
        %v5514 = vunpack.c.l.b16 %v5354
        %v5515 = vunpack.c.l.b16 %v5355
        %v5516 = vunpack.c.l.b16 %v5356
        %v5517 = vunpack.c.l.b16 %v5357
        %v5518 = vunpack.c.l.b16 %v5358
        %v5519 = vunpack.c.l.b16 %v5359
        %v5520 = vunpack.c.l.b16 %v5360
        %v5521 = vunpack.c.l.b16 %v5361
        %v5522 = vunpack.c.l.b16 %v5362
        %v5523 = vunpack.c.l.b16 %v5363
        %v5524 = vunpack.c.l.b16 %v5364
        %v5525 = vunpack.c.l.b16 %v5365
        %v5526 = vunpack.c.l.b16 %v5366
        %v5527 = vunpack.c.l.b16 %v5367
        %v5528 = vunpack.c.l.b16 %v5368
        %v5529 = vunpack.c.l.b16 %v5369
        %v5530 = vunpack.c.l.b16 %v5370
        %v5531 = vunpack.c.l.b16 %v5371
        %v5532 = vunpack.c.l.b16 %v5372
        %v5533 = vunpack.c.l.b16 %v5373
        %v5534 = vunpack.c.l.b16 %v5374
        %v5535 = vunpack.c.l.b16 %v5375
        %v5536 = vunpack.c.l.b16 %v5376
        %v5537 = vunpack.c.l.b16 %v5377
        %v5538 = vunpack.c.l.b16 %v5378
        %v5539 = vunpack.c.l.b16 %v5379
        %v5540 = vunpack.c.l.b16 %v5380
        %v5541 = vunpack.c.l.b16 %v5381
        %v5542 = vunpack.c.l.b16 %v5382
        %v5543 = vunpack.c.l.b16 %v5383
        %v5544 = vunpack.c.l.b16 %v5384
        %v5545 = vunpack.c.l.b16 %v5385
        %v5546 = vunpack.c.l.b16 %v5386
        %v5547 = vunpack.c.l.b16 %v5387
        %v5548 = vunpack.c.l.b16 %v5388
        %v5549 = vunpack.c.l.b16 %v5389
        %v5550 = vunpack.c.l.b16 %v5390
        %v5551 = vunpack.c.l.b16 %v5391
        %v5552 = vunpack.c.l.b16 %v5392
        %v5553 = vunpack.c.l.b16 %v5393
        %v5554 = vunpack.c.l.b16 %v5394
        %v5555 = vunpack.c.l.b16 %v5395
        %v5556 = vunpack.c.l.b16 %v5396
        %v5557 = vunpack.c.l.b16 %v5397
        %v5558 = vunpack.c.l.b16 %v5398
        %v5559 = vunpack.c.l.b16 %v5399
        %v5560 = vunpack.c.l.b16 %v5400
        %v5561 = vunpack.c.l.b16 %v5401
        %v5562 = vunpack.c.l.b16 %v5402
        %v5563 = vunpack.c.l.b16 %v5403
        %v5564 = vunpack.c.l.b16 %v5404
        %v5565 = vunpack.c.l.b16 %v5405
        %v5566 = vunpack.c.l.b16 %v5406
        %v5567 = vunpack.c.l.b16 %v5407
        %v5568 = vunpack.c.l.b16 %v5408
        %v5569 = vunpack.c.l.b16 %v5409
        %v5570 = vunpack.c.l.b16 %v5410
        %v5571 = vunpack.c.l.b16 %v5411
        %v5572 = vunpack.c.l.b16 %v5412
        %v5573 = vunpack.c.l.b16 %v5413
        %v5574 = vunpack.c.l.b16 %v5414
        %v5575 = vunpack.c.l.b16 %v5415
        %v5576 = vunpack.c.l.b16 %v5416
        %v5577 = vunpack.c.l.b16 %v5417
        %v5578 = vunpack.c.l.b16 %v5418
        %v5579 = vunpack.c.l.b16 %v5419
        %v5580 = vunpack.c.l.b16 %v5420
        %v5581 = vunpack.c.l.b16 %v5421
        %v5582 = vunpack.c.l.b16 %v5422
        %v5583 = vunpack.c.l.b16 %v5423
        %v5584 = vunpack.c.l.b16 %v5424
        %v5585 = vunpack.c.l.b16 %v5425
        %v5586 = vpack.c.b16 %v5507, %v5506
        %v5587 = vpack.c.b16 %v5509, %v5508
        %v5588 = vpack.c.b16 %v5511, %v5510
        %v5589 = vpack.c.b16 %v5513, %v5512
        %v5590 = vpack.c.b16 %v5515, %v5514
        %v5591 = vpack.c.b16 %v5517, %v5516
        %v5592 = vpack.c.b16 %v5519, %v5518
        %v5593 = vpack.c.b16 %v5521, %v5520
        %v5594 = vpack.c.b16 %v5523, %v5522
        %v5595 = vpack.c.b16 %v5525, %v5524
        %v5596 = vpack.c.b16 %v5527, %v5526
        %v5597 = vpack.c.b16 %v5529, %v5528
        %v5598 = vpack.c.b16 %v5531, %v5530
        %v5599 = vpack.c.b16 %v5533, %v5532
        %v5600 = vpack.c.b16 %v5535, %v5534
        %v5601 = vpack.c.b16 %v5537, %v5536
        %v5602 = vpack.c.b16 %v5539, %v5538
        %v5603 = vpack.c.b16 %v5541, %v5540
        %v5604 = vpack.c.b16 %v5543, %v5542
        %v5605 = vpack.c.b16 %v5545, %v5544
        %v5606 = vpack.c.b16 %v5547, %v5546
        %v5607 = vpack.c.b16 %v5549, %v5548
        %v5608 = vpack.c.b16 %v5551, %v5550
        %v5609 = vpack.c.b16 %v5553, %v5552
        %v5610 = vpack.c.b16 %v5555, %v5554
        %v5611 = vpack.c.b16 %v5557, %v5556
        %v5612 = vpack.c.b16 %v5559, %v5558
        %v5613 = vpack.c.b16 %v5561, %v5560
        %v5614 = vpack.c.b16 %v5563, %v5562
        %v5615 = vpack.c.b16 %v5565, %v5564
        %v5616 = vpack.c.b16 %v5567, %v5566
        %v5617 = vpack.c.b16 %v5569, %v5568
        %v5618 = vpack.c.b16 %v5571, %v5570
        %v5619 = vpack.c.b16 %v5573, %v5572
        %v5620 = vpack.c.b16 %v5575, %v5574
        %v5621 = vpack.c.b16 %v5577, %v5576
        %v5622 = vpack.c.b16 %v5579, %v5578
        %v5623 = vpack.c.b16 %v5581, %v5580
        %v5624 = vpack.c.b16 %v5583, %v5582
        %v5625 = vpack.c.b16 %v5585, %v5584
        %5666 = vmatprep.subr.bf16.mxu0 0
        %5667 = vmatpush1.bf16.msra.mxu0 %v5593
        %5668 = vmatprep.subr.bf16.mxu0 0
        %5669 = vmatpush1.bf16.msra.mxu0 %v5592
        %5670 = vmatprep.subr.bf16.mxu0 0
        %5671 = vmatpush1.bf16.msra.mxu0 %v5591
        %5672 = vmatprep.subr.bf16.mxu0 0
        %5673 = vmatpush1.bf16.msra.mxu0 %v5590
        %5674 = vmatprep.subr.bf16.mxu0 0
        %5675 = vmatpush1.bf16.msra.mxu0 %v5589
        %5676 = vmatprep.subr.bf16.mxu0 0
        %5677 = vmatpush1.bf16.msra.mxu0 %v5588
        %5678 = vmatprep.subr.bf16.mxu0 0
        %5679 = vmatpush1.bf16.msra.mxu0 %v5587
        %5680 = vmatprep.subr.bf16.mxu0 0
        %5681 = vmatpush1.bf16.msra.mxu0 %v5586
        %5682 = vmatprep.subr.bf16.mxu0 0
        %5683 = vmatpush2.bf16.msra.mxu0 %v5601
        %5684 = vmatprep.subr.bf16.mxu0 0
        %5685 = vmatpush2.bf16.msra.mxu0 %v5600
        %5686 = vmatprep.subr.bf16.mxu0 0
        %5687 = vmatpush2.bf16.msra.mxu0 %v5599
        %5688 = vmatprep.subr.bf16.mxu0 0
        %5689 = vmatpush2.bf16.msra.mxu0 %v5598
        %5690 = vmatprep.subr.bf16.mxu0 0
        %5691 = vmatpush2.bf16.msra.mxu0 %v5597
        %5692 = vmatprep.subr.bf16.mxu0 0
        %5693 = vmatpush2.bf16.msra.mxu0 %v5596
        %5694 = vmatprep.subr.bf16.mxu0 0
        %5695 = vmatpush2.bf16.msra.mxu0 %v5595
        %5696 = vmatprep.subr.bf16.mxu0 0
        %5697 = vmatpush2.bf16.msra.mxu0 %v5594
        %5698 = vmatprep.mubr.bf16.mxu0 %v5337
        %5699 = vmatmul.mubr.bf16.gmra.mxu0 %v5336
        %v5700 = vpop.f32.mrf.mxu0
        %v5701 = vadd.f32 0.0, %v5700
        %v5702 = vpop.f32.mrf.mxu0
        %v5703 = vpop.f32.mrf.mxu0
        %v5704 = vadd.f32 0.0, %v5703
        %v5705 = vpop.f32.mrf.mxu0
        %5706 = vmatprep.mubr.bf16.mxu0 %v5342
        %5707 = vmatmul.mubr.bf16.gmra.mxu0 %v5341
        %v5708 = vpop.f32.mrf.mxu0
        %v5709 = vadd.f32 0.0, %v5708
        %v5710 = vpop.f32.mrf.mxu0
        %v5711 = vpop.f32.mrf.mxu0
        %v5712 = vpop.f32.mrf.mxu0
        %5713 = vdwg.mxu0
        %5714 = vmatprep.subr.bf16.mxu0 0
        %5715 = vmatpush1.bf16.msra.mxu0 %v5609
        %5716 = vmatprep.subr.bf16.mxu0 0
        %5717 = vmatpush1.bf16.msra.mxu0 %v5608
        %5718 = vmatprep.subr.bf16.mxu0 0
        %5719 = vmatpush1.bf16.msra.mxu0 %v5607
        %5720 = vmatprep.subr.bf16.mxu0 0
        %5721 = vmatpush1.bf16.msra.mxu0 %v5606
        %5722 = vmatprep.subr.bf16.mxu0 0
        %5723 = vmatpush1.bf16.msra.mxu0 %v5605
        %5724 = vmatprep.subr.bf16.mxu0 0
        %5725 = vmatpush1.bf16.msra.mxu0 %v5604
        %5726 = vmatprep.subr.bf16.mxu0 0
        %5727 = vmatpush1.bf16.msra.mxu0 %v5603
        %5728 = vmatprep.subr.bf16.mxu0 0
        %5729 = vmatpush1.bf16.msra.mxu0 %v5602
        %5730 = vmatprep.subr.bf16.mxu0 0
        %5731 = vmatpush2.bf16.msra.mxu0 %v5617
        %5732 = vmatprep.subr.bf16.mxu0 0
        %5733 = vmatpush2.bf16.msra.mxu0 %v5616
        %5734 = vmatprep.subr.bf16.mxu0 0
        %5735 = vmatpush2.bf16.msra.mxu0 %v5615
        %5736 = vmatprep.subr.bf16.mxu0 0
        %5737 = vmatpush2.bf16.msra.mxu0 %v5614
        %5738 = vmatprep.subr.bf16.mxu0 0
        %5739 = vmatpush2.bf16.msra.mxu0 %v5613
        %5740 = vmatprep.subr.bf16.mxu0 0
        %5741 = vmatpush2.bf16.msra.mxu0 %v5612
        %5742 = vmatprep.subr.bf16.mxu0 0
        %5743 = vmatpush2.bf16.msra.mxu0 %v5611
        %5744 = vmatprep.subr.bf16.mxu0 0
        %5745 = vmatpush2.bf16.msra.mxu0 %v5610
        %5746 = vmatprep.mubr.bf16.mxu0 %v5339
        %5747 = vmatmul.mubr.bf16.gmra.mxu0 %v5338
        %v5748 = vpop.f32.mrf.mxu0
        %v5749 = vadd.f32 %v5701, %v5748
        %v5750 = vpop.f32.mrf.mxu0
        %v5751 = vpop.f32.mrf.mxu0
        %v5752 = vadd.f32 %v5704, %v5751
        %v5753 = vpop.f32.mrf.mxu0
        %5754 = vmatprep.mubr.bf16.mxu0 %v5344
        %5755 = vmatmul.mubr.bf16.gmra.mxu0 %v5343
        %v5756 = vpop.f32.mrf.mxu0
        %v5757 = vadd.f32 %v5709, %v5756
        %v5758 = vpop.f32.mrf.mxu0
        %v5759 = vpop.f32.mrf.mxu0
        %v5760 = vpop.f32.mrf.mxu0
        %5761 = vdwg.mxu0
        %5762 = vmatprep.subr.bf16.mxu0 0
        %5763 = vmatpush1.bf16.msra.mxu0 %v5625
        %5764 = vmatprep.subr.bf16.mxu0 0
        %5765 = vmatpush1.bf16.msra.mxu0 %v5624
        %5766 = vmatprep.subr.bf16.mxu0 0
        %5767 = vmatpush1.bf16.msra.mxu0 %v5623
        %5768 = vmatprep.subr.bf16.mxu0 0
        %5769 = vmatpush1.bf16.msra.mxu0 %v5622
        %5770 = vmatprep.subr.bf16.mxu0 0
        %5771 = vmatpush1.bf16.msra.mxu0 %v5621
        %5772 = vmatprep.subr.bf16.mxu0 0
        %5773 = vmatpush1.bf16.msra.mxu0 %v5620
        %5774 = vmatprep.subr.bf16.mxu0 0
        %5775 = vmatpush1.bf16.msra.mxu0 %v5619
        %5776 = vmatprep.subr.bf16.mxu0 0
        %5777 = vmatpush1.bf16.msra.mxu0 %v5618
        %5778 = vmatprep.subr.bf16.mxu0 0
        %5779 = vmatpush2.bf16.msra.mxu0 0
        %5780 = vmatprep.subr.bf16.mxu0 0
        %5781 = vmatpush2.bf16.msra.mxu0 0
        %5782 = vmatprep.subr.bf16.mxu0 0
        %5783 = vmatpush2.bf16.msra.mxu0 0
        %5784 = vmatprep.subr.bf16.mxu0 0
        %5785 = vmatpush2.bf16.msra.mxu0 0
        %5786 = vmatprep.subr.bf16.mxu0 0
        %5787 = vmatpush2.bf16.msra.mxu0 0
        %5788 = vmatprep.subr.bf16.mxu0 0
        %5789 = vmatpush2.bf16.msra.mxu0 0
        %5790 = vmatprep.subr.bf16.mxu0 0
        %5791 = vmatpush2.bf16.msra.mxu0 0
        %5792 = vmatprep.subr.bf16.mxu0 0
        %5793 = vmatpush2.bf16.msra.mxu0 0
        %5794 = vmatprep.mubr.bf16.mxu0 0
        %5795 = vmatmul.mubr.bf16.gmra.mxu0 %v5340
        %v5796 = vpop.f32.mrf.mxu0
        %v5797 = vadd.f32 %v5749, %v5796
        %v5798 = vpop.f32.mrf.mxu0
        %v5799 = vpop.f32.mrf.mxu0
        %v5800 = vadd.f32 %v5752, %v5799
        %v5801 = vpop.f32.mrf.mxu0
        %5802 = vmatprep.mubr.bf16.mxu0 0
        %5803 = vmatmul.mubr.bf16.gmra.mxu0 %v5345
        %v5804 = vpop.f32.mrf.mxu0
        %v5805 = vadd.f32 %v5757, %v5804
        %v5806 = vpop.f32.mrf.mxu0
        %v5807 = vpop.f32.mrf.mxu0
        %v5808 = vpop.f32.mrf.mxu0
        %5809 = vdwg.mxu0
        %5810 = vst [vmem:[%s348] sm:$0xff] %v5797
        %5811 = vst [vmem:[%s348 + $0x8] sm:$0xff] %v5800
        %5812 = vst [vmem:[%s348 + $0x10] sm:$0xff] %v5805
        %s5813 = smul.u32 3, %s23
        %p5814 = scmp.lt.s32.totalorder %s22, 1
        %s5815 = scalar_select %p5814, %s22, 1
        %p5816 = scmp.lt.s32.totalorder %s5813, 2
        %s5817 = scalar_select %p5816, %s5813, 2
        %s5818 = smul.addr %s5815, 3
        %s5819 = sadd.s32 %s5817, %s5818
        %s5820 = smul.addr %s5819, 8
        %s5821 = scalar_lea.vmem %s5, %s5820
        // Predicated region
        $region53: #{my_pipeline_forward.1} parent=39 // pred_check
          %p5822 = pneg %p169
        $region54: #{my_pipeline_forward.1} parent=39 // pred_check_branch
          %5824 = sbr.rel (%p5822) target = $region56
        $region55: #{my_pipeline_forward.1} parent=39 // pred_region
          %s5825 = smul.u32 3, %s23
        $region56: #{my_pipeline_forward.1} parent=39 // pred_fallthru
          _
      $region40: #{my_pipeline_forward.1} parent=5 // pred_fallthru
        _
      %p5826 = scmp.le.s32.totalorder 2, %s13
      // Predicated region
      $region57: #{my_pipeline_forward.1} parent=5 // pred_check
        %p5827 = pneg %p5826
      $region58: #{my_pipeline_forward.1} parent=5 // pred_check_branch
        %5829 = sbr.rel (%p5827) target = $region60
      $region59: #{my_pipeline_forward.1} parent=5 // pred_region
        %s5830 = ssub.s32 %s13, 2
        // Predicated region
        $region61: #{my_pipeline_forward.1} parent=59 // pred_check
          %p5831 = pneg %p175
        $region62: #{my_pipeline_forward.1} parent=59 // pred_check_branch
          %5833 = sbr.rel (%p5831) target = $region64
        $region63: #{my_pipeline_forward.1} parent=59 // pred_region
          %s5834 = smul.u32 3, %s25
          %p5835 = scmp.lt.s32.totalorder %s24, 1
          %s5836 = scalar_select %p5835, %s24, 1
          %p5837 = scmp.lt.s32.totalorder %s5834, 2
          %s5838 = scalar_select %p5837, %s5834, 2
          %s5839 = smul.addr %s5836, 3
          %s5840 = sadd.s32 %s5838, %s5839
          %s5841 = smul.addr %s5840, 8
          %s5842 = scalar_lea.vmem %s5, %s5841
        $region64: #{my_pipeline_forward.1} parent=59 // pred_fallthru
          _
      $region60: #{my_pipeline_forward.1} parent=5 // pred_fallthru
        _
    $region6: #{my_pipeline_forward.1} parent=1 // loop_footer
      %s17 = sadd.s32 1, %s13
    $region7: #{my_pipeline_forward.1} parent=1 // loop_footer_branch
      %12 = sbr.rel target = $region3
    $region8: #{my_pipeline_forward.1} parent=1 // loop_exit
      _
    %5843 = vsyncpa [#allocation3], 1
    %s5844 = scalar_lea.sflag [#allocation3], 1
    %5845 = vsyncpa %s5844, 1
    %5846 = vsyncpa [#allocation5], 1

</llo_original>
